<compile_context>
chip_gen: v7x
topology: tpu7x:2x2x1
jax: 0.10.0
libtpu: 0.0.40
codegen_flags: <defaults>
</compile_context>

<pallas_src>
import numpy as np
import jax
import jax.numpy as jnp
from jax.experimental import pallas as pl
from jax.experimental.pallas import tpu as pltpu

_LN_EPS = 1e-5                      # torch nn.LayerNorm default
_F32_MAX = np.float32(3.4028235e38)


# ----------------------------- in-kernel helpers -----------------------------

def _layernorm(x, gamma, beta):
    mean = jnp.mean(x, axis=-1, keepdims=True)
    var = jnp.mean((x - mean) ** 2, axis=-1, keepdims=True)
    return (x - mean) * jax.lax.rsqrt(var + _LN_EPS) * gamma + beta


def _seg_layernorm(x, B, Bb, gamma, beta):
    """LayerNorm over channel-blocked segments of the last dim.
    B  : (W, C)  with 1/seg_width at [c*sw + j, c]
    Bb : (C, W)  with 1         at [c, c*sw + j]"""
    f32 = jnp.float32
    mu = jnp.dot(jnp.dot(x, B, preferred_element_type=f32), Bb,
                 preferred_element_type=f32)
    xc = x - mu
    var = jnp.dot(jnp.dot(xc * xc, B, preferred_element_type=f32), Bb,
                  preferred_element_type=f32)
    return xc * jax.lax.rsqrt(var + _LN_EPS) * gamma + beta


def _sigmoid(x, approx=False):
    d = 1.0 + jnp.exp(-x)
    if approx:
        return pl.reciprocal(d, approx=True)
    return 1.0 / d


def _erf(x):
    # Abramowitz & Stegun 7.1.26 (|err| ~ 1.5e-7); avoids relying on lax.erf lowering.
    p = 0.3275911
    a1, a2, a3, a4, a5 = (0.254829592, -0.284496736, 1.421413741,
                          -1.453152027, 1.061405429)
    s = jnp.where(x >= 0.0, 1.0, -1.0)
    ax = jnp.abs(x)
    t = 1.0 / (1.0 + p * ax)
    poly = t * (a1 + t * (a2 + t * (a3 + t * (a4 + t * a5))))
    return s * (1.0 - poly * jnp.exp(-ax * ax))


def _gelu(x):
    return 0.5 * x * (1.0 + _erf(x * np.float32(0.7071067811865476)))


def _nan_to_num(x):
    x = jnp.where(jnp.isnan(x), jnp.float32(0.0), x)
    x = jnp.where(x == jnp.inf, _F32_MAX, x)
    x = jnp.where(x == -jnp.inf, -_F32_MAX, x)
    return x


# --------------------- fused graph kernel (embed + E_GCL x L) ----------------

def make_graph_kernel(H, Fe, offs):
    (o_s, o_t, o_e, o_r, o_w2, o_c1, o_nh, o_na, o_n2) = offs

    def kernel(we_ref, h_in_ref, lng_ref, lnb_ref, embw_ref, embb_ref, x_in_ref,
               ohr_ref, ohc_ref, ohT_ref, cnt_ref, ea_ref, wA_ref, wB_ref,
               hres_ref, h_sc, h0_sc, x_sc):
        f32 = jnp.float32
        l = pl.program_id(0)

        @pl.when(l == 0)
        def _():
            hn = _layernorm(h_in_ref[...], lng_ref[...], lnb_ref[...])
            h0 = jnp.dot(hn, embw_ref[...], preferred_element_type=f32) + embb_ref[...]
            h0_sc[...] = h0
            h_sc[...] = h0
            x_sc[...] = x_in_ref[...]

        h = h_sc[...]
        x = x_sc[...]
        oh_row = ohr_ref[...]
        oh_col = ohc_ref[...]
        ohT = ohT_ref[...]
        cnt = cnt_ref[...]
        ea = ea_ref[...]

        B = wB_ref[...]
        be1, be2, bc1 = B[0:1], B[1:2], B[2:3]
        bn1, bn2 = B[3:4], B[4:5]
        gn_g, gn_b = B[5:6], B[6:7]
        wa_row, wc2_row = B[7:8], B[8:9]
        ba = B[9:10, 0:1]

        we1_s = wA_ref[o_s:o_s + H, :]
        we1_t = wA_ref[o_t:o_t + H, :]
        we1_e = wA_ref[o_e:o_e + Fe, :]
        we1_r = wA_ref[o_r:o_r + 1, :]
        we2 = wA_ref[o_w2:o_w2 + H, :]
        wc1 = wA_ref[o_c1:o_c1 + H, :]
        wn1_h = wA_ref[o_nh:o_nh + H, :]
        wn1_a = wA_ref[o_na:o_na + H, :]
        wn2 = wA_ref[o_n2:o_n2 + H, :]

        # coord2radial (normalize=True): single gather matmul for the difference
        coord_diff = jnp.dot(oh_row - oh_col, x, preferred_element_type=f32)   # (E,3)
        radial = jnp.sum(coord_diff * coord_diff, axis=1, keepdims=True)       # (E,1)
        coord_diff = coord_diff / (jnp.sqrt(radial) + 1e-8)

        # edge_model (gathers reassociated as (E,N) @ [(N,H) @ (H,H)])
        hs = jnp.dot(h, we1_s, preferred_element_type=f32)
        ht = jnp.dot(h, we1_t, preferred_element_type=f32)
        z = (jnp.dot(oh_row, hs, preferred_element_type=f32)
             + jnp.dot(oh_col, ht, preferred_element_type=f32)
             + radial * we1_r
             + jnp.dot(ea, we1_e, preferred_element_type=f32)
             + be1)
        z = jnp.maximum(z, 0.0)
        m = jnp.maximum(jnp.dot(z, we2, preferred_element_type=f32) + be2, 0.0)
        att = _sigmoid(jnp.sum(m * wa_row, axis=1, keepdims=True) + ba, approx=True)
        edge_feat = m * att

        # coord_model (coords_agg='mean', clamped counts precomputed in wrapper)
        t = jnp.maximum(jnp.dot(edge_feat, wc1, preferred_element_type=f32) + bc1, 0.0)
        phi = jnp.sum(t * wc2_row, axis=1, keepdims=True)
        agg_x = jnp.dot(ohT, coord_diff * phi, preferred_element_type=f32)
        x_new = x + agg_x / cnt

        # node_model (segment sum) + residual
        agg_h = jnp.dot(ohT, edge_feat, preferred_element_type=f32)
        n = jnp.maximum(jnp.dot(h, wn1_h, preferred_element_type=f32)
                        + jnp.dot(agg_h, wn1_a, preferred_element_type=f32)
                        + bn1, 0.0)
        n = jnp.dot(n, wn2, preferred_element_type=f32) + bn2
        h_new = h + n

        # graph_norm LayerNorm + Dropout(identity) + nan_to_num
        h_new = _nan_to_num(_layernorm(h_new, gn_g, gn_b))
        h_sc[...] = h_new
        x_sc[...] = x_new

        @pl.when(l == pl.num_programs(0) - 1)
        def _():
            hres_ref[...] = h0_sc[...] + h_new           # h_prot = h_0 + h_prime

    return kernel


# ------------------------- protein head kernel -------------------------------

def make_head_kernel(H, out_nf, out_dim, Kr, Kc, voff):
    ONF2 = out_nf // 2

    def kernel(hres_ref, weo_ref, vs_ref, Roh_ref, Coh_ref,
               Tc1_ref, S1a_ref, T1b_ref, B1_ref, Bb1_ref,
               Tc2_ref, S2a_ref, T2b_ref, B2_ref, Bb2_ref,
               Wm1_ref, Wm2_ref, Wm3_ref, out_ref, p1_sc, p2_sc):
        f32 = jnp.float32

        def vrow(name, w):
            r = voff[name]
            return vs_ref[r:r + 1, 0:w]

        # embedding_out: Linear -> LayerNorm -> GELU (-> Dropout identity)
        z = (jnp.dot(hres_ref[...], weo_ref[...], preferred_element_type=f32)
             + vrow("b_eo", H))
        z = _gelu(_layernorm(z, vrow("g_eo", H), vrow("be_eo", H)))

        # AdaptiveMaxPool2d((150, 128)): exact one-hot gathers + elementwise max
        rp = jnp.dot(Roh_ref[0], z, preferred_element_type=f32)
        for k in range(1, Kr):
            rp = jnp.maximum(rp, jnp.dot(Roh_ref[k], z, preferred_element_type=f32))
        pooled = jnp.dot(rp, Coh_ref[0], preferred_element_type=f32)
        for k in range(1, Kc):
            pooled = jnp.maximum(
                pooled, jnp.dot(rp, Coh_ref[k], preferred_element_type=f32))
        pooled = _nan_to_num(pooled)                                 # (150, 128)

        # conv_prot1: Conv2d(1,4,40,padding=2) == 40 shifted-row matmuls against a
        # host-precomputed column-Toeplitz weight (width zero-padding folded in)
        p1_sc[...] = jnp.zeros_like(p1_sc)
        p1_sc[2:152, :] = pooled                                     # row padding
        c1 = jnp.dot(p1_sc[0:115, :], Tc1_ref[0], preferred_element_type=f32)
        for di in range(1, 40):
            c1 = c1 + jnp.dot(p1_sc[di:di + 115, :], Tc1_ref[di],
                              preferred_element_type=f32)
        c1 = c1 + vrow("b1", 372)                                    # (115, 372)

        # MaxPool2d(3) via one-hot gathers, then LayerNorm(31) + GELU
        r1 = jnp.dot(S1a_ref[0], c1, preferred_element_type=f32)
        for a in range(1, 3):
            r1 = jnp.maximum(r1, jnp.dot(S1a_ref[a], c1, preferred_element_type=f32))
        m1 = jnp.dot(r1, T1b_ref[0], preferred_element_type=f32)
        for b in range(1, 3):
            m1 = jnp.maximum(m1, jnp.dot(r1, T1b_ref[b], preferred_element_type=f32))
        a1 = _gelu(_seg_layernorm(m1, B1_ref[...], Bb1_ref[...],
                                  vrow("g1", 124), vrow("bb1", 124)))  # (38, 124)

        # conv_prot2: Conv2d(4,16,12,padding=2), same Toeplitz trick per (ci, di)
        p2_sc[...] = jnp.zeros_like(p2_sc)
        for c in range(4):
            p2_sc[c, 2:40, :] = a1[:, c * 31:(c + 1) * 31]
        c2 = jnp.dot(p2_sc[0, 0:31, :], Tc2_ref[0], preferred_element_type=f32)
        for idx in range(1, 48):
            ci, di = idx // 12, idx % 12
            c2 = c2 + jnp.dot(p2_sc[ci, di:di + 31, :], Tc2_ref[idx],
                              preferred_element_type=f32)
        c2 = c2 + vrow("b2", 384)                                    # (31, 384)

        r2 = jnp.dot(S2a_ref[0], c2, preferred_element_type=f32)
        for a in range(1, 3):
            r2 = jnp.maximum(r2, jnp.dot(S2a_ref[a], c2, preferred_element_type=f32))
        m2 = jnp.dot(r2, T2b_ref[0], preferred_element_type=f32)
        for b in range(1, 3):
            m2 = jnp.maximum(m2, jnp.dot(r2, T2b_ref[b], preferred_element_type=f32))
        a2 = _gelu(_seg_layernorm(m2, B2_ref[...], Bb2_ref[...],
                                  vrow("g2", 128), vrow("bb2", 128)))  # (10, 128)
        a2 = _nan_to_num(a2)

        # flatten (torch (c,i,j) order folded into Wm1's row layout) + mlp_prot1
        y = jnp.dot(a2[0:1, :], Wm1_ref[0], preferred_element_type=f32)
        for i in range(1, 10):
            y = y + jnp.dot(a2[i:i + 1, :], Wm1_ref[i], preferred_element_type=f32)
        y = y + vrow("bm1", out_nf)
        y = _gelu(_layernorm(y, vrow("gm1", out_nf), vrow("bbm1", out_nf)))
        y = _nan_to_num(y)
        # mlp_prot2
        y = jnp.dot(y, Wm2_ref[...], preferred_element_type=f32) + vrow("bm2", ONF2)
        y = _gelu(_layernorm(y, vrow("gm2", ONF2), vrow("bbm2", ONF2)))
        y = _nan_to_num(y)
        # mlp_prot3 + sigmoid
        y = jnp.dot(y, Wm3_ref[...], preferred_element_type=f32) + vrow("bm3", out_dim)
        out_ref[...] = _sigmoid(y)

    return kernel


# ------------------------------ parameter setup -------------------------------

def _linear_init(key, fan_in, fan_out):
    kw, kb = jax.random.split(key)
    bound = 1.0 / np.sqrt(fan_in)
    w = jax.random.uniform(kw, (fan_in, fan_out), jnp.float32, -bound, bound)
    b = jax.random.uniform(kb, (1, fan_out), jnp.float32, -bound, bound)
    return w, b


def _pack_rows(mats):
    """Vertically concat (r_i, H) blocks, padding each section to a multiple of 8
    rows so in-kernel static slices stay sublane-aligned.  Returns (slab, offsets)."""
    parts, offs, off = [], [], 0
    for m in mats:
        m = np.asarray(m, np.float32)
        r = m.shape[0]
        rp = ((r + 7) // 8) * 8
        buf = np.zeros((rp, m.shape[1]), np.float32)
        buf[:r] = m
        parts.append(buf)
        offs.append(off)
        off += rp
    return np.concatenate(parts, axis=0), tuple(offs)


def _init_egcl_layer(key, H, Fe):
    ks = jax.random.split(key, 7)
    we1, be1 = _linear_init(ks[0], 2 * H + 1 + Fe, H)
    we2, be2 = _linear_init(ks[1], H, H)
    wa_full, ba_full = _linear_init(ks[2], H, 1)                 # attention Linear(H,1)
    wc1, bc1 = _linear_init(ks[3], H, H)
    xb = 0.001 * np.sqrt(6.0 / (H + 1))                          # xavier_uniform gain=.001
    wc2 = jax.random.uniform(ks[4], (H, 1), jnp.float32, -xb, xb)  # bias=False layer
    wn1, bn1 = _linear_init(ks[5], 2 * H, H)
    wn2, bn2 = _linear_init(ks[6], H, H)
    gn_g = jnp.ones((1, H), jnp.float32)
    gn_b = jnp.zeros((1, H), jnp.float32)

    slabA, offs = _pack_rows([we1[:H], we1[H:2 * H], we1[2 * H + 1:],
                              we1[2 * H:2 * H + 1], we2, wc1,
                              wn1[:H], wn1[H:], wn2])
    ba_row = jnp.full((1, H), ba_full[0, 0], jnp.float32)
    slabB = np.concatenate([np.asarray(v, np.float32) for v in
                            (be1, be2, bc1, bn1, bn2, gn_g, gn_b,
                             wa_full.T, wc2.T, ba_row)], axis=0)   # (10, H)
    return slabA, slabB, offs


def _build_head(key, H, out_nf, output_dim):
    ONF2 = out_nf // 2
    ks = jax.random.split(key, 12)
    w_eo, b_eo = _linear_init(ks[0], H, H)

    # Conv2d weights (torch default uniform init)
    c1b = 1.0 / np.sqrt(1 * 40 * 40)
    W1 = np.asarray(jax.random.uniform(ks[1], (4, 40, 40), jnp.float32, -c1b, c1b))
    b1 = np.asarray(jax.random.uniform(ks[2], (4,), jnp.float32, -c1b, c1b))
    c2b = 1.0 / np.sqrt(4 * 12 * 12)
    W2 = np.asarray(jax.random.uniform(ks[3], (16, 4, 12, 12), jnp.float32, -c2b, c2b))
    b2 = np.asarray(jax.random.uniform(ks[4], (16,), jnp.float32, -c2b, c2b))

    # column-Toeplitz conv weights (width zero-padding of 2 folded in)
    Tc1 = np.zeros((40, 128, 4 * 93), np.float32)
    j = np.arange(93)
    for di in range(40):
        for dj in range(40):
            t = j + dj - 2
            v = (t >= 0) & (t < 128)
            cols = np.arange(4)[:, None] * 93 + j[v][None, :]
            Tc1[di, t[v][None, :], cols] = W1[:, di, dj][:, None]
    Tc2 = np.zeros((48, 31, 16 * 24), np.float32)
    j2 = np.arange(24)
    for ci in range(4):
        for di in range(12):
            for dj in range(12):
                t = j2 + dj - 2
                v = (t >= 0) & (t < 31)
                cols = np.arange(16)[:, None] * 24 + j2[v][None, :]
                Tc2[ci * 12 + di, t[v][None, :], cols] = W2[:, ci, di, dj][:, None]
    b1_row = np.repeat(b1, 93)[None, :]                  # (1, 372)
    b2_row = np.repeat(b2, 24)[None, :]                  # (1, 384)

    # MaxPool2d(3) one-hot gathers
    S1a = np.zeros((3, 38, 115), np.float32)
    T1b = np.zeros((3, 372, 124), np.float32)
    S2a = np.zeros((3, 10, 31), np.float32)
    T2b = np.zeros((3, 384, 128), np.float32)
    for a in range(3):
        S1a[a, np.arange(38), 3 * np.arange(38) + a] = 1.0
        c = np.arange(4)[:, None]; jj = np.arange(31)[None, :]
        T1b[a, c * 93 + 3 * jj + a, c * 31 + jj] = 1.0
        S2a[a, np.arange(10), 3 * np.arange(10) + a] = 1.0
        c = np.arange(16)[:, None]; jj = np.arange(8)[None, :]
        T2b[a, c * 24 + 3 * jj + a, c * 8 + jj] = 1.0

    # per-channel LayerNorm segment-mean matmuls
    B1 = np.zeros((124, 4), np.float32); Bb1 = np.zeros((4, 124), np.float32)
    for c in range(4):
        B1[c * 31:(c + 1) * 31, c] = 1.0 / 31.0
        Bb1[c, c * 31:(c + 1) * 31] = 1.0
    B2 = np.zeros((128, 16), np.float32); Bb2 = np.zeros((16, 128), np.float32)
    for c in range(16):
        B2[c * 8:(c + 1) * 8, c] = 1.0 / 8.0
        Bb2[c, c * 8:(c + 1) * 8] = 1.0

    # post-conv MLPs.  Wm1 is stored as (10, 128, out_nf) matching the kernel's
    # (row, chan*8+col) activation layout; loading real torch weights would require
    # the permutation  Wm1[i, c*8 + j, o] = W_torch[o, c*80 + i*8 + j].
    m1b = 1.0 / np.sqrt(1280.0)
    Wm1 = jax.random.uniform(ks[5], (10, 128, out_nf), jnp.float32, -m1b, m1b)
    bm1 = jax.random.uniform(ks[6], (1, out_nf), jnp.float32, -m1b, m1b)
    Wm2, bm2 = _linear_init(ks[7], out_nf, ONF2)
    Wm3, bm3 = _linear_init(ks[8], ONF2, output_dim)

    # consolidate all (1, D) vectors into one slab (one DMA instead of 16)
    vec_rows = [
        ("b_eo", np.asarray(b_eo)), ("g_eo", np.ones((1, H), np.float32)),
        ("be_eo", np.zeros((1, H), np.float32)),
        ("b1", b1_row), ("g1", np.ones((1, 124), np.float32)),
        ("bb1", np.zeros((1, 124), np.float32)),
        ("b2", b2_row), ("g2", np.ones((1, 128), np.float32)),
        ("bb2", np.zeros((1, 128), np.float32)),
        ("bm1", np.asarray(bm1)), ("gm1", np.ones((1, out_nf), np.float32)),
        ("bbm1", np.zeros((1, out_nf), np.float32)),
        ("bm2", np.asarray(bm2)), ("gm2", np.ones((1, ONF2), np.float32)),
        ("bbm2", np.zeros((1, ONF2), np.float32)),
        ("bm3", np.asarray(bm3)),
    ]
    vslab = np.zeros((len(vec_rows), 384), np.float32)
    voff = {}
    for i, (name, v) in enumerate(vec_rows):
        vslab[i, :v.shape[1]] = v[0]
        voff[name] = i

    return dict(w_eo=w_eo, vslab=jnp.asarray(vslab), voff=voff,
                Tc1=jnp.asarray(Tc1), S1a=jnp.asarray(S1a), T1b=jnp.asarray(T1b),
                B1=jnp.asarray(B1), Bb1=jnp.asarray(Bb1),
                Tc2=jnp.asarray(Tc2), S2a=jnp.asarray(S2a), T2b=jnp.asarray(T2b),
                B2=jnp.asarray(B2), Bb2=jnp.asarray(Bb2),
                Wm1=Wm1, Wm2=Wm2, Wm3=Wm3)


def init_params(key, in_node_nf, hidden_nf, out_node_nf, in_edge_nf, output_dim,
                n_layers):
    assert hidden_nf % 8 == 0
    H = hidden_nf
    which_edges = []
    for gi, nl in enumerate(n_layers):
        which_edges += [gi] * nl
    L = len(which_edges)

    k_emb, k_head, k_layers = jax.random.split(key, 3)
    p = dict(hidden_nf=H, in_edge_nf=in_edge_nf, out_node_nf=out_node_nf,
             output_dim=output_dim, which_edges=which_edges)
    p["ln_in_g"] = jnp.ones((1, in_node_nf), jnp.float32)
    p["ln_in_b"] = jnp.zeros((1, in_node_nf), jnp.float32)
    p["emb_w"], p["emb_b"] = _linear_init(k_emb, in_node_nf, H)

    slabAs, slabBs, offs = [], [], None
    for lk in jax.random.split(k_layers, L):
        sA, sB, offs = _init_egcl_layer(lk, H, in_edge_nf)
        slabAs.append(sA)
        slabBs.append(sB)
    p["slabA"] = jnp.asarray(np.stack(slabAs, 0))        # (L, K_A, H)
    p["slabB"] = jnp.asarray(np.stack(slabBs, 0))        # (L, 10, H)
    p["offsA"] = offs
    p["head"] = _build_head(k_head, H, out_node_nf, output_dim)
    return p


def _adaptive_pool_onehots(N, H):
    """One-hot gather matrices implementing AdaptiveMaxPool2d((150,128))."""
    def windows(insz, outsz):
        i = np.arange(outsz)
        return (i * insz) // outsz, -((-(i + 1) * insz) // outsz)
    rs, re = windows(N, 150)
    Kr = int(np.max(re - rs))
    Roh = np.zeros((Kr, 150, N), np.float32)
    for k in range(Kr):
        idx = np.minimum(rs + k, re - 1)
        Roh[k, np.arange(150), idx] = 1.0
    cs, ce = windows(H, 128)
    Kc = int(np.max(ce - cs))
    Coh = np.zeros((Kc, H, 128), np.float32)
    for k in range(Kc):
        idx = np.minimum(cs + k, ce - 1)
        Coh[k, idx, np.arange(128)] = 1.0
    return Roh, Coh


# --------------------------------- forward ------------------------------------

def capsif2_prot_forward(params, h, x, edges_list, edge_attr_list):
    f32 = jnp.float32
    N, F_in = h.shape
    H = params["hidden_nf"]
    Fe = params["in_edge_nf"]
    ONF = params["out_node_nf"]
    OD = params["output_dim"]
    which = params["which_edges"]
    L = len(which)
    G = len(edges_list)
    E = max(int(e.shape[-1]) for e in edges_list)

    # per-edge-group gather/scatter machinery (hoisted out of the kernel)
    node_iota = jnp.arange(N, dtype=jnp.int32)
    ohr_l, ohc_l, ohT_l, cnt_l, ea_l = [], [], [], [], []
    for g in range(G):
        e = jnp.asarray(edges_list[g], jnp.int32).reshape(2, -1)
        ea = jnp.asarray(edge_attr_list[g], f32).reshape(e.shape[1], Fe)
        Eg = e.shape[1]
        row, col = e[0], e[1]
        if Eg < E:                        # pad with -1 => all-zero one-hot rows
            pad = jnp.full((E - Eg,), -1, jnp.int32)
            row = jnp.concatenate([row, pad])
            col = jnp.concatenate([col, pad])
            ea = jnp.concatenate([ea, jnp.zeros((E - Eg, Fe), f32)], 0)
        ohr = (row[:, None] == node_iota[None, :]).astype(f32)     # (E, N)
        ohc = (col[:, None] == node_iota[None, :]).astype(f32)
        ohr_l.append(ohr)
        ohc_l.append(ohc)
        ohT_l.append(ohr.T)
        cnt_l.append(jnp.maximum(jnp.sum(ohr, axis=0), 1.0).reshape(N, 1))
        ea_l.append(ea)
    ohr_g = jnp.stack(ohr_l); ohc_g = jnp.stack(ohc_l); ohT_g = jnp.stack(ohT_l)
    cnt_g = jnp.stack(cnt_l); ea_g = jnp.stack(ea_l)
    which_arr = jnp.asarray(which, jnp.int32)

    K_A = params["slabA"].shape[1]
    NB = params["slabB"].shape[1]

    cmap = lambda l, we: (0, 0)
    gmap3 = lambda l, we: (we[l], 0, 0)        # per-edge-group blocks
    lmap3 = lambda l, we: (l, 0, 0)            # per-layer weight slabs

    graph_fn = pl.pallas_call(
        make_graph_kernel(H, Fe, params["offsA"]),
        out_shape=jax.ShapeDtypeStruct((N, H), f32),
        grid_spec=pltpu.PrefetchScalarGridSpec(
            num_scalar_prefetch=1,
            grid=(L,),
            in_specs=[
                pl.BlockSpec((N, F_in), cmap),        # h
                pl.BlockSpec((1, F_in), cmap),        # norm_in gamma
                pl.BlockSpec((1, F_in), cmap),        # norm_in beta
                pl.BlockSpec((F_in, H), cmap),        # embedding_in0 W
                pl.BlockSpec((1, H), cmap),           # embedding_in0 b
                pl.BlockSpec((N, 3), cmap),           # x
                pl.BlockSpec((None, E, N), gmap3),    # one-hot row gather
                pl.BlockSpec((None, E, N), gmap3),    # one-hot col gather
                pl.BlockSpec((None, N, E), gmap3),    # row scatter (transpose)
                pl.BlockSpec((None, N, 1), gmap3),    # clamped row counts
                pl.BlockSpec((None, E, Fe), gmap3),   # edge_attr
                pl.BlockSpec((None, K_A, H), lmap3),  # per-layer matrix slab
                pl.BlockSpec((None, NB, H), lmap3),   # per-layer vector slab
            ],
            out_specs=pl.BlockSpec((N, H), cmap),
            scratch_shapes=[pltpu.VMEM((N, H), f32),    # h (resident across layers)
                            pltpu.VMEM((N, H), f32),    # h0
                            pltpu.VMEM((N, 3), f32)],   # x
        ),
        compiler_params=pltpu.CompilerParams(
            dimension_semantics=("arbitrary",),
            vmem_limit_bytes=32 * 1024 * 1024),
    )
    h_res = graph_fn(which_arr, h.astype(f32), params["ln_in_g"], params["ln_in_b"],
                     params["emb_w"], params["emb_b"], x.astype(f32),
                     ohr_g, ohc_g, ohT_g, cnt_g, ea_g,
                     params["slabA"], params["slabB"])

    # protein head
    hp = params["head"]
    Roh, Coh = _adaptive_pool_onehots(N, H)
    head_fn = pl.pallas_call(
        make_head_kernel(H, ONF, OD, Roh.shape[0], Coh.shape[0], hp["voff"]),
        out_shape=jax.ShapeDtypeStruct((1, OD), f32),
        in_specs=[pl.BlockSpec(memory_space=pltpu.MemorySpace.VMEM)] * 18,
        out_specs=pl.BlockSpec(memory_space=pltpu.MemorySpace.VMEM),
        scratch_shapes=[pltpu.VMEM((154, 128), f32),     # row-padded conv1 input
                        pltpu.VMEM((4, 42, 31), f32)],   # row-padded conv2 input
        compiler_params=pltpu.CompilerParams(vmem_limit_bytes=40 * 1024 * 1024),
    )
    out = head_fn(h_res, hp["w_eo"], hp["vslab"], jnp.asarray(Roh), jnp.asarray(Coh),
                  hp["Tc1"], hp["S1a"], hp["T1b"], hp["B1"], hp["Bb1"],
                  hp["Tc2"], hp["S2a"], hp["T2b"], hp["B2"], hp["Bb2"],
                  hp["Wm1"], hp["Wm2"], hp["Wm3"])
    return out


# ----------------------------------- main --------------------------------------

if __name__ == "__main__":
    N = 16            # nodes (residues)
    IN_NF = 64        # input node features (small stand-in for 1280)
    HID = 32          # hidden_nf
    OUT_NODE_NF = 32  # out_node_nf (small stand-in for 128)
    IN_EDGE_NF = 8    # edge features (small stand-in for 23)
    OUT_DIM = 1
    N_LAYERS = [1, 1]  # -> 2 E_GCL layers, which_edges = [0, 1]
    E = 48             # edges per edge-set

    key = jax.random.PRNGKey(0)
    kp, kh, kx, ke0, ke1, ka0, ka1 = jax.random.split(key, 7)
    params = init_params(kp, IN_NF, HID, OUT_NODE_NF, IN_EDGE_NF, OUT_DIM, N_LAYERS)

    h = jax.random.normal(kh, (N, IN_NF), jnp.float32)
    x = jax.random.normal(kx, (N, 3), jnp.float32)
    edges_list = [jax.random.randint(ke0, (2, E), 0, N, jnp.int32),
                  jax.random.randint(ke1, (2, E), 0, N, jnp.int32)]
    edge_attr_list = [jax.random.normal(ka0, (E, IN_EDGE_NF), jnp.float32),
                      jax.random.normal(ka1, (E, IN_EDGE_NF), jnp.float32)]

    out = capsif2_prot_forward(params, h, x, edges_list, edge_attr_list)
    out = jax.block_until_ready(out)
    assert out.shape == (1, OUT_DIM)
    assert bool(jnp.all(jnp.isfinite(out)))
    assert bool(jnp.all((out >= 0.0) & (out <= 1.0)))
    print("KERNEL_OK")
</pallas_src>

<mosaic_0001>
module attributes {stable_mosaic.version = 11 : i64} {
  func.func @kernel(%arg0: i32, %arg1: memref<2xi32, #tpu.memory_space<smem>>, %arg2: memref<16x64xf32, #tpu.memory_space<vmem>>, %arg3: memref<1x64xf32, #tpu.memory_space<vmem>>, %arg4: memref<1x64xf32, #tpu.memory_space<vmem>>, %arg5: memref<64x32xf32, #tpu.memory_space<vmem>>, %arg6: memref<1x32xf32, #tpu.memory_space<vmem>>, %arg7: memref<16x3xf32, #tpu.memory_space<vmem>>, %arg8: memref<1x48x16xf32, #tpu.memory_space<vmem>>, %arg9: memref<1x48x16xf32, #tpu.memory_space<vmem>>, %arg10: memref<1x16x48xf32, #tpu.memory_space<vmem>>, %arg11: memref<1x16x1xf32, #tpu.memory_space<vmem>>, %arg12: memref<1x48x8xf32, #tpu.memory_space<vmem>>, %arg13: memref<1x240x32xf32, #tpu.memory_space<vmem>>, %arg14: memref<1x10x32xf32, #tpu.memory_space<vmem>>, %arg15: memref<16x32xf32, #tpu.memory_space<vmem>>, %arg16: memref<16x32xf32, #tpu.memory_space<vmem>>, %arg17: memref<16x32xf32, #tpu.memory_space<vmem>>, %arg18: memref<16x3xf32, #tpu.memory_space<vmem>>) attributes {dimension_semantics = [#tpu.dimension_semantics<arbitrary>], iteration_bounds = array<i64: 2>, scalar_prefetch = 1 : i64, scratch_operands = 3 : i64, tpu.core_type = #tpu.core_type<tc>, window_params = [{pipeline_mode = #tpu.pipeline_mode<synchronous>, transform_indices = @transform_0, window_bounds = array<i64: 16, 64>}, {pipeline_mode = #tpu.pipeline_mode<synchronous>, transform_indices = @transform_1, window_bounds = array<i64: 1, 64>}, {pipeline_mode = #tpu.pipeline_mode<synchronous>, transform_indices = @transform_2, window_bounds = array<i64: 1, 64>}, {pipeline_mode = #tpu.pipeline_mode<synchronous>, transform_indices = @transform_3, window_bounds = array<i64: 64, 32>}, {pipeline_mode = #tpu.pipeline_mode<synchronous>, transform_indices = @transform_4, window_bounds = array<i64: 1, 32>}, {pipeline_mode = #tpu.pipeline_mode<synchronous>, transform_indices = @transform_5, window_bounds = array<i64: 16, 3>}, {transform_indices = @transform_6, window_bounds = array<i64: 1, 48, 16>}, {transform_indices = @transform_7, window_bounds = array<i64: 1, 48, 16>}, {transform_indices = @transform_8, window_bounds = array<i64: 1, 16, 48>}, {transform_indices = @transform_9, window_bounds = array<i64: 1, 16, 1>}, {transform_indices = @transform_10, window_bounds = array<i64: 1, 48, 8>}, {transform_indices = @transform_11, window_bounds = array<i64: 1, 240, 32>}, {transform_indices = @transform_12, window_bounds = array<i64: 1, 10, 32>}, {pipeline_mode = #tpu.pipeline_mode<synchronous>, transform_indices = @transform_13, window_bounds = array<i64: 16, 32>}]} {
    %c0_i32 = arith.constant 0 : i32
    %0 = arith.cmpi eq, %arg0, %c0_i32 : i32
    %1 = arith.extui %0 : i1 to i32
    %c0_i32_0 = arith.constant 0 : i32
    %2 = arith.cmpi ne, %1, %c0_i32_0 : i32
    scf.if %2 {
      %c0_78 = arith.constant 0 : index
      %c0_79 = arith.constant 0 : index
      %154 = vector.load %arg2[%c0_78, %c0_79] : memref<16x64xf32, #tpu.memory_space<vmem>>, vector<16x64xf32>
      %c0_80 = arith.constant 0 : index
      %c0_81 = arith.constant 0 : index
      %155 = vector.load %arg3[%c0_80, %c0_81] : memref<1x64xf32, #tpu.memory_space<vmem>>, vector<1x64xf32>
      %c0_82 = arith.constant 0 : index
      %c0_83 = arith.constant 0 : index
      %156 = vector.load %arg4[%c0_82, %c0_83] : memref<1x64xf32, #tpu.memory_space<vmem>>, vector<1x64xf32>
      %cst_84 = arith.constant dense<0.000000e+00> : vector<16xf32>
      %157 = vector.multi_reduction <add>, %154, %cst_84 [1] : vector<16x64xf32> to vector<16xf32>
      %158 = vector.shape_cast %157 : vector<16xf32> to vector<16x1xf32>
      %cst_85 = arith.constant 6.400000e+01 : f32
      %159 = vector.broadcast %cst_85 : f32 to vector<16x1xf32>
      %160 = arith.divf %158, %159 : vector<16x1xf32>
      %161 = vector.broadcast %160 : vector<16x1xf32> to vector<16x64xf32>
      %162 = arith.subf %154, %161 : vector<16x64xf32>
      %163 = arith.mulf %162, %162 : vector<16x64xf32>
      %cst_86 = arith.constant dense<0.000000e+00> : vector<16xf32>
      %164 = vector.multi_reduction <add>, %163, %cst_86 [1] : vector<16x64xf32> to vector<16xf32>
      %165 = vector.shape_cast %164 : vector<16xf32> to vector<16x1xf32>
      %cst_87 = arith.constant 6.400000e+01 : f32
      %166 = vector.broadcast %cst_87 : f32 to vector<16x1xf32>
      %167 = arith.divf %165, %166 : vector<16x1xf32>
      %168 = vector.broadcast %160 : vector<16x1xf32> to vector<16x64xf32>
      %169 = arith.subf %154, %168 : vector<16x64xf32>
      %cst_88 = arith.constant 9.99999974E-6 : f32
      %170 = vector.broadcast %cst_88 : f32 to vector<16x1xf32>
      %171 = arith.addf %167, %170 : vector<16x1xf32>
      %172 = math.rsqrt %171 : vector<16x1xf32>
      %173 = vector.broadcast %172 : vector<16x1xf32> to vector<16x64xf32>
      %174 = arith.mulf %169, %173 : vector<16x64xf32>
      %175 = vector.broadcast %155 : vector<1x64xf32> to vector<16x64xf32>
      %176 = arith.mulf %174, %175 : vector<16x64xf32>
      %177 = vector.broadcast %156 : vector<1x64xf32> to vector<16x64xf32>
      %178 = arith.addf %176, %177 : vector<16x64xf32>
      %c0_89 = arith.constant 0 : index
      %c0_90 = arith.constant 0 : index
      %179 = vector.load %arg5[%c0_89, %c0_90] : memref<64x32xf32, #tpu.memory_space<vmem>>, vector<64x32xf32>
      %cst_91 = arith.constant dense<0.000000e+00> : vector<16x32xf32>
      %180 = tpu.matmul %178, %179, %cst_91 {dimension_numbers = #tpu.dot_dimension_numbers<[1], [0], [0], [1], [0, 0, 1, 1], [], []>} : vector<16x64xf32>, vector<64x32xf32>, vector<16x32xf32> -> vector<16x32xf32>
      %c0_92 = arith.constant 0 : index
      %c0_93 = arith.constant 0 : index
      %181 = vector.load %arg6[%c0_92, %c0_93] : memref<1x32xf32, #tpu.memory_space<vmem>>, vector<1x32xf32>
      %182 = vector.broadcast %181 : vector<1x32xf32> to vector<16x32xf32>
      %183 = arith.addf %180, %182 : vector<16x32xf32>
      %c0_94 = arith.constant 0 : index
      %c0_95 = arith.constant 0 : index
      %184 = vector.load %arg17[%c0_94, %c0_95] : memref<16x32xf32, #tpu.memory_space<vmem>>, vector<16x32xf32>
      tpu.vector_store %arg17[%c0_94, %c0_95], %183 {strides = array<i32>} : memref<16x32xf32, #tpu.memory_space<vmem>>, vector<16x32xf32>,
      %c0_96 = arith.constant 0 : index
      %c0_97 = arith.constant 0 : index
      %185 = vector.load %arg16[%c0_96, %c0_97] : memref<16x32xf32, #tpu.memory_space<vmem>>, vector<16x32xf32>
      tpu.vector_store %arg16[%c0_96, %c0_97], %183 {strides = array<i32>} : memref<16x32xf32, #tpu.memory_space<vmem>>, vector<16x32xf32>,
      %c0_98 = arith.constant 0 : index
      %c0_99 = arith.constant 0 : index
      %186 = vector.load %arg7[%c0_98, %c0_99] : memref<16x3xf32, #tpu.memory_space<vmem>>, vector<16x3xf32>
      %c0_100 = arith.constant 0 : index
      %c0_101 = arith.constant 0 : index
      %187 = vector.load %arg18[%c0_100, %c0_101] : memref<16x3xf32, #tpu.memory_space<vmem>>, vector<16x3xf32>
      tpu.vector_store %arg18[%c0_100, %c0_101], %186 {strides = array<i32>} : memref<16x3xf32, #tpu.memory_space<vmem>>, vector<16x3xf32>,
    } else {
    }
    %c0 = arith.constant 0 : index
    %c0_1 = arith.constant 0 : index
    %3 = vector.load %arg16[%c0, %c0_1] : memref<16x32xf32, #tpu.memory_space<vmem>>, vector<16x32xf32>
    %c0_2 = arith.constant 0 : index
    %c0_3 = arith.constant 0 : index
    %4 = vector.load %arg18[%c0_2, %c0_3] : memref<16x3xf32, #tpu.memory_space<vmem>>, vector<16x3xf32>
    %c0_4 = arith.constant 0 : index
    %c0_5 = arith.constant 0 : index
    %c0_6 = arith.constant 0 : index
    %5 = vector.load %arg8[%c0_4, %c0_5, %c0_6] : memref<1x48x16xf32, #tpu.memory_space<vmem>>, vector<1x48x16xf32>
    %6 = vector.shape_cast %5 : vector<1x48x16xf32> to vector<48x16xf32>
    %c0_7 = arith.constant 0 : index
    %c0_8 = arith.constant 0 : index
    %c0_9 = arith.constant 0 : index
    %7 = vector.load %arg9[%c0_7, %c0_8, %c0_9] : memref<1x48x16xf32, #tpu.memory_space<vmem>>, vector<1x48x16xf32>
    %8 = vector.shape_cast %7 : vector<1x48x16xf32> to vector<48x16xf32>
    %c0_10 = arith.constant 0 : index
    %c0_11 = arith.constant 0 : index
    %c0_12 = arith.constant 0 : index
    %9 = vector.load %arg10[%c0_10, %c0_11, %c0_12] : memref<1x16x48xf32, #tpu.memory_space<vmem>>, vector<1x16x48xf32>
    %10 = vector.shape_cast %9 : vector<1x16x48xf32> to vector<16x48xf32>
    %c0_13 = arith.constant 0 : index
    %c0_14 = arith.constant 0 : index
    %c0_15 = arith.constant 0 : index
    %11 = vector.load %arg11[%c0_13, %c0_14, %c0_15] : memref<1x16x1xf32, #tpu.memory_space<vmem>>, vector<1x16x1xf32>
    %12 = vector.shape_cast %11 : vector<1x16x1xf32> to vector<16x1xf32>
    %c0_16 = arith.constant 0 : index
    %c0_17 = arith.constant 0 : index
    %c0_18 = arith.constant 0 : index
    %13 = vector.load %arg12[%c0_16, %c0_17, %c0_18] : memref<1x48x8xf32, #tpu.memory_space<vmem>>, vector<1x48x8xf32>
    %14 = vector.shape_cast %13 : vector<1x48x8xf32> to vector<48x8xf32>
    %c0_19 = arith.constant 0 : index
    %c0_20 = arith.constant 0 : index
    %c0_21 = arith.constant 0 : index
    %15 = vector.load %arg14[%c0_19, %c0_20, %c0_21] : memref<1x10x32xf32, #tpu.memory_space<vmem>>, vector<1x10x32xf32>
    %16 = vector.shape_cast %15 : vector<1x10x32xf32> to vector<10x32xf32>
    %17 = vector.extract_strided_slice %16 {offsets = [0, 0], sizes = [1, 32], strides = [1, 1]} : vector<10x32xf32> to vector<1x32xf32>
    %18 = vector.extract_strided_slice %16 {offsets = [1, 0], sizes = [1, 32], strides = [1, 1]} : vector<10x32xf32> to vector<1x32xf32>
    %19 = vector.extract_strided_slice %16 {offsets = [2, 0], sizes = [1, 32], strides = [1, 1]} : vector<10x32xf32> to vector<1x32xf32>
    %20 = vector.extract_strided_slice %16 {offsets = [3, 0], sizes = [1, 32], strides = [1, 1]} : vector<10x32xf32> to vector<1x32xf32>
    %21 = vector.extract_strided_slice %16 {offsets = [4, 0], sizes = [1, 32], strides = [1, 1]} : vector<10x32xf32> to vector<1x32xf32>
    %22 = vector.extract_strided_slice %16 {offsets = [5, 0], sizes = [1, 32], strides = [1, 1]} : vector<10x32xf32> to vector<1x32xf32>
    %23 = vector.extract_strided_slice %16 {offsets = [6, 0], sizes = [1, 32], strides = [1, 1]} : vector<10x32xf32> to vector<1x32xf32>
    %24 = vector.extract_strided_slice %16 {offsets = [7, 0], sizes = [1, 32], strides = [1, 1]} : vector<10x32xf32> to vector<1x32xf32>
    %25 = vector.extract_strided_slice %16 {offsets = [8, 0], sizes = [1, 32], strides = [1, 1]} : vector<10x32xf32> to vector<1x32xf32>
    %26 = vector.extract_strided_slice %16 {offsets = [9, 0], sizes = [1, 1], strides = [1, 1]} : vector<10x32xf32> to vector<1x1xf32>
    %c0_22 = arith.constant 0 : index
    %c0_23 = arith.constant 0 : index
    %c0_24 = arith.constant 0 : index
    %27 = vector.load %arg13[%c0_22, %c0_23, %c0_24] : memref<1x240x32xf32, #tpu.memory_space<vmem>>, vector<1x32x32xf32>
    %28 = vector.shape_cast %27 : vector<1x32x32xf32> to vector<32x32xf32>
    %c0_25 = arith.constant 0 : index
    %c32 = arith.constant 32 : index
    %c0_26 = arith.constant 0 : index
    %29 = vector.load %arg13[%c0_25, %c32, %c0_26] : memref<1x240x32xf32, #tpu.memory_space<vmem>>, vector<1x32x32xf32>
    %30 = vector.shape_cast %29 : vector<1x32x32xf32> to vector<32x32xf32>
    %c0_27 = arith.constant 0 : index
    %c64 = arith.constant 64 : index
    %c0_28 = arith.constant 0 : index
    %31 = vector.load %arg13[%c0_27, %c64, %c0_28] : memref<1x240x32xf32, #tpu.memory_space<vmem>>, vector<1x8x32xf32>
    %32 = vector.shape_cast %31 : vector<1x8x32xf32> to vector<8x32xf32>
    %c0_29 = arith.constant 0 : index
    %c72 = arith.constant 72 : index
    %c0_30 = arith.constant 0 : index
    %33 = vector.load %arg13[%c0_29, %c72, %c0_30] : memref<1x240x32xf32, #tpu.memory_space<vmem>>, vector<1x1x32xf32>
    %34 = vector.shape_cast %33 : vector<1x1x32xf32> to vector<1x32xf32>
    %c0_31 = arith.constant 0 : index
    %c80 = arith.constant 80 : index
    %c0_32 = arith.constant 0 : index
    %35 = vector.load %arg13[%c0_31, %c80, %c0_32] : memref<1x240x32xf32, #tpu.memory_space<vmem>>, vector<1x32x32xf32>
    %36 = vector.shape_cast %35 : vector<1x32x32xf32> to vector<32x32xf32>
    %c0_33 = arith.constant 0 : index
    %c112 = arith.constant 112 : index
    %c0_34 = arith.constant 0 : index
    %37 = vector.load %arg13[%c0_33, %c112, %c0_34] : memref<1x240x32xf32, #tpu.memory_space<vmem>>, vector<1x32x32xf32>
    %38 = vector.shape_cast %37 : vector<1x32x32xf32> to vector<32x32xf32>
    %c0_35 = arith.constant 0 : index
    %c144 = arith.constant 144 : index
    %c0_36 = arith.constant 0 : index
    %39 = vector.load %arg13[%c0_35, %c144, %c0_36] : memref<1x240x32xf32, #tpu.memory_space<vmem>>, vector<1x32x32xf32>
    %40 = vector.shape_cast %39 : vector<1x32x32xf32> to vector<32x32xf32>
    %c0_37 = arith.constant 0 : index
    %c176 = arith.constant 176 : index
    %c0_38 = arith.constant 0 : index
    %41 = vector.load %arg13[%c0_37, %c176, %c0_38] : memref<1x240x32xf32, #tpu.memory_space<vmem>>, vector<1x32x32xf32>
    %42 = vector.shape_cast %41 : vector<1x32x32xf32> to vector<32x32xf32>
    %c0_39 = arith.constant 0 : index
    %c208 = arith.constant 208 : index
    %c0_40 = arith.constant 0 : index
    %43 = vector.load %arg13[%c0_39, %c208, %c0_40] : memref<1x240x32xf32, #tpu.memory_space<vmem>>, vector<1x32x32xf32>
    %44 = vector.shape_cast %43 : vector<1x32x32xf32> to vector<32x32xf32>
    %45 = arith.subf %6, %8 : vector<48x16xf32>
    %cst = arith.constant dense<0.000000e+00> : vector<48x3xf32>
    %46 = tpu.matmul %45, %4, %cst {dimension_numbers = #tpu.dot_dimension_numbers<[1], [0], [0], [1], [0, 0, 1, 1], [], []>} : vector<48x16xf32>, vector<16x3xf32>, vector<48x3xf32> -> vector<48x3xf32>
    %47 = arith.mulf %46, %46 : vector<48x3xf32>
    %cst_41 = arith.constant dense<0.000000e+00> : vector<48xf32>
    %48 = vector.multi_reduction <add>, %47, %cst_41 [1] : vector<48x3xf32> to vector<48xf32>
    %49 = vector.shape_cast %48 : vector<48xf32> to vector<48x1xf32>
    %50 = math.sqrt %49 : vector<48x1xf32>
    %cst_42 = arith.constant 9.99999993E-9 : f32
    %51 = vector.broadcast %cst_42 : f32 to vector<48x1xf32>
    %52 = arith.addf %50, %51 : vector<48x1xf32>
    %53 = vector.broadcast %52 : vector<48x1xf32> to vector<48x3xf32>
    %54 = arith.divf %46, %53 : vector<48x3xf32>
    %cst_43 = arith.constant dense<0.000000e+00> : vector<16x32xf32>
    %55 = tpu.matmul %3, %28, %cst_43 {dimension_numbers = #tpu.dot_dimension_numbers<[1], [0], [0], [1], [0, 0, 1, 1], [], []>} : vector<16x32xf32>, vector<32x32xf32>, vector<16x32xf32> -> vector<16x32xf32>
    %cst_44 = arith.constant dense<0.000000e+00> : vector<16x32xf32>
    %56 = tpu.matmul %3, %30, %cst_44 {dimension_numbers = #tpu.dot_dimension_numbers<[1], [0], [0], [1], [0, 0, 1, 1], [], []>} : vector<16x32xf32>, vector<32x32xf32>, vector<16x32xf32> -> vector<16x32xf32>
    %cst_45 = arith.constant dense<0.000000e+00> : vector<48x32xf32>
    %57 = tpu.matmul %6, %55, %cst_45 {dimension_numbers = #tpu.dot_dimension_numbers<[1], [0], [0], [1], [0, 0, 1, 1], [], []>} : vector<48x16xf32>, vector<16x32xf32>, vector<48x32xf32> -> vector<48x32xf32>
    %cst_46 = arith.constant dense<0.000000e+00> : vector<48x32xf32>
    %58 = tpu.matmul %8, %56, %cst_46 {dimension_numbers = #tpu.dot_dimension_numbers<[1], [0], [0], [1], [0, 0, 1, 1], [], []>} : vector<48x16xf32>, vector<16x32xf32>, vector<48x32xf32> -> vector<48x32xf32>
    %59 = arith.addf %57, %58 : vector<48x32xf32>
    %60 = vector.broadcast %49 : vector<48x1xf32> to vector<48x32xf32>
    %61 = vector.broadcast %34 : vector<1x32xf32> to vector<48x32xf32>
    %62 = arith.mulf %60, %61 : vector<48x32xf32>
    %63 = arith.addf %59, %62 : vector<48x32xf32>
    %cst_47 = arith.constant dense<0.000000e+00> : vector<48x32xf32>
    %64 = tpu.matmul %14, %32, %cst_47 {dimension_numbers = #tpu.dot_dimension_numbers<[1], [0], [0], [1], [0, 0, 1, 1], [], []>} : vector<48x8xf32>, vector<8x32xf32>, vector<48x32xf32> -> vector<48x32xf32>
    %65 = arith.addf %63, %64 : vector<48x32xf32>
    %66 = vector.broadcast %17 : vector<1x32xf32> to vector<48x32xf32>
    %67 = arith.addf %65, %66 : vector<48x32xf32>
    %cst_48 = arith.constant 0.000000e+00 : f32
    %68 = vector.broadcast %cst_48 : f32 to vector<48x32xf32>
    %69 = arith.maximumf %67, %68 : vector<48x32xf32>
    %cst_49 = arith.constant dense<0.000000e+00> : vector<48x32xf32>
    %70 = tpu.matmul %69, %36, %cst_49 {dimension_numbers = #tpu.dot_dimension_numbers<[1], [0], [0], [1], [0, 0, 1, 1], [], []>} : vector<48x32xf32>, vector<32x32xf32>, vector<48x32xf32> -> vector<48x32xf32>
    %71 = vector.broadcast %18 : vector<1x32xf32> to vector<48x32xf32>
    %72 = arith.addf %70, %71 : vector<48x32xf32>
    %cst_50 = arith.constant 0.000000e+00 : f32
    %73 = vector.broadcast %cst_50 : f32 to vector<48x32xf32>
    %74 = arith.maximumf %72, %73 : vector<48x32xf32>
    %75 = vector.broadcast %24 : vector<1x32xf32> to vector<48x32xf32>
    %76 = arith.mulf %74, %75 : vector<48x32xf32>
    %cst_51 = arith.constant dense<0.000000e+00> : vector<48xf32>
    %77 = vector.multi_reduction <add>, %76, %cst_51 [1] : vector<48x32xf32> to vector<48xf32>
    %78 = vector.shape_cast %77 : vector<48xf32> to vector<48x1xf32>
    %79 = vector.broadcast %26 : vector<1x1xf32> to vector<48x1xf32>
    %80 = arith.addf %78, %79 : vector<48x1xf32>
    %cst_52 = arith.constant 0.000000e+00 : f32
    %81 = vector.broadcast %cst_52 : f32 to vector<48x1xf32>
    %82 = arith.subf %81, %80 : vector<48x1xf32>
    %83 = math.exp %82 : vector<48x1xf32>
    %cst_53 = arith.constant 1.000000e+00 : f32
    %84 = vector.broadcast %cst_53 : f32 to vector<48x1xf32>
    %85 = arith.addf %84, %83 : vector<48x1xf32>
    %86 = tpu.reciprocal %85 {approx = true} : vector<48x1xf32> -> vector<48x1xf32>
    %87 = vector.broadcast %86 : vector<48x1xf32> to vector<48x32xf32>
    %88 = arith.mulf %74, %87 : vector<48x32xf32>
    %cst_54 = arith.constant dense<0.000000e+00> : vector<48x32xf32>
    %89 = tpu.matmul %88, %38, %cst_54 {dimension_numbers = #tpu.dot_dimension_numbers<[1], [0], [0], [1], [0, 0, 1, 1], [], []>} : vector<48x32xf32>, vector<32x32xf32>, vector<48x32xf32> -> vector<48x32xf32>
    %90 = vector.broadcast %19 : vector<1x32xf32> to vector<48x32xf32>
    %91 = arith.addf %89, %90 : vector<48x32xf32>
    %cst_55 = arith.constant 0.000000e+00 : f32
    %92 = vector.broadcast %cst_55 : f32 to vector<48x32xf32>
    %93 = arith.maximumf %91, %92 : vector<48x32xf32>
    %94 = vector.broadcast %25 : vector<1x32xf32> to vector<48x32xf32>
    %95 = arith.mulf %93, %94 : vector<48x32xf32>
    %cst_56 = arith.constant dense<0.000000e+00> : vector<48xf32>
    %96 = vector.multi_reduction <add>, %95, %cst_56 [1] : vector<48x32xf32> to vector<48xf32>
    %97 = vector.shape_cast %96 : vector<48xf32> to vector<48x1xf32>
    %98 = vector.broadcast %97 : vector<48x1xf32> to vector<48x3xf32>
    %99 = arith.mulf %54, %98 : vector<48x3xf32>
    %cst_57 = arith.constant dense<0.000000e+00> : vector<16x3xf32>
    %100 = tpu.matmul %10, %99, %cst_57 {dimension_numbers = #tpu.dot_dimension_numbers<[1], [0], [0], [1], [0, 0, 1, 1], [], []>} : vector<16x48xf32>, vector<48x3xf32>, vector<16x3xf32> -> vector<16x3xf32>
    %101 = vector.broadcast %12 : vector<16x1xf32> to vector<16x3xf32>
    %102 = arith.divf %100, %101 : vector<16x3xf32>
    %103 = arith.addf %4, %102 : vector<16x3xf32>
    %cst_58 = arith.constant dense<0.000000e+00> : vector<16x32xf32>
    %104 = tpu.matmul %10, %88, %cst_58 {dimension_numbers = #tpu.dot_dimension_numbers<[1], [0], [0], [1], [0, 0, 1, 1], [], []>} : vector<16x48xf32>, vector<48x32xf32>, vector<16x32xf32> -> vector<16x32xf32>
    %cst_59 = arith.constant dense<0.000000e+00> : vector<16x32xf32>
    %105 = tpu.matmul %3, %40, %cst_59 {dimension_numbers = #tpu.dot_dimension_numbers<[1], [0], [0], [1], [0, 0, 1, 1], [], []>} : vector<16x32xf32>, vector<32x32xf32>, vector<16x32xf32> -> vector<16x32xf32>
    %cst_60 = arith.constant dense<0.000000e+00> : vector<16x32xf32>
    %106 = tpu.matmul %104, %42, %cst_60 {dimension_numbers = #tpu.dot_dimension_numbers<[1], [0], [0], [1], [0, 0, 1, 1], [], []>} : vector<16x32xf32>, vector<32x32xf32>, vector<16x32xf32> -> vector<16x32xf32>
    %107 = arith.addf %105, %106 : vector<16x32xf32>
    %108 = vector.broadcast %20 : vector<1x32xf32> to vector<16x32xf32>
    %109 = arith.addf %107, %108 : vector<16x32xf32>
    %cst_61 = arith.constant 0.000000e+00 : f32
    %110 = vector.broadcast %cst_61 : f32 to vector<16x32xf32>
    %111 = arith.maximumf %109, %110 : vector<16x32xf32>
    %cst_62 = arith.constant dense<0.000000e+00> : vector<16x32xf32>
    %112 = tpu.matmul %111, %44, %cst_62 {dimension_numbers = #tpu.dot_dimension_numbers<[1], [0], [0], [1], [0, 0, 1, 1], [], []>} : vector<16x32xf32>, vector<32x32xf32>, vector<16x32xf32> -> vector<16x32xf32>
    %113 = vector.broadcast %21 : vector<1x32xf32> to vector<16x32xf32>
    %114 = arith.addf %112, %113 : vector<16x32xf32>
    %115 = arith.addf %3, %114 : vector<16x32xf32>
    %cst_63 = arith.constant dense<0.000000e+00> : vector<16xf32>
    %116 = vector.multi_reduction <add>, %115, %cst_63 [1] : vector<16x32xf32> to vector<16xf32>
    %117 = vector.shape_cast %116 : vector<16xf32> to vector<16x1xf32>
    %cst_64 = arith.constant 3.200000e+01 : f32
    %118 = vector.broadcast %cst_64 : f32 to vector<16x1xf32>
    %119 = arith.divf %117, %118 : vector<16x1xf32>
    %120 = vector.broadcast %119 : vector<16x1xf32> to vector<16x32xf32>
    %121 = arith.subf %115, %120 : vector<16x32xf32>
    %122 = arith.mulf %121, %121 : vector<16x32xf32>
    %cst_65 = arith.constant dense<0.000000e+00> : vector<16xf32>
    %123 = vector.multi_reduction <add>, %122, %cst_65 [1] : vector<16x32xf32> to vector<16xf32>
    %124 = vector.shape_cast %123 : vector<16xf32> to vector<16x1xf32>
    %cst_66 = arith.constant 3.200000e+01 : f32
    %125 = vector.broadcast %cst_66 : f32 to vector<16x1xf32>
    %126 = arith.divf %124, %125 : vector<16x1xf32>
    %127 = vector.broadcast %119 : vector<16x1xf32> to vector<16x32xf32>
    %128 = arith.subf %115, %127 : vector<16x32xf32>
    %cst_67 = arith.constant 9.99999974E-6 : f32
    %129 = vector.broadcast %cst_67 : f32 to vector<16x1xf32>
    %130 = arith.addf %126, %129 : vector<16x1xf32>
    %131 = math.rsqrt %130 : vector<16x1xf32>
    %132 = vector.broadcast %131 : vector<16x1xf32> to vector<16x32xf32>
    %133 = arith.mulf %128, %132 : vector<16x32xf32>
    %134 = vector.broadcast %22 : vector<1x32xf32> to vector<16x32xf32>
    %135 = arith.mulf %133, %134 : vector<16x32xf32>
    %136 = vector.broadcast %23 : vector<1x32xf32> to vector<16x32xf32>
    %137 = arith.addf %135, %136 : vector<16x32xf32>
    %138 = arith.cmpf one, %137, %137 : vector<16x32xf32>
    %cst_68 = arith.constant 0.000000e+00 : f32
    %139 = vector.broadcast %cst_68 : f32 to vector<16x32xf32>
    %140 = arith.select %138, %139, %137 : vector<16x32xi1>, vector<16x32xf32>
    %cst_69 = arith.constant 0x7F800000 : f32
    %141 = vector.broadcast %cst_69 : f32 to vector<16x32xf32>
    %142 = arith.cmpf oeq, %140, %141 : vector<16x32xf32>
    %cst_70 = arith.constant 3.40282347E+38 : f32
    %143 = vector.broadcast %cst_70 : f32 to vector<16x32xf32>
    %144 = arith.select %142, %143, %140 : vector<16x32xi1>, vector<16x32xf32>
    %cst_71 = arith.constant 0xFF800000 : f32
    %145 = vector.broadcast %cst_71 : f32 to vector<16x32xf32>
    %146 = arith.cmpf oeq, %144, %145 : vector<16x32xf32>
    %cst_72 = arith.constant -3.40282347E+38 : f32
    %147 = vector.broadcast %cst_72 : f32 to vector<16x32xf32>
    %148 = arith.select %146, %147, %144 : vector<16x32xi1>, vector<16x32xf32>
    %c0_73 = arith.constant 0 : index
    %c0_74 = arith.constant 0 : index
    %149 = vector.load %arg16[%c0_73, %c0_74] : memref<16x32xf32, #tpu.memory_space<vmem>>, vector<16x32xf32>
    tpu.vector_store %arg16[%c0_73, %c0_74], %148 {strides = array<i32>} : memref<16x32xf32, #tpu.memory_space<vmem>>, vector<16x32xf32>,
    %c0_75 = arith.constant 0 : index
    %c0_76 = arith.constant 0 : index
    %150 = vector.load %arg18[%c0_75, %c0_76] : memref<16x3xf32, #tpu.memory_space<vmem>>, vector<16x3xf32>
    tpu.vector_store %arg18[%c0_75, %c0_76], %103 {strides = array<i32>} : memref<16x3xf32, #tpu.memory_space<vmem>>, vector<16x3xf32>,
    %c1_i32 = arith.constant 1 : i32
    %151 = arith.cmpi eq, %arg0, %c1_i32 : i32
    %152 = arith.extui %151 : i1 to i32
    %c0_i32_77 = arith.constant 0 : i32
    %153 = arith.cmpi ne, %152, %c0_i32_77 : i32
    scf.if %153 {
      %c0_78 = arith.constant 0 : index
      %c0_79 = arith.constant 0 : index
      %154 = vector.load %arg17[%c0_78, %c0_79] : memref<16x32xf32, #tpu.memory_space<vmem>>, vector<16x32xf32>
      %155 = arith.addf %154, %148 : vector<16x32xf32>
      %c0_80 = arith.constant 0 : index
      %c0_81 = arith.constant 0 : index
      %156 = vector.load %arg15[%c0_80, %c0_81] : memref<16x32xf32, #tpu.memory_space<vmem>>, vector<16x32xf32>
      tpu.vector_store %arg15[%c0_80, %c0_81], %155 {strides = array<i32>} : memref<16x32xf32, #tpu.memory_space<vmem>>, vector<16x32xf32>,
    } else {
    }
    return
  }
  func.func @transform_0(%arg0: i32, %arg1: memref<2xi32, #tpu.memory_space<smem>>) -> (i32, i32) {
    %c0_i32 = arith.constant 0 : i32
    %c0_i32_0 = arith.constant 0 : i32
    %c0_i32_1 = arith.constant 0 : i32
    return %c0_i32, %c0_i32_0 : i32, i32
  }
  func.func @transform_1(%arg0: i32, %arg1: memref<2xi32, #tpu.memory_space<smem>>) -> (i32, i32) {
    %c0_i32 = arith.constant 0 : i32
    %c0_i32_0 = arith.constant 0 : i32
    %c0_i32_1 = arith.constant 0 : i32
    return %c0_i32, %c0_i32_0 : i32, i32
  }
  func.func @transform_2(%arg0: i32, %arg1: memref<2xi32, #tpu.memory_space<smem>>) -> (i32, i32) {
    %c0_i32 = arith.constant 0 : i32
    %c0_i32_0 = arith.constant 0 : i32
    %c0_i32_1 = arith.constant 0 : i32
    return %c0_i32, %c0_i32_0 : i32, i32
  }
  func.func @transform_3(%arg0: i32, %arg1: memref<2xi32, #tpu.memory_space<smem>>) -> (i32, i32) {
    %c0_i32 = arith.constant 0 : i32
    %c0_i32_0 = arith.constant 0 : i32
    %c0_i32_1 = arith.constant 0 : i32
    return %c0_i32, %c0_i32_0 : i32, i32
  }
  func.func @transform_4(%arg0: i32, %arg1: memref<2xi32, #tpu.memory_space<smem>>) -> (i32, i32) {
    %c0_i32 = arith.constant 0 : i32
    %c0_i32_0 = arith.constant 0 : i32
    %c0_i32_1 = arith.constant 0 : i32
    return %c0_i32, %c0_i32_0 : i32, i32
  }
  func.func @transform_5(%arg0: i32, %arg1: memref<2xi32, #tpu.memory_space<smem>>) -> (i32, i32) {
    %c0_i32 = arith.constant 0 : i32
    %c0_i32_0 = arith.constant 0 : i32
    %c0_i32_1 = arith.constant 0 : i32
    return %c0_i32, %c0_i32_0 : i32, i32
  }
  func.func @transform_6(%arg0: i32, %arg1: memref<2xi32, #tpu.memory_space<smem>>) -> (i32, i32, i32) {
    %0 = arith.index_cast %arg0 : i32 to index
    %1 = memref.load %arg1[%0] : memref<2xi32, #tpu.memory_space<smem>>
    %c0_i32 = arith.constant 0 : i32
    %c0_i32_0 = arith.constant 0 : i32
    %c0_i32_1 = arith.constant 0 : i32
    return %1, %c0_i32, %c0_i32_0 : i32, i32, i32
  }
  func.func @transform_7(%arg0: i32, %arg1: memref<2xi32, #tpu.memory_space<smem>>) -> (i32, i32, i32) {
    %0 = arith.index_cast %arg0 : i32 to index
    %1 = memref.load %arg1[%0] : memref<2xi32, #tpu.memory_space<smem>>
    %c0_i32 = arith.constant 0 : i32
    %c0_i32_0 = arith.constant 0 : i32
    %c0_i32_1 = arith.constant 0 : i32
    return %1, %c0_i32, %c0_i32_0 : i32, i32, i32
  }
  func.func @transform_8(%arg0: i32, %arg1: memref<2xi32, #tpu.memory_space<smem>>) -> (i32, i32, i32) {
    %0 = arith.index_cast %arg0 : i32 to index
    %1 = memref.load %arg1[%0] : memref<2xi32, #tpu.memory_space<smem>>
    %c0_i32 = arith.constant 0 : i32
    %c0_i32_0 = arith.constant 0 : i32
    %c0_i32_1 = arith.constant 0 : i32
    return %1, %c0_i32, %c0_i32_0 : i32, i32, i32
  }
  func.func @transform_9(%arg0: i32, %arg1: memref<2xi32, #tpu.memory_space<smem>>) -> (i32, i32, i32) {
    %0 = arith.index_cast %arg0 : i32 to index
    %1 = memref.load %arg1[%0] : memref<2xi32, #tpu.memory_space<smem>>
    %c0_i32 = arith.constant 0 : i32
    %c0_i32_0 = arith.constant 0 : i32
    %c0_i32_1 = arith.constant 0 : i32
    return %1, %c0_i32, %c0_i32_0 : i32, i32, i32
  }
  func.func @transform_10(%arg0: i32, %arg1: memref<2xi32, #tpu.memory_space<smem>>) -> (i32, i32, i32) {
    %0 = arith.index_cast %arg0 : i32 to index
    %1 = memref.load %arg1[%0] : memref<2xi32, #tpu.memory_space<smem>>
    %c0_i32 = arith.constant 0 : i32
    %c0_i32_0 = arith.constant 0 : i32
    %c0_i32_1 = arith.constant 0 : i32
    return %1, %c0_i32, %c0_i32_0 : i32, i32, i32
  }
  func.func @transform_11(%arg0: i32, %arg1: memref<2xi32, #tpu.memory_space<smem>>) -> (i32, i32, i32) {
    %c0_i32 = arith.constant 0 : i32
    %c0_i32_0 = arith.constant 0 : i32
    %c0_i32_1 = arith.constant 0 : i32
    return %arg0, %c0_i32, %c0_i32_0 : i32, i32, i32
  }
  func.func @transform_12(%arg0: i32, %arg1: memref<2xi32, #tpu.memory_space<smem>>) -> (i32, i32, i32) {
    %c0_i32 = arith.constant 0 : i32
    %c0_i32_0 = arith.constant 0 : i32
    %c0_i32_1 = arith.constant 0 : i32
    return %arg0, %c0_i32, %c0_i32_0 : i32, i32, i32
  }
  func.func @transform_13(%arg0: i32, %arg1: memref<2xi32, #tpu.memory_space<smem>>) -> (i32, i32) {
    %c0_i32 = arith.constant 0 : i32
    %c0_i32_0 = arith.constant 0 : i32
    %c0_i32_1 = arith.constant 0 : i32
    return %c0_i32, %c0_i32_0 : i32, i32
  }
}

</mosaic_0001>

<llo_original>
// kernel: tpu_custom_call.1
$region0: #{tpu_custom_call.1}
  #allocation0 [shape = 'u32[]', space=smem, size = 0x4, offset = 0x4, fixed_abs, tag = 'smem constant byte address 0x4 - core index']
  #allocation1 [shape = 'u32[144,128]{1,0:T(1,128)}', space=vmem, size = 0x12000, scoped, tag = 'internal scratch']
  #allocation2 [shape = 'f32[16,32]{1,0:T(8,128)}', space=vmem, size = 0x2000, scoped, tag = 'scratch operand']
  #allocation3 [shape = 'f32[16,32]{1,0:T(8,128)}', space=vmem, size = 0x2000, scoped, tag = 'scratch operand']
  #allocation4 [shape = 'f32[16,3]{1,0:T(8,128)}', space=vmem, size = 0x2000, scoped, tag = 'scratch operand']
  #allocation5 [shape = 's32[1]{0}', space=sflag, size = 0x4, scoped, tag = 'scoped memory for tpu_custom_call.1']
  #allocation6 [shape = 'u8[512]{0}', space=smem, size = 0x200, scoped, tag = 'prefetched SMEM operand 0']
  %s0 = inlined_call_operand.vmem [shape: s32[2], index: 0, kind: input, shape index: {}]
  %s1 = inlined_call_operand.vmem [shape: f32[16,64], index: 1, kind: input, shape index: {}]
  %s2 = inlined_call_operand.vmem [shape: f32[1,64], index: 2, kind: input, shape index: {}]
  %s3 = inlined_call_operand.vmem [shape: f32[1,64], index: 3, kind: input, shape index: {}]
  %s4 = inlined_call_operand.vmem [shape: f32[64,32], index: 4, kind: input, shape index: {}]
  %s5 = inlined_call_operand.vmem [shape: f32[1,32], index: 5, kind: input, shape index: {}]
  %s6 = inlined_call_operand.vmem [shape: f32[16,3], index: 6, kind: input, shape index: {}]
  %s7 = inlined_call_operand.vmem [shape: f32[2,48,16], index: 7, kind: input, shape index: {}]
  %s8 = inlined_call_operand.vmem [shape: f32[2,48,16], index: 8, kind: input, shape index: {}]
  %s9 = inlined_call_operand.vmem [shape: f32[2,16,48], index: 9, kind: input, shape index: {}]
  %s10 = inlined_call_operand.vmem [shape: f32[2,16,1], index: 10, kind: input, shape index: {}]
  %s11 = inlined_call_operand.vmem [shape: f32[2,48,8], index: 11, kind: input, shape index: {}]
  %s12 = inlined_call_operand.vmem [shape: f32[2,240,32], index: 12, kind: input, shape index: {}]
  %s13 = inlined_call_operand.vmem [shape: f32[2,10,32], index: 13, kind: input, shape index: {}]
  %s14 = inlined_call_operand.hbm [shape: f32[16,32], index: 14, kind: output, shape index: {}]
  %s15 = sld [smem:[#allocation0]]
  $region93: #{tpu_custom_call.1} parent=0
    _
  %s17 = ssub.s32 1, %s15
  %s18 = scalar_select 0, %s17, %s15
  %s19 = sshll.u32 %s0, 4
  %s20 = int_to_ptr.vmem [resolvable:$true] %s19
  %22 = dma.vmem_to_smem %s20, 16, [#allocation6], [#allocation5]
  %23 = dma.done [#allocation5], 16
  %24 = sfence
  $region1: #{tpu_custom_call.1} parent=0
    #allocation7 [shape = 'u8[8192]{0}', space=vmem, size = 0x2000, scoped, tag = 'output window, operand 0, single buffered']
    #allocation8 [shape = 's32[2]{0}', space=sflag, size = 0x8, scoped, tag = 'scoped memory for tpu_custom_call.1']
    %25 = vsyncpa [#allocation8], 0
    loop: start=0, step=1, limit=4
    $region2: #{tpu_custom_call.1} parent=1 // loop_pre_header
      _
    $region3: #{tpu_custom_call.1} parent=1 // loop_header
      %s27 = sphi 0, %s31
      %p28 = scmp.ge.s32.totalorder %s27, 4
      %s35 = sphi 0, %s35
      %s37 = sphi 0, %s35
      %s38 = sphi 0, %s37
      %s52 = sphi 0, %s38
      %s56 = sphi 0, %s56
      %s58 = sphi 0, %s56
      %s59 = sphi 0, %s58
      %s73 = sphi 0, %s59
      %s77 = sphi 0, %s77
      %s79 = sphi 0, %s77
      %s80 = sphi 0, %s79
      %s94 = sphi 0, %s80
      %s98 = sphi 0, %s98
      %s100 = sphi 0, %s98
      %s101 = sphi 0, %s100
      %s115 = sphi 0, %s101
      %s119 = sphi 0, %s119
      %s121 = sphi 0, %s119
      %s122 = sphi 0, %s121
      %s136 = sphi 0, %s122
      %s140 = sphi 0, %s140
      %s142 = sphi 0, %s140
      %s143 = sphi 0, %s142
      %s157 = sphi 0, %s143
      %s165 = sphi 0, %s167
      %s168 = sphi 0, %s165
      %s169 = sphi 0, %s168
      %s185 = sphi 0, %s169
      %s193 = sphi 0, %s195
      %s196 = sphi 0, %s193
      %s197 = sphi 0, %s196
      %s213 = sphi 0, %s197
      %s221 = sphi 0, %s223
      %s224 = sphi 0, %s221
      %s225 = sphi 0, %s224
      %s241 = sphi 0, %s225
      %s249 = sphi 0, %s251
      %s252 = sphi 0, %s249
      %s253 = sphi 0, %s252
      %s269 = sphi 0, %s253
      %s277 = sphi 0, %s279
      %s280 = sphi 0, %s277
      %s281 = sphi 0, %s280
      %s297 = sphi 0, %s281
      %s303 = sphi 0, %s305
      %s306 = sphi 0, %s303
      %s307 = sphi 0, %s306
      %s323 = sphi 0, %s307
      %s329 = sphi 0, %s331
      %s332 = sphi 0, %s329
      %s333 = sphi 0, %s332
      %s349 = sphi 0, %s333
      %s353 = sphi 0, %s353
      %s355 = sphi 0, %s353
      %s356 = sphi 0, %s355
      %s370 = sphi 0, %s356
    $region4: #{tpu_custom_call.1} parent=1 // loop_header_branch
      %30 = sbr.rel (%p28) target = $region8
    $region5: #{tpu_custom_call.1} parent=1 // loop_body
      %s32 = ssub.s32 %s27, 1
      %s33 = ssub.s32 %s27, 2
      %s34 = sadd.s32 %s27, 1
      %s36 = sadd.s32 %s35, 1
      %p39 = scmp.eq.s32.totalorder %s27, 1
      %p40 = scmp.ne.s32.totalorder %s35, %s37
      %p41 = scmp.eq.s32.totalorder %s27, 0
      %p42 = por %p40, %p41
      %p43 = scmp.ne.s32.totalorder %s35, %s37
      %p44 = scmp.eq.s32.totalorder %s32, 1
      %p45 = por %p43, %p44
      %p46 = scmp.ne.s32.totalorder %s37, %s38
      %p47 = scmp.eq.s32.totalorder %s32, 0
      %p48 = por %p46, %p47
      %p49 = scmp.ne.s32.totalorder %s37, %s38
      %p50 = scmp.eq.s32.totalorder %s33, 1
      %p51 = por %p49, %p50
      %p53 = scmp.ne.s32.totalorder %s38, %s52
      %p54 = scmp.eq.s32.totalorder %s33, 0
      %p55 = por %p53, %p54
      %s57 = sadd.s32 %s56, 1
      %p60 = scmp.eq.s32.totalorder %s27, 1
      %p61 = scmp.ne.s32.totalorder %s56, %s58
      %p62 = scmp.eq.s32.totalorder %s27, 0
      %p63 = por %p61, %p62
      %p64 = scmp.ne.s32.totalorder %s56, %s58
      %p65 = scmp.eq.s32.totalorder %s32, 1
      %p66 = por %p64, %p65
      %p67 = scmp.ne.s32.totalorder %s58, %s59
      %p68 = scmp.eq.s32.totalorder %s32, 0
      %p69 = por %p67, %p68
      %p70 = scmp.ne.s32.totalorder %s58, %s59
      %p71 = scmp.eq.s32.totalorder %s33, 1
      %p72 = por %p70, %p71
      %p74 = scmp.ne.s32.totalorder %s59, %s73
      %p75 = scmp.eq.s32.totalorder %s33, 0
      %p76 = por %p74, %p75
      %s78 = sadd.s32 %s77, 1
      %p81 = scmp.eq.s32.totalorder %s27, 1
      %p82 = scmp.ne.s32.totalorder %s77, %s79
      %p83 = scmp.eq.s32.totalorder %s27, 0
      %p84 = por %p82, %p83
      %p85 = scmp.ne.s32.totalorder %s77, %s79
      %p86 = scmp.eq.s32.totalorder %s32, 1
      %p87 = por %p85, %p86
      %p88 = scmp.ne.s32.totalorder %s79, %s80
      %p89 = scmp.eq.s32.totalorder %s32, 0
      %p90 = por %p88, %p89
      %p91 = scmp.ne.s32.totalorder %s79, %s80
      %p92 = scmp.eq.s32.totalorder %s33, 1
      %p93 = por %p91, %p92
      %p95 = scmp.ne.s32.totalorder %s80, %s94
      %p96 = scmp.eq.s32.totalorder %s33, 0
      %p97 = por %p95, %p96
      %s99 = sadd.s32 %s98, 1
      %p102 = scmp.eq.s32.totalorder %s27, 1
      %p103 = scmp.ne.s32.totalorder %s98, %s100
      %p104 = scmp.eq.s32.totalorder %s27, 0
      %p105 = por %p103, %p104
      %p106 = scmp.ne.s32.totalorder %s98, %s100
      %p107 = scmp.eq.s32.totalorder %s32, 1
      %p108 = por %p106, %p107
      %p109 = scmp.ne.s32.totalorder %s100, %s101
      %p110 = scmp.eq.s32.totalorder %s32, 0
      %p111 = por %p109, %p110
      %p112 = scmp.ne.s32.totalorder %s100, %s101
      %p113 = scmp.eq.s32.totalorder %s33, 1
      %p114 = por %p112, %p113
      %p116 = scmp.ne.s32.totalorder %s101, %s115
      %p117 = scmp.eq.s32.totalorder %s33, 0
      %p118 = por %p116, %p117
      %s120 = sadd.s32 %s119, 1
      %p123 = scmp.eq.s32.totalorder %s27, 1
      %p124 = scmp.ne.s32.totalorder %s119, %s121
      %p125 = scmp.eq.s32.totalorder %s27, 0
      %p126 = por %p124, %p125
      %p127 = scmp.ne.s32.totalorder %s119, %s121
      %p128 = scmp.eq.s32.totalorder %s32, 1
      %p129 = por %p127, %p128
      %p130 = scmp.ne.s32.totalorder %s121, %s122
      %p131 = scmp.eq.s32.totalorder %s32, 0
      %p132 = por %p130, %p131
      %p133 = scmp.ne.s32.totalorder %s121, %s122
      %p134 = scmp.eq.s32.totalorder %s33, 1
      %p135 = por %p133, %p134
      %p137 = scmp.ne.s32.totalorder %s122, %s136
      %p138 = scmp.eq.s32.totalorder %s33, 0
      %p139 = por %p137, %p138
      %s141 = sadd.s32 %s140, 1
      %p144 = scmp.eq.s32.totalorder %s27, 1
      %p145 = scmp.ne.s32.totalorder %s140, %s142
      %p146 = scmp.eq.s32.totalorder %s27, 0
      %p147 = por %p145, %p146
      %p148 = scmp.ne.s32.totalorder %s140, %s142
      %p149 = scmp.eq.s32.totalorder %s32, 1
      %p150 = por %p148, %p149
      %p151 = scmp.ne.s32.totalorder %s142, %s143
      %p152 = scmp.eq.s32.totalorder %s32, 0
      %p153 = por %p151, %p152
      %p154 = scmp.ne.s32.totalorder %s142, %s143
      %p155 = scmp.eq.s32.totalorder %s33, 1
      %p156 = por %p154, %p155
      %p158 = scmp.ne.s32.totalorder %s143, %s157
      %p159 = scmp.eq.s32.totalorder %s33, 0
      %p160 = por %p158, %p159
      %s161 = sld [smem:[#allocation6 + %s27]]
      %s162 = sld [smem:[#allocation6 + %s34]]
      %s163 = ssub.s32 %s161, %s162
      %p164 = scmp.eq.s32.totalorder %s163, 0
      %s166 = sadd.s32 %s165, 1
      %s167 = scalar_select %p164, %s165, %s166
      %p170 = pneg %p164
      %p171 = scmp.eq.s32.totalorder %s27, 1
      %p172 = por %p170, %p171
      %p173 = scmp.ne.s32.totalorder %s165, %s168
      %p174 = scmp.eq.s32.totalorder %s27, 0
      %p175 = por %p173, %p174
      %p176 = scmp.ne.s32.totalorder %s165, %s168
      %p177 = scmp.eq.s32.totalorder %s32, 1
      %p178 = por %p176, %p177
      %p179 = scmp.ne.s32.totalorder %s168, %s169
      %p180 = scmp.eq.s32.totalorder %s32, 0
      %p181 = por %p179, %p180
      %p182 = scmp.ne.s32.totalorder %s168, %s169
      %p183 = scmp.eq.s32.totalorder %s33, 1
      %p184 = por %p182, %p183
      %p186 = scmp.ne.s32.totalorder %s169, %s185
      %p187 = scmp.eq.s32.totalorder %s33, 0
      %p188 = por %p186, %p187
      %s189 = sld [smem:[#allocation6 + %s27]]
      %s190 = sld [smem:[#allocation6 + %s34]]
      %s191 = ssub.s32 %s189, %s190
      %p192 = scmp.eq.s32.totalorder %s191, 0
      %s194 = sadd.s32 %s193, 1
      %s195 = scalar_select %p192, %s193, %s194
      %p198 = pneg %p192
      %p199 = scmp.eq.s32.totalorder %s27, 1
      %p200 = por %p198, %p199
      %p201 = scmp.ne.s32.totalorder %s193, %s196
      %p202 = scmp.eq.s32.totalorder %s27, 0
      %p203 = por %p201, %p202
      %p204 = scmp.ne.s32.totalorder %s193, %s196
      %p205 = scmp.eq.s32.totalorder %s32, 1
      %p206 = por %p204, %p205
      %p207 = scmp.ne.s32.totalorder %s196, %s197
      %p208 = scmp.eq.s32.totalorder %s32, 0
      %p209 = por %p207, %p208
      %p210 = scmp.ne.s32.totalorder %s196, %s197
      %p211 = scmp.eq.s32.totalorder %s33, 1
      %p212 = por %p210, %p211
      %p214 = scmp.ne.s32.totalorder %s197, %s213
      %p215 = scmp.eq.s32.totalorder %s33, 0
      %p216 = por %p214, %p215
      %s217 = sld [smem:[#allocation6 + %s27]]
      %s218 = sld [smem:[#allocation6 + %s34]]
      %s219 = ssub.s32 %s217, %s218
      %p220 = scmp.eq.s32.totalorder %s219, 0
      %s222 = sadd.s32 %s221, 1
      %s223 = scalar_select %p220, %s221, %s222
      %p226 = pneg %p220
      %p227 = scmp.eq.s32.totalorder %s27, 1
      %p228 = por %p226, %p227
      %p229 = scmp.ne.s32.totalorder %s221, %s224
      %p230 = scmp.eq.s32.totalorder %s27, 0
      %p231 = por %p229, %p230
      %p232 = scmp.ne.s32.totalorder %s221, %s224
      %p233 = scmp.eq.s32.totalorder %s32, 1
      %p234 = por %p232, %p233
      %p235 = scmp.ne.s32.totalorder %s224, %s225
      %p236 = scmp.eq.s32.totalorder %s32, 0
      %p237 = por %p235, %p236
      %p238 = scmp.ne.s32.totalorder %s224, %s225
      %p239 = scmp.eq.s32.totalorder %s33, 1
      %p240 = por %p238, %p239
      %p242 = scmp.ne.s32.totalorder %s225, %s241
      %p243 = scmp.eq.s32.totalorder %s33, 0
      %p244 = por %p242, %p243
      %s245 = sld [smem:[#allocation6 + %s27]]
      %s246 = sld [smem:[#allocation6 + %s34]]
      %s247 = ssub.s32 %s245, %s246
      %p248 = scmp.eq.s32.totalorder %s247, 0
      %s250 = sadd.s32 %s249, 1
      %s251 = scalar_select %p248, %s249, %s250
      %p254 = pneg %p248
      %p255 = scmp.eq.s32.totalorder %s27, 1
      %p256 = por %p254, %p255
      %p257 = scmp.ne.s32.totalorder %s249, %s252
      %p258 = scmp.eq.s32.totalorder %s27, 0
      %p259 = por %p257, %p258
      %p260 = scmp.ne.s32.totalorder %s249, %s252
      %p261 = scmp.eq.s32.totalorder %s32, 1
      %p262 = por %p260, %p261
      %p263 = scmp.ne.s32.totalorder %s252, %s253
      %p264 = scmp.eq.s32.totalorder %s32, 0
      %p265 = por %p263, %p264
      %p266 = scmp.ne.s32.totalorder %s252, %s253
      %p267 = scmp.eq.s32.totalorder %s33, 1
      %p268 = por %p266, %p267
      %p270 = scmp.ne.s32.totalorder %s253, %s269
      %p271 = scmp.eq.s32.totalorder %s33, 0
      %p272 = por %p270, %p271
      %s273 = sld [smem:[#allocation6 + %s27]]
      %s274 = sld [smem:[#allocation6 + %s34]]
      %s275 = ssub.s32 %s273, %s274
      %p276 = scmp.eq.s32.totalorder %s275, 0
      %s278 = sadd.s32 %s277, 1
      %s279 = scalar_select %p276, %s277, %s278
      %p282 = pneg %p276
      %p283 = scmp.eq.s32.totalorder %s27, 1
      %p284 = por %p282, %p283
      %p285 = scmp.ne.s32.totalorder %s277, %s280
      %p286 = scmp.eq.s32.totalorder %s27, 0
      %p287 = por %p285, %p286
      %p288 = scmp.ne.s32.totalorder %s277, %s280
      %p289 = scmp.eq.s32.totalorder %s32, 1
      %p290 = por %p288, %p289
      %p291 = scmp.ne.s32.totalorder %s280, %s281
      %p292 = scmp.eq.s32.totalorder %s32, 0
      %p293 = por %p291, %p292
      %p294 = scmp.ne.s32.totalorder %s280, %s281
      %p295 = scmp.eq.s32.totalorder %s33, 1
      %p296 = por %p294, %p295
      %p298 = scmp.ne.s32.totalorder %s281, %s297
      %p299 = scmp.eq.s32.totalorder %s33, 0
      %p300 = por %p298, %p299
      %s301 = ssub.s32 %s27, %s34
      %p302 = scmp.eq.s32.totalorder %s301, 0
      %s304 = sadd.s32 %s303, 1
      %s305 = scalar_select %p302, %s303, %s304
      %p308 = pneg %p302
      %p309 = scmp.eq.s32.totalorder %s27, 1
      %p310 = por %p308, %p309
      %p311 = scmp.ne.s32.totalorder %s303, %s306
      %p312 = scmp.eq.s32.totalorder %s27, 0
      %p313 = por %p311, %p312
      %p314 = scmp.ne.s32.totalorder %s303, %s306
      %p315 = scmp.eq.s32.totalorder %s32, 1
      %p316 = por %p314, %p315
      %p317 = scmp.ne.s32.totalorder %s306, %s307
      %p318 = scmp.eq.s32.totalorder %s32, 0
      %p319 = por %p317, %p318
      %p320 = scmp.ne.s32.totalorder %s306, %s307
      %p321 = scmp.eq.s32.totalorder %s33, 1
      %p322 = por %p320, %p321
      %p324 = scmp.ne.s32.totalorder %s307, %s323
      %p325 = scmp.eq.s32.totalorder %s33, 0
      %p326 = por %p324, %p325
      %s327 = ssub.s32 %s27, %s34
      %p328 = scmp.eq.s32.totalorder %s327, 0
      %s330 = sadd.s32 %s329, 1
      %s331 = scalar_select %p328, %s329, %s330
      %p334 = pneg %p328
      %p335 = scmp.eq.s32.totalorder %s27, 1
      %p336 = por %p334, %p335
      %p337 = scmp.ne.s32.totalorder %s329, %s332
      %p338 = scmp.eq.s32.totalorder %s27, 0
      %p339 = por %p337, %p338
      %p340 = scmp.ne.s32.totalorder %s329, %s332
      %p341 = scmp.eq.s32.totalorder %s32, 1
      %p342 = por %p340, %p341
      %p343 = scmp.ne.s32.totalorder %s332, %s333
      %p344 = scmp.eq.s32.totalorder %s32, 0
      %p345 = por %p343, %p344
      %p346 = scmp.ne.s32.totalorder %s332, %s333
      %p347 = scmp.eq.s32.totalorder %s33, 1
      %p348 = por %p346, %p347
      %p350 = scmp.ne.s32.totalorder %s333, %s349
      %p351 = scmp.eq.s32.totalorder %s33, 0
      %p352 = por %p350, %p351
      %s354 = sadd.s32 %s353, 1
      %p357 = scmp.eq.s32.totalorder %s27, 1
      %p358 = scmp.ne.s32.totalorder %s353, %s355
      %p359 = scmp.eq.s32.totalorder %s27, 0
      %p360 = por %p358, %p359
      %p361 = scmp.ne.s32.totalorder %s353, %s355
      %p362 = scmp.eq.s32.totalorder %s32, 1
      %p363 = por %p361, %p362
      %p364 = scmp.ne.s32.totalorder %s355, %s356
      %p365 = scmp.eq.s32.totalorder %s32, 0
      %p366 = por %p364, %p365
      %p367 = scmp.ne.s32.totalorder %s355, %s356
      %p368 = scmp.eq.s32.totalorder %s33, 1
      %p369 = por %p367, %p368
      %p371 = scmp.ne.s32.totalorder %s356, %s370
      %p372 = scmp.eq.s32.totalorder %s33, 0
      %p373 = por %p371, %p372
      %p374 = scmp.le.s32.totalorder 1, %s27
      %p375 = scmp.lt.s32.totalorder %s27, 3
      %p376 = pnand %p374, %p375
      %p377 = pneg %p376
      // Predicated region
      $region9: #{tpu_custom_call.1} parent=5 // pred_check
        _
      $region10: #{tpu_custom_call.1} parent=5 // pred_check_branch
        %379 = sbr.rel (%p376) target = $region12
      $region11: #{tpu_custom_call.1} parent=5 // pred_region
        %s380 = ssub.s32 %s27, 1
        // Predicated region
        $region13: #{tpu_custom_call.1} parent=11 // pred_check
          %p381 = pneg %p48
        $region14: #{tpu_custom_call.1} parent=11 // pred_check_branch
          %383 = sbr.rel (%p381) target = $region16
        $region15: #{tpu_custom_call.1} parent=11 // pred_region
          _
        $region16: #{tpu_custom_call.1} parent=11 // pred_fallthru
          _
        // Predicated region
        $region17: #{tpu_custom_call.1} parent=11 // pred_check
          %p384 = pneg %p69
        $region18: #{tpu_custom_call.1} parent=11 // pred_check_branch
          %386 = sbr.rel (%p384) target = $region20
        $region19: #{tpu_custom_call.1} parent=11 // pred_region
          _
        $region20: #{tpu_custom_call.1} parent=11 // pred_fallthru
          _
        // Predicated region
        $region21: #{tpu_custom_call.1} parent=11 // pred_check
          %p387 = pneg %p90
        $region22: #{tpu_custom_call.1} parent=11 // pred_check_branch
          %389 = sbr.rel (%p387) target = $region24
        $region23: #{tpu_custom_call.1} parent=11 // pred_region
          _
        $region24: #{tpu_custom_call.1} parent=11 // pred_fallthru
          _
        // Predicated region
        $region25: #{tpu_custom_call.1} parent=11 // pred_check
          %p390 = pneg %p111
        $region26: #{tpu_custom_call.1} parent=11 // pred_check_branch
          %392 = sbr.rel (%p390) target = $region28
        $region27: #{tpu_custom_call.1} parent=11 // pred_region
          _
        $region28: #{tpu_custom_call.1} parent=11 // pred_fallthru
          _
        // Predicated region
        $region29: #{tpu_custom_call.1} parent=11 // pred_check
          %p393 = pneg %p132
        $region30: #{tpu_custom_call.1} parent=11 // pred_check_branch
          %395 = sbr.rel (%p393) target = $region32
        $region31: #{tpu_custom_call.1} parent=11 // pred_region
          _
        $region32: #{tpu_custom_call.1} parent=11 // pred_fallthru
          _
        // Predicated region
        $region33: #{tpu_custom_call.1} parent=11 // pred_check
          %p396 = pneg %p153
        $region34: #{tpu_custom_call.1} parent=11 // pred_check_branch
          %398 = sbr.rel (%p396) target = $region36
        $region35: #{tpu_custom_call.1} parent=11 // pred_region
          _
        $region36: #{tpu_custom_call.1} parent=11 // pred_fallthru
          _
      $region12: #{tpu_custom_call.1} parent=5 // pred_fallthru
        _
      %p399 = scmp.lt.s32.totalorder %s27, 2
      // Predicated region
      $region37: #{tpu_custom_call.1} parent=5 // pred_check
        %p400 = pneg %p399
      $region38: #{tpu_custom_call.1} parent=5 // pred_check_branch
        %402 = sbr.rel (%p400) target = $region40
      $region39: #{tpu_custom_call.1} parent=5 // pred_region
        // Predicated region
        $region41: #{tpu_custom_call.1} parent=39 // pred_check
          %p403 = pneg %p175
        $region42: #{tpu_custom_call.1} parent=39 // pred_check_branch
          %405 = sbr.rel (%p403) target = $region44
        $region43: #{tpu_custom_call.1} parent=39 // pred_region
          %s406 = sld [smem:[#allocation6 + %s27]]
          %p407 = scmp.lt.s32.totalorder %s406, 1
          %s408 = scalar_select %p407, %s406, 1
          %s409 = smul.addr %s408, 6
          %s410 = smul.addr %s409, 8
          %s411 = scalar_lea.vmem %s7, %s410
          %s412 = sld [smem:[#allocation6 + %s27]]
        $region44: #{tpu_custom_call.1} parent=39 // pred_fallthru
          _
        // Predicated region
        $region45: #{tpu_custom_call.1} parent=39 // pred_check
          %p413 = pneg %p203
        $region46: #{tpu_custom_call.1} parent=39 // pred_check_branch
          %415 = sbr.rel (%p413) target = $region48
        $region47: #{tpu_custom_call.1} parent=39 // pred_region
          %s416 = sld [smem:[#allocation6 + %s27]]
          %p417 = scmp.lt.s32.totalorder %s416, 1
          %s418 = scalar_select %p417, %s416, 1
          %s419 = smul.addr %s418, 6
          %s420 = smul.addr %s419, 8
          %s421 = scalar_lea.vmem %s8, %s420
          %s422 = sld [smem:[#allocation6 + %s27]]
        $region48: #{tpu_custom_call.1} parent=39 // pred_fallthru
          _
        // Predicated region
        $region49: #{tpu_custom_call.1} parent=39 // pred_check
          %p423 = pneg %p231
        $region50: #{tpu_custom_call.1} parent=39 // pred_check_branch
          %425 = sbr.rel (%p423) target = $region52
        $region51: #{tpu_custom_call.1} parent=39 // pred_region
          %s426 = sld [smem:[#allocation6 + %s27]]
          %p427 = scmp.lt.s32.totalorder %s426, 1
          %s428 = scalar_select %p427, %s426, 1
          %s429 = smul.addr %s428, 2
          %s430 = smul.addr %s429, 8
          %s431 = scalar_lea.vmem %s9, %s430
          %s432 = sld [smem:[#allocation6 + %s27]]
        $region52: #{tpu_custom_call.1} parent=39 // pred_fallthru
          _
        // Predicated region
        $region53: #{tpu_custom_call.1} parent=39 // pred_check
          %p433 = pneg %p259
        $region54: #{tpu_custom_call.1} parent=39 // pred_check_branch
          %435 = sbr.rel (%p433) target = $region56
        $region55: #{tpu_custom_call.1} parent=39 // pred_region
          %s436 = sld [smem:[#allocation6 + %s27]]
          %p437 = scmp.lt.s32.totalorder %s436, 1
          %s438 = scalar_select %p437, %s436, 1
          %s439 = smul.addr %s438, 2
          %s440 = smul.addr %s439, 8
          %s441 = scalar_lea.vmem %s10, %s440
          %s442 = sld [smem:[#allocation6 + %s27]]
        $region56: #{tpu_custom_call.1} parent=39 // pred_fallthru
          _
        // Predicated region
        $region57: #{tpu_custom_call.1} parent=39 // pred_check
          %p443 = pneg %p287
        $region58: #{tpu_custom_call.1} parent=39 // pred_check_branch
          %445 = sbr.rel (%p443) target = $region60
        $region59: #{tpu_custom_call.1} parent=39 // pred_region
          %s446 = sld [smem:[#allocation6 + %s27]]
          %p447 = scmp.lt.s32.totalorder %s446, 1
          %s448 = scalar_select %p447, %s446, 1
          %s449 = smul.addr %s448, 6
          %s450 = smul.addr %s449, 8
          %s451 = scalar_lea.vmem %s11, %s450
          %s452 = sld [smem:[#allocation6 + %s27]]
        $region60: #{tpu_custom_call.1} parent=39 // pred_fallthru
          _
        // Predicated region
        $region61: #{tpu_custom_call.1} parent=39 // pred_check
          %p453 = pneg %p313
        $region62: #{tpu_custom_call.1} parent=39 // pred_check_branch
          %455 = sbr.rel (%p453) target = $region64
        $region63: #{tpu_custom_call.1} parent=39 // pred_region
          %p456 = scmp.lt.s32.totalorder %s27, 1
          %s457 = scalar_select %p456, %s27, 1
          %s458 = smul.addr %s457, 30
          %s459 = smul.addr %s458, 8
          %s460 = scalar_lea.vmem %s12, %s459
        $region64: #{tpu_custom_call.1} parent=39 // pred_fallthru
          _
        // Predicated region
        $region65: #{tpu_custom_call.1} parent=39 // pred_check
          %p461 = pneg %p339
        $region66: #{tpu_custom_call.1} parent=39 // pred_check_branch
          %463 = sbr.rel (%p461) target = $region68
        $region67: #{tpu_custom_call.1} parent=39 // pred_region
          %p464 = scmp.lt.s32.totalorder %s27, 1
          %s465 = scalar_select %p464, %s27, 1
          %s466 = smul.addr %s465, 2
          %s467 = smul.addr %s466, 8
          %s468 = scalar_lea.vmem %s13, %s467
        $region68: #{tpu_custom_call.1} parent=39 // pred_fallthru
          _
      $region40: #{tpu_custom_call.1} parent=5 // pred_fallthru
        _
      %p469 = scmp.le.s32.totalorder 1, %s27
      %p470 = scmp.lt.s32.totalorder %s27, 3
      %p471 = pnand %p469, %p470
      %p472 = pneg %p471
      // Predicated region
      $region69: #{tpu_custom_call.1} parent=5 // pred_check
        _
      $region70: #{tpu_custom_call.1} parent=5 // pred_check_branch
        %474 = sbr.rel (%p471) target = $region72
      $region71: #{tpu_custom_call.1} parent=5 // pred_region
        %s475 = ssub.s32 %s27, 1
        %p476 = pneg %p48
        %p477 = pneg %p45
        %p478 = pneg %p69
        %p479 = pneg %p66
        %p480 = pneg %p90
        %p481 = pneg %p87
        %p482 = pneg %p111
        %p483 = pneg %p108
        %p484 = pneg %p132
        %p485 = pneg %p129
        %p486 = pneg %p153
        %p487 = pneg %p150
        %s488 = sld [smem:[#allocation6 + %s32]]
        %p489 = scmp.lt.s32.totalorder %s488, 1
        %s490 = scalar_select %p489, %s488, 1
        %s491 = smul.addr %s490, 6
        %s492 = smul.addr %s491, 8
        %s493 = scalar_lea.vmem %s7, %s492
        %p494 = pneg %p181
        %p495 = pneg %p178
        %s496 = sld [smem:[#allocation6 + %s32]]
        %p497 = scmp.lt.s32.totalorder %s496, 1
        %s498 = scalar_select %p497, %s496, 1
        %s499 = smul.addr %s498, 6
        %s500 = smul.addr %s499, 8
        %s501 = scalar_lea.vmem %s8, %s500
        %p502 = pneg %p209
        %p503 = pneg %p206
        %s504 = sld [smem:[#allocation6 + %s32]]
        %p505 = scmp.lt.s32.totalorder %s504, 1
        %s506 = scalar_select %p505, %s504, 1
        %s507 = smul.addr %s506, 2
        %s508 = smul.addr %s507, 8
        %s509 = scalar_lea.vmem %s9, %s508
        %p510 = pneg %p237
        %p511 = pneg %p234
        %s512 = sld [smem:[#allocation6 + %s32]]
        %p513 = scmp.lt.s32.totalorder %s512, 1
        %s514 = scalar_select %p513, %s512, 1
        %s515 = smul.addr %s514, 2
        %s516 = smul.addr %s515, 8
        %s517 = scalar_lea.vmem %s10, %s516
        %p518 = pneg %p265
        %p519 = pneg %p262
        %s520 = sld [smem:[#allocation6 + %s32]]
        %p521 = scmp.lt.s32.totalorder %s520, 1
        %s522 = scalar_select %p521, %s520, 1
        %s523 = smul.addr %s522, 6
        %s524 = smul.addr %s523, 8
        %s525 = scalar_lea.vmem %s11, %s524
        %p526 = pneg %p293
        %p527 = pneg %p290
        %p528 = scmp.lt.s32.totalorder %s32, 1
        %s529 = scalar_select %p528, %s32, 1
        %s530 = smul.addr %s529, 30
        %s531 = smul.addr %s530, 8
        %s532 = scalar_lea.vmem %s12, %s531
        %p533 = pneg %p319
        %p534 = pneg %p316
        %p535 = scmp.lt.s32.totalorder %s32, 1
        %s536 = scalar_select %p535, %s32, 1
        %s537 = smul.addr %s536, 2
        %s538 = smul.addr %s537, 8
        %s539 = scalar_lea.vmem %s13, %s538
        %p540 = pneg %p345
        %p541 = pneg %p342
        %p542 = pneg %p366
        %p543 = pneg %p363
        %s544 = sld [smem:[#allocation6 + %s32]]
        %p545 = scmp.lt.s32.totalorder %s544, 1
        %s546 = scalar_select %p545, %s544, 1
        %s547 = smul.addr %s546, 6
        %s548 = smul.addr %s547, 8
        %s549 = scalar_lea.vmem %s7, %s548
        %s550 = sld [smem:[#allocation6 + %s32]]
        %s551 = sld [smem:[#allocation6 + %s32]]
        %p552 = scmp.lt.s32.totalorder %s551, 1
        %s553 = scalar_select %p552, %s551, 1
        %s554 = smul.addr %s553, 6
        %s555 = smul.addr %s554, 8
        %s556 = scalar_lea.vmem %s8, %s555
        %s557 = sld [smem:[#allocation6 + %s32]]
        %s558 = sld [smem:[#allocation6 + %s32]]
        %p559 = scmp.lt.s32.totalorder %s558, 1
        %s560 = scalar_select %p559, %s558, 1
        %s561 = smul.addr %s560, 2
        %s562 = smul.addr %s561, 8
        %s563 = scalar_lea.vmem %s9, %s562
        %s564 = sld [smem:[#allocation6 + %s32]]
        %s565 = sld [smem:[#allocation6 + %s32]]
        %p566 = scmp.lt.s32.totalorder %s565, 1
        %s567 = scalar_select %p566, %s565, 1
        %s568 = smul.addr %s567, 2
        %s569 = smul.addr %s568, 8
        %s570 = scalar_lea.vmem %s10, %s569
        %s571 = sld [smem:[#allocation6 + %s32]]
        %s572 = sld [smem:[#allocation6 + %s32]]
        %p573 = scmp.lt.s32.totalorder %s572, 1
        %s574 = scalar_select %p573, %s572, 1
        %s575 = smul.addr %s574, 6
        %s576 = smul.addr %s575, 8
        %s577 = scalar_lea.vmem %s11, %s576
        %s578 = sld [smem:[#allocation6 + %s32]]
        %p579 = scmp.lt.s32.totalorder %s32, 1
        %s580 = scalar_select %p579, %s32, 1
        %s581 = smul.addr %s580, 30
        %s582 = smul.addr %s581, 8
        %s583 = scalar_lea.vmem %s12, %s582
        %p584 = scmp.lt.s32.totalorder %s32, 1
        %s585 = scalar_select %p584, %s32, 1
        %s586 = smul.addr %s585, 2
        %s587 = smul.addr %s586, 8
        %s588 = scalar_lea.vmem %s13, %s587
        %p589 = scmp.eq.s32.totalorder %s32, 0
        // Predicated region
        $region73: #{tpu_custom_call.1} parent=71 // pred_check
          %p590 = pneg %p589
        $region74: #{tpu_custom_call.1} parent=71 // pred_check_branch
          %592 = sbr.rel (%p590) target = $region76
        $region75: #{tpu_custom_call.1} parent=71 // pred_region
          %v593 = vld [vmem:[%s1] sm:$0xff]
          %v594 = vld [vmem:[%s1 + $0x8] sm:$0xff]
          %v595 = vld [vmem:[%s2] sm:$0x1]
          %v596 = vld [vmem:[%s3] sm:$0x1]
          %vm597 = vcmask 523264
          %v598 = vsel %vm597, %v593, 0.0
          %599 = vadd.xlane.f32.xlu0 %v598
          %v600 = vpop.xlane.xlu0 %599
          %v601 = vsel %vm597, %v594, 0.0
          %602 = vadd.xlane.f32.xlu0 %v601
          %v603 = vpop.xlane.xlu0 %602
          %v604 = vrcp.pop 64.0
          %v605 = vmul.f32 %v600, %v604
          %v606 = vmul.f32 %v603, %v604
          %v607 = vsub.f32 %v593, %v605
          %v608 = vsub.f32 %v594, %v606
          %v609 = vmul.f32 %v607, %v607
          %v610 = vmul.f32 %v608, %v608
          %v611 = vsel %vm597, %v609, 0.0
          %612 = vadd.xlane.f32.xlu0 %v611
          %v613 = vpop.xlane.xlu0 %612
          %v614 = vsel %vm597, %v610, 0.0
          %615 = vadd.xlane.f32.xlu0 %v614
          %v616 = vpop.xlane.xlu0 %615
          %v617 = vmul.f32 %v613, %v604
          %v618 = vmul.f32 %v616, %v604
          %v619 = vadd.f32 %v617, 1e-05
          %v620 = vadd.f32 %v618, 1e-05
          %v621 = vrsqrt.pop %v619
          %v622 = vrsqrt.pop %v620
          %v623 = vmul.f32 %v607, %v621
          %v624 = vmul.f32 %v608, %v622
          %v626 = vlaneseq
          %v627 = vshrl.u32 %v626, 7
          %v628 = vsub.s32 0, %v627
          %v629 = vrot.slane %v595, %v628
          %v631 = vmul.f32 %v623, %v629
          %v632 = vmul.f32 %v624, %v629
          %v634 = vlaneseq
          %v635 = vshrl.u32 %v634, 7
          %v636 = vsub.s32 0, %v635
          %v637 = vrot.slane %v596, %v636
          %v639 = vadd.f32 %v631, %v637
          %v640 = vadd.f32 %v632, %v637
          %v641 = vld [vmem:[%s4] sm:$0xff]
          %v642 = vld [vmem:[%s4 + $0x8] sm:$0xff]
          %v643 = vld [vmem:[%s4 + $0x10] sm:$0xff]
          %v644 = vld [vmem:[%s4 + $0x18] sm:$0xff]
          %v645 = vld [vmem:[%s4 + $0x20] sm:$0xff]
          %v646 = vld [vmem:[%s4 + $0x28] sm:$0xff]
          %v647 = vld [vmem:[%s4 + $0x30] sm:$0xff]
          %v648 = vld [vmem:[%s4 + $0x38] sm:$0xff]
          %v649 = vld [vmem:[%s5] sm:$0x1]
          %v651 = vlaneseq
          %v652 = vshrl.u32 %v651, 7
          %v653 = vsub.s32 0, %v652
          %v654 = vrot.slane %v649, %v653
          %v657 = vsel %vm597, %v639, 0
          %v660 = vsel %vm597, %v640, 0
          %662 = vmatprep.subr.mxu0 0.0
          %663 = vmatpush1.msra.mxu0 %v641
          %664 = vmatprep.subr.mxu0 0.0
          %665 = vmatpush1.msra.mxu0 %v642
          %666 = vmatprep.subr.mxu0 0.0
          %667 = vmatpush1.msra.mxu0 %v643
          %668 = vmatprep.subr.mxu0 0.0
          %669 = vmatpush1.msra.mxu0 %v644
          %670 = vmatprep.subr.mxu0 0.0
          %671 = vmatpush1.msra.mxu0 %v645
          %672 = vmatprep.subr.mxu0 0.0
          %673 = vmatpush1.msra.mxu0 %v646
          %674 = vmatprep.subr.mxu0 0.0
          %675 = vmatpush1.msra.mxu0 %v647
          %676 = vmatprep.subr.mxu0 0.0
          %677 = vmatpush1.msra.mxu0 %v648
          %678 = vmatprep.subr.mxu0 0.0
          %679 = vmatpush1.msra.mxu0 0.0
          %680 = vmatprep.subr.mxu0 0.0
          %681 = vmatpush1.msra.mxu0 0.0
          %682 = vmatprep.subr.mxu0 0.0
          %683 = vmatpush1.msra.mxu0 0.0
          %684 = vmatprep.subr.mxu0 0.0
          %685 = vmatpush1.msra.mxu0 0.0
          %686 = vmatprep.subr.mxu0 0.0
          %687 = vmatpush1.msra.mxu0 0.0
          %688 = vmatprep.subr.mxu0 0.0
          %689 = vmatpush1.msra.mxu0 0.0
          %690 = vmatprep.subr.mxu0 0.0
          %691 = vmatpush1.msra.mxu0 0.0
          %692 = vmatprep.subr.mxu0 0.0
          %693 = vmatpush1.msra.mxu0 0.0
          %694 = vmatprep.subr.mxu0 0.0
          %695 = vmatpush1.msra.mxu0 0.0
          %696 = vmatprep.subr.mxu0 0.0
          %697 = vmatpush1.msra.mxu0 0.0
          %698 = vmatprep.subr.mxu0 0.0
          %699 = vmatpush1.msra.mxu0 0.0
          %700 = vmatprep.subr.mxu0 0.0
          %701 = vmatpush1.msra.mxu0 0.0
          %702 = vmatprep.subr.mxu0 0.0
          %703 = vmatpush1.msra.mxu0 0.0
          %704 = vmatprep.subr.mxu0 0.0
          %705 = vmatpush1.msra.mxu0 0.0
          %706 = vmatprep.subr.mxu0 0.0
          %707 = vmatpush1.msra.mxu0 0.0
          %708 = vmatprep.subr.mxu0 0.0
          %709 = vmatpush1.msra.mxu0 0.0
          %710 = vmatprep.subr.mxu0 0.0
          %711 = vmatpush1.msra.mxu0 0.0
          %712 = vmatprep.subr.mxu0 0.0
          %713 = vmatpush1.msra.mxu0 0.0
          %714 = vmatprep.subr.mxu0 0.0
          %715 = vmatpush1.msra.mxu0 0.0
          %716 = vmatprep.subr.mxu0 0.0
          %717 = vmatpush1.msra.mxu0 0.0
          %718 = vmatprep.subr.mxu0 0.0
          %719 = vmatpush1.msra.mxu0 0.0
          %720 = vmatprep.subr.mxu0 0.0
          %721 = vmatpush1.msra.mxu0 0.0
          %722 = vmatprep.subr.mxu0 0.0
          %723 = vmatpush1.msra.mxu0 0.0
          %724 = vmatprep.subr.mxu0 0.0
          %725 = vmatpush1.msra.mxu0 0.0
          %726 = vmatprep.mubr.f32.mxu0 0.0
          %727 = vmatmul.mubr.f32.gmra.mrb[0].mxu0 %v657
          %v728 = vpop.f32.mrb[0].mxu0
          %v729 = vadd.f32 %v654, %v728
          %v730 = vpop.f32.mrb[0].mxu0
          %731 = vmatprep.mubr.f32.mxu0 0.0
          %732 = vmatmul.mubr.f32.gmra.mrb[0].mxu0 %v660
          %v733 = vpop.f32.mrb[0].mxu0
          %v734 = vadd.f32 %v654, %v733
          %v735 = vpop.f32.mrb[0].mxu0
          %736 = vdwg.mxu0
          %vm737 = vcmask 261120
          %738 = vst.msk [vmem:[#allocation3] sm:$0xff] %vm737, %v729
          %739 = vst.msk [vmem:[#allocation3 + $0x8] sm:$0xff] %vm737, %v734
          %740 = vst.msk [vmem:[#allocation2] sm:$0xff] %vm737, %v729
          %741 = vst.msk [vmem:[#allocation2 + $0x8] sm:$0xff] %vm737, %v734
          %v742 = vld [vmem:[%s6] sm:$0xff]
          %v743 = vld [vmem:[%s6 + $0x8] sm:$0xff]
          %vm744 = vcmask 23552
          %745 = vst.msk [vmem:[#allocation4] sm:$0xff] %vm744, %v742
          %746 = vst.msk [vmem:[#allocation4 + $0x8] sm:$0xff] %vm744, %v743
        $region76: #{tpu_custom_call.1} parent=71 // pred_fallthru
          _
        %v747 = vld [vmem:[#allocation2] sm:$0xff]
        %v748 = vld [vmem:[#allocation2 + $0x8] sm:$0xff]
        %v749 = vld [vmem:[#allocation4] sm:$0xff]
        %v750 = vld [vmem:[#allocation4 + $0x8] sm:$0xff]
        %v751 = vld [vmem:[%s549] sm:$0xff]
        %v752 = vld [vmem:[%s549 + $0x8] sm:$0xff]
        %v753 = vld [vmem:[%s549 + $0x10] sm:$0xff]
        %v754 = vld [vmem:[%s549 + $0x18] sm:$0xff]
        %v755 = vld [vmem:[%s549 + $0x20] sm:$0xff]
        %v756 = vld [vmem:[%s549 + $0x28] sm:$0xff]
        %v757 = vld [vmem:[%s556] sm:$0xff]
        %v758 = vld [vmem:[%s556 + $0x8] sm:$0xff]
        %v759 = vld [vmem:[%s556 + $0x10] sm:$0xff]
        %v760 = vld [vmem:[%s556 + $0x18] sm:$0xff]
        %v761 = vld [vmem:[%s556 + $0x20] sm:$0xff]
        %v762 = vld [vmem:[%s556 + $0x28] sm:$0xff]
        %v763 = vld [vmem:[%s563] sm:$0xff]
        %v764 = vld [vmem:[%s563 + $0x8] sm:$0xff]
        %v765 = vld [vmem:[%s570] sm:$0xff]
        %v766 = vld [vmem:[%s570 + $0x8] sm:$0xff]
        %v767 = vld [vmem:[%s577] sm:$0xff]
        %v768 = vld [vmem:[%s577 + $0x8] sm:$0xff]
        %v769 = vld [vmem:[%s577 + $0x10] sm:$0xff]
        %v770 = vld [vmem:[%s577 + $0x18] sm:$0xff]
        %v771 = vld [vmem:[%s577 + $0x20] sm:$0xff]
        %v772 = vld [vmem:[%s577 + $0x28] sm:$0xff]
        %v773 = vld [vmem:[%s588] sm:$0xff]
        %v774 = vld [vmem:[%s588 + $0x8] sm:$0x3]
        %v775 = vld [vmem:[%s583] sm:$0xff]
        %v776 = vld [vmem:[%s583 + $0x8] sm:$0xff]
        %v777 = vld [vmem:[%s583 + $0x10] sm:$0xff]
        %v778 = vld [vmem:[%s583 + $0x18] sm:$0xff]
        %v779 = vld [vmem:[%s583 + $0x20] sm:$0xff]
        %v780 = vld [vmem:[%s583 + $0x28] sm:$0xff]
        %v781 = vld [vmem:[%s583 + $0x30] sm:$0xff]
        %v782 = vld [vmem:[%s583 + $0x38] sm:$0xff]
        %v783 = vld [vmem:[%s583 + $0x40] sm:$0xff]
        %v784 = vld [vmem:[%s583 + $0x48] sm:$0x1]
        %v785 = vld [vmem:[%s583 + $0x50] sm:$0xff]
        %v786 = vld [vmem:[%s583 + $0x58] sm:$0xff]
        %v787 = vld [vmem:[%s583 + $0x60] sm:$0xff]
        %v788 = vld [vmem:[%s583 + $0x68] sm:$0xff]
        %v789 = vld [vmem:[%s583 + $0x70] sm:$0xff]
        %v790 = vld [vmem:[%s583 + $0x78] sm:$0xff]
        %v791 = vld [vmem:[%s583 + $0x80] sm:$0xff]
        %v792 = vld [vmem:[%s583 + $0x88] sm:$0xff]
        %v793 = vld [vmem:[%s583 + $0x90] sm:$0xff]
        %v794 = vld [vmem:[%s583 + $0x98] sm:$0xff]
        %v795 = vld [vmem:[%s583 + $0xa0] sm:$0xff]
        %v796 = vld [vmem:[%s583 + $0xa8] sm:$0xff]
        %v797 = vld [vmem:[%s583 + $0xb0] sm:$0xff]
        %v798 = vld [vmem:[%s583 + $0xb8] sm:$0xff]
        %v799 = vld [vmem:[%s583 + $0xc0] sm:$0xff]
        %v800 = vld [vmem:[%s583 + $0xc8] sm:$0xff]
        %v801 = vld [vmem:[%s583 + $0xd0] sm:$0xff]
        %v802 = vld [vmem:[%s583 + $0xd8] sm:$0xff]
        %v803 = vld [vmem:[%s583 + $0xe0] sm:$0xff]
        %v804 = vld [vmem:[%s583 + $0xe8] sm:$0xff]
        %v805 = vsub.f32 %v751, %v757
        %v806 = vsub.f32 %v752, %v758
        %v807 = vsub.f32 %v753, %v759
        %v808 = vsub.f32 %v754, %v760
        %v809 = vsub.f32 %v755, %v761
        %v810 = vsub.f32 %v756, %v762
        %vm811 = vcmask 130048
        %v813 = vsel %vm811, %v805, 0
        %v816 = vsel %vm811, %v806, 0
        %v819 = vsel %vm811, %v807, 0
        %v822 = vsel %vm811, %v808, 0
        %v825 = vsel %vm811, %v809, 0
        %v828 = vsel %vm811, %v810, 0
        %830 = vmatprep.subr.mxu0 0.0
        %831 = vmatpush1.msra.mxu0 %v749
        %832 = vmatprep.subr.mxu0 0.0
        %833 = vmatpush1.msra.mxu0 %v750
        %834 = vmatprep.subr.mxu0 0.0
        %835 = vmatpush1.msra.mxu0 0.0
        %836 = vmatprep.subr.mxu0 0.0
        %837 = vmatpush1.msra.mxu0 0.0
        %838 = vmatprep.subr.mxu0 0.0
        %839 = vmatpush1.msra.mxu0 0.0
        %840 = vmatprep.subr.mxu0 0.0
        %841 = vmatpush1.msra.mxu0 0.0
        %842 = vmatprep.subr.mxu0 0.0
        %843 = vmatpush1.msra.mxu0 0.0
        %844 = vmatprep.subr.mxu0 0.0
        %845 = vmatpush1.msra.mxu0 0.0
        %846 = vmatprep.subr.mxu0 0.0
        %847 = vmatpush1.msra.mxu0 0.0
        %848 = vmatprep.subr.mxu0 0.0
        %849 = vmatpush1.msra.mxu0 0.0
        %850 = vmatprep.subr.mxu0 0.0
        %851 = vmatpush1.msra.mxu0 0.0
        %852 = vmatprep.subr.mxu0 0.0
        %853 = vmatpush1.msra.mxu0 0.0
        %854 = vmatprep.subr.mxu0 0.0
        %855 = vmatpush1.msra.mxu0 0.0
        %856 = vmatprep.subr.mxu0 0.0
        %857 = vmatpush1.msra.mxu0 0.0
        %858 = vmatprep.subr.mxu0 0.0
        %859 = vmatpush1.msra.mxu0 0.0
        %860 = vmatprep.subr.mxu0 0.0
        %861 = vmatpush1.msra.mxu0 0.0
        %862 = vmatprep.subr.mxu0 0.0
        %863 = vmatpush1.msra.mxu0 0.0
        %864 = vmatprep.subr.mxu0 0.0
        %865 = vmatpush1.msra.mxu0 0.0
        %866 = vmatprep.subr.mxu0 0.0
        %867 = vmatpush1.msra.mxu0 0.0
        %868 = vmatprep.subr.mxu0 0.0
        %869 = vmatpush1.msra.mxu0 0.0
        %870 = vmatprep.subr.mxu0 0.0
        %871 = vmatpush1.msra.mxu0 0.0
        %872 = vmatprep.subr.mxu0 0.0
        %873 = vmatpush1.msra.mxu0 0.0
        %874 = vmatprep.subr.mxu0 0.0
        %875 = vmatpush1.msra.mxu0 0.0
        %876 = vmatprep.subr.mxu0 0.0
        %877 = vmatpush1.msra.mxu0 0.0
        %878 = vmatprep.subr.mxu0 0.0
        %879 = vmatpush1.msra.mxu0 0.0
        %880 = vmatprep.subr.mxu0 0.0
        %881 = vmatpush1.msra.mxu0 0.0
        %882 = vmatprep.subr.mxu0 0.0
        %883 = vmatpush1.msra.mxu0 0.0
        %884 = vmatprep.subr.mxu0 0.0
        %885 = vmatpush1.msra.mxu0 0.0
        %886 = vmatprep.subr.mxu0 0.0
        %887 = vmatpush1.msra.mxu0 0.0
        %888 = vmatprep.subr.mxu0 0.0
        %889 = vmatpush1.msra.mxu0 0.0
        %890 = vmatprep.subr.mxu0 0.0
        %891 = vmatpush1.msra.mxu0 0.0
        %892 = vmatprep.subr.mxu0 0.0
        %893 = vmatpush1.msra.mxu0 0.0
        %894 = vmatprep.mubr.f32.mxu0 0.0
        %895 = vmatmul.mubr.f32.gmra.mrb[0].mxu0 %v813
        %v896 = vpop.f32.mrb[0].mxu0
        %v897 = vadd.f32 0.0, %v896
        %v898 = vpop.f32.mrb[0].mxu0
        %899 = vmatprep.mubr.f32.mxu0 0.0
        %900 = vmatmul.mubr.f32.gmra.mrb[0].mxu0 %v816
        %v901 = vpop.f32.mrb[0].mxu0
        %v902 = vadd.f32 0.0, %v901
        %v903 = vpop.f32.mrb[0].mxu0
        %904 = vmatprep.mubr.f32.mxu0 0.0
        %905 = vmatmul.mubr.f32.gmra.mrb[0].mxu0 %v819
        %v906 = vpop.f32.mrb[0].mxu0
        %v907 = vadd.f32 0.0, %v906
        %v908 = vpop.f32.mrb[0].mxu0
        %909 = vmatprep.mubr.f32.mxu0 0.0
        %910 = vmatmul.mubr.f32.gmra.mrb[0].mxu0 %v822
        %v911 = vpop.f32.mrb[0].mxu0
        %v912 = vadd.f32 0.0, %v911
        %v913 = vpop.f32.mrb[0].mxu0
        %914 = vmatprep.mubr.f32.mxu0 0.0
        %915 = vmatmul.mubr.f32.gmra.mrb[0].mxu0 %v825
        %v916 = vpop.f32.mrb[0].mxu0
        %v917 = vadd.f32 0.0, %v916
        %v918 = vpop.f32.mrb[0].mxu0
        %919 = vmatprep.mubr.f32.mxu0 0.0
        %920 = vmatmul.mubr.f32.gmra.mrb[0].mxu0 %v828
        %v921 = vpop.f32.mrb[0].mxu0
        %v922 = vadd.f32 0.0, %v921
        %v923 = vpop.f32.mrb[0].mxu0
        %924 = vdwg.mxu0
        %v925 = vmul.f32 %v897, %v897
        %v926 = vmul.f32 %v902, %v902
        %v927 = vmul.f32 %v907, %v907
        %v928 = vmul.f32 %v912, %v912
        %v929 = vmul.f32 %v917, %v917
        %v930 = vmul.f32 %v922, %v922
        %vm931 = vcmask 23552
        %v932 = vsel %vm931, %v925, 0.0
        %933 = vadd.xlane.f32.xlu0 %v932
        %v934 = vpop.xlane.xlu0 %933
        %v935 = vsel %vm931, %v926, 0.0
        %936 = vadd.xlane.f32.xlu0 %v935
        %v937 = vpop.xlane.xlu0 %936
        %v938 = vsel %vm931, %v927, 0.0
        %939 = vadd.xlane.f32.xlu0 %v938
        %v940 = vpop.xlane.xlu0 %939
        %v941 = vsel %vm931, %v928, 0.0
        %942 = vadd.xlane.f32.xlu0 %v941
        %v943 = vpop.xlane.xlu0 %942
        %v944 = vsel %vm931, %v929, 0.0
        %945 = vadd.xlane.f32.xlu0 %v944
        %v946 = vpop.xlane.xlu0 %945
        %v947 = vsel %vm931, %v930, 0.0
        %948 = vadd.xlane.f32.xlu0 %v947
        %v949 = vpop.xlane.xlu0 %948
        %v950 = vrsqrt.pop %v934
        %v951 = vmul.f32 %v934, %v950
        %vm952 = vcmp.eq.f32.partialorder %v934, inf
        %v953 = vsel %vm952, %v934, %v951
        %vm954 = vcmp.eq.f32.partialorder %v934, 0.0
        %v955 = vand.u32 %v934, 2147483648
        %v956 = vsel %vm954, %v955, %v953
        %v957 = vrsqrt.pop %v937
        %v958 = vmul.f32 %v937, %v957
        %vm959 = vcmp.eq.f32.partialorder %v937, inf
        %v960 = vsel %vm959, %v937, %v958
        %vm961 = vcmp.eq.f32.partialorder %v937, 0.0
        %v962 = vand.u32 %v937, 2147483648
        %v963 = vsel %vm961, %v962, %v960
        %v964 = vrsqrt.pop %v940
        %v965 = vmul.f32 %v940, %v964
        %vm966 = vcmp.eq.f32.partialorder %v940, inf
        %v967 = vsel %vm966, %v940, %v965
        %vm968 = vcmp.eq.f32.partialorder %v940, 0.0
        %v969 = vand.u32 %v940, 2147483648
        %v970 = vsel %vm968, %v969, %v967
        %v971 = vrsqrt.pop %v943
        %v972 = vmul.f32 %v943, %v971
        %vm973 = vcmp.eq.f32.partialorder %v943, inf
        %v974 = vsel %vm973, %v943, %v972
        %vm975 = vcmp.eq.f32.partialorder %v943, 0.0
        %v976 = vand.u32 %v943, 2147483648
        %v977 = vsel %vm975, %v976, %v974
        %v978 = vrsqrt.pop %v946
        %v979 = vmul.f32 %v946, %v978
        %vm980 = vcmp.eq.f32.partialorder %v946, inf
        %v981 = vsel %vm980, %v946, %v979
        %vm982 = vcmp.eq.f32.partialorder %v946, 0.0
        %v983 = vand.u32 %v946, 2147483648
        %v984 = vsel %vm982, %v983, %v981
        %v985 = vrsqrt.pop %v949
        %v986 = vmul.f32 %v949, %v985
        %vm987 = vcmp.eq.f32.partialorder %v949, inf
        %v988 = vsel %vm987, %v949, %v986
        %vm989 = vcmp.eq.f32.partialorder %v949, 0.0
        %v990 = vand.u32 %v949, 2147483648
        %v991 = vsel %vm989, %v990, %v988
        %v992 = vadd.f32 %v956, 1e-08
        %v993 = vadd.f32 %v963, 1e-08
        %v994 = vadd.f32 %v970, 1e-08
        %v995 = vadd.f32 %v977, 1e-08
        %v996 = vadd.f32 %v984, 1e-08
        %v997 = vadd.f32 %v991, 1e-08
        %v998 = vrcp.pop %v992
        %v999 = vmul.f32 %v897, %v998
        %v1000 = vrcp.pop %v993
        %v1001 = vmul.f32 %v902, %v1000
        %v1002 = vrcp.pop %v994
        %v1003 = vmul.f32 %v907, %v1002
        %v1004 = vrcp.pop %v995
        %v1005 = vmul.f32 %v912, %v1004
        %v1006 = vrcp.pop %v996
        %v1007 = vmul.f32 %v917, %v1006
        %v1008 = vrcp.pop %v997
        %v1009 = vmul.f32 %v922, %v1008
        %vm1010 = vcmask 261120
        %v1012 = vsel %vm1010, %v747, 0
        %v1015 = vsel %vm1010, %v748, 0
        %1017 = vmatprep.subr.mxu0 0.0
        %1018 = vmatpush1.msra.mxu0 %v775
        %1019 = vmatprep.subr.mxu0 0.0
        %1020 = vmatpush1.msra.mxu0 %v776
        %1021 = vmatprep.subr.mxu0 0.0
        %1022 = vmatpush1.msra.mxu0 %v777
        %1023 = vmatprep.subr.mxu0 0.0
        %1024 = vmatpush1.msra.mxu0 %v778
        %1025 = vmatprep.subr.mxu0 0.0
        %1026 = vmatpush1.msra.mxu0 0.0
        %1027 = vmatprep.subr.mxu0 0.0
        %1028 = vmatpush1.msra.mxu0 0.0
        %1029 = vmatprep.subr.mxu0 0.0
        %1030 = vmatpush1.msra.mxu0 0.0
        %1031 = vmatprep.subr.mxu0 0.0
        %1032 = vmatpush1.msra.mxu0 0.0
        %1033 = vmatprep.subr.mxu0 0.0
        %1034 = vmatpush1.msra.mxu0 0.0
        %1035 = vmatprep.subr.mxu0 0.0
        %1036 = vmatpush1.msra.mxu0 0.0
        %1037 = vmatprep.subr.mxu0 0.0
        %1038 = vmatpush1.msra.mxu0 0.0
        %1039 = vmatprep.subr.mxu0 0.0
        %1040 = vmatpush1.msra.mxu0 0.0
        %1041 = vmatprep.subr.mxu0 0.0
        %1042 = vmatpush1.msra.mxu0 0.0
        %1043 = vmatprep.subr.mxu0 0.0
        %1044 = vmatpush1.msra.mxu0 0.0
        %1045 = vmatprep.subr.mxu0 0.0
        %1046 = vmatpush1.msra.mxu0 0.0
        %1047 = vmatprep.subr.mxu0 0.0
        %1048 = vmatpush1.msra.mxu0 0.0
        %1049 = vmatprep.subr.mxu0 0.0
        %1050 = vmatpush1.msra.mxu0 0.0
        %1051 = vmatprep.subr.mxu0 0.0
        %1052 = vmatpush1.msra.mxu0 0.0
        %1053 = vmatprep.subr.mxu0 0.0
        %1054 = vmatpush1.msra.mxu0 0.0
        %1055 = vmatprep.subr.mxu0 0.0
        %1056 = vmatpush1.msra.mxu0 0.0
        %1057 = vmatprep.subr.mxu0 0.0
        %1058 = vmatpush1.msra.mxu0 0.0
        %1059 = vmatprep.subr.mxu0 0.0
        %1060 = vmatpush1.msra.mxu0 0.0
        %1061 = vmatprep.subr.mxu0 0.0
        %1062 = vmatpush1.msra.mxu0 0.0
        %1063 = vmatprep.subr.mxu0 0.0
        %1064 = vmatpush1.msra.mxu0 0.0
        %1065 = vmatprep.subr.mxu0 0.0
        %1066 = vmatpush1.msra.mxu0 0.0
        %1067 = vmatprep.subr.mxu0 0.0
        %1068 = vmatpush1.msra.mxu0 0.0
        %1069 = vmatprep.subr.mxu0 0.0
        %1070 = vmatpush1.msra.mxu0 0.0
        %1071 = vmatprep.subr.mxu0 0.0
        %1072 = vmatpush1.msra.mxu0 0.0
        %1073 = vmatprep.subr.mxu0 0.0
        %1074 = vmatpush1.msra.mxu0 0.0
        %1075 = vmatprep.subr.mxu0 0.0
        %1076 = vmatpush1.msra.mxu0 0.0
        %1077 = vmatprep.subr.mxu0 0.0
        %1078 = vmatpush1.msra.mxu0 0.0
        %1079 = vmatprep.subr.mxu0 0.0
        %1080 = vmatpush1.msra.mxu0 0.0
        %1081 = vmatprep.mubr.f32.mxu0 0.0
        %1082 = vmatmul.mubr.f32.gmra.mrb[0].mxu0 %v1012
        %v1083 = vpop.f32.mrb[0].mxu0
        %v1084 = vadd.f32 0.0, %v1083
        %v1085 = vpop.f32.mrb[0].mxu0
        %1086 = vmatprep.mubr.f32.mxu0 0.0
        %1087 = vmatmul.mubr.f32.gmra.mrb[0].mxu0 %v1015
        %v1088 = vpop.f32.mrb[0].mxu0
        %v1089 = vadd.f32 0.0, %v1088
        %v1090 = vpop.f32.mrb[0].mxu0
        %1091 = vdwg.mxu0
        %1092 = vmatprep.subr.mxu0 0.0
        %1093 = vmatpush1.msra.mxu0 %v779
        %1094 = vmatprep.subr.mxu0 0.0
        %1095 = vmatpush1.msra.mxu0 %v780
        %1096 = vmatprep.subr.mxu0 0.0
        %1097 = vmatpush1.msra.mxu0 %v781
        %1098 = vmatprep.subr.mxu0 0.0
        %1099 = vmatpush1.msra.mxu0 %v782
        %1100 = vmatprep.subr.mxu0 0.0
        %1101 = vmatpush1.msra.mxu0 0.0
        %1102 = vmatprep.subr.mxu0 0.0
        %1103 = vmatpush1.msra.mxu0 0.0
        %1104 = vmatprep.subr.mxu0 0.0
        %1105 = vmatpush1.msra.mxu0 0.0
        %1106 = vmatprep.subr.mxu0 0.0
        %1107 = vmatpush1.msra.mxu0 0.0
        %1108 = vmatprep.subr.mxu0 0.0
        %1109 = vmatpush1.msra.mxu0 0.0
        %1110 = vmatprep.subr.mxu0 0.0
        %1111 = vmatpush1.msra.mxu0 0.0
        %1112 = vmatprep.subr.mxu0 0.0
        %1113 = vmatpush1.msra.mxu0 0.0
        %1114 = vmatprep.subr.mxu0 0.0
        %1115 = vmatpush1.msra.mxu0 0.0
        %1116 = vmatprep.subr.mxu0 0.0
        %1117 = vmatpush1.msra.mxu0 0.0
        %1118 = vmatprep.subr.mxu0 0.0
        %1119 = vmatpush1.msra.mxu0 0.0
        %1120 = vmatprep.subr.mxu0 0.0
        %1121 = vmatpush1.msra.mxu0 0.0
        %1122 = vmatprep.subr.mxu0 0.0
        %1123 = vmatpush1.msra.mxu0 0.0
        %1124 = vmatprep.subr.mxu0 0.0
        %1125 = vmatpush1.msra.mxu0 0.0
        %1126 = vmatprep.subr.mxu0 0.0
        %1127 = vmatpush1.msra.mxu0 0.0
        %1128 = vmatprep.subr.mxu0 0.0
        %1129 = vmatpush1.msra.mxu0 0.0
        %1130 = vmatprep.subr.mxu0 0.0
        %1131 = vmatpush1.msra.mxu0 0.0
        %1132 = vmatprep.subr.mxu0 0.0
        %1133 = vmatpush1.msra.mxu0 0.0
        %1134 = vmatprep.subr.mxu0 0.0
        %1135 = vmatpush1.msra.mxu0 0.0
        %1136 = vmatprep.subr.mxu0 0.0
        %1137 = vmatpush1.msra.mxu0 0.0
        %1138 = vmatprep.subr.mxu0 0.0
        %1139 = vmatpush1.msra.mxu0 0.0
        %1140 = vmatprep.subr.mxu0 0.0
        %1141 = vmatpush1.msra.mxu0 0.0
        %1142 = vmatprep.subr.mxu0 0.0
        %1143 = vmatpush1.msra.mxu0 0.0
        %1144 = vmatprep.subr.mxu0 0.0
        %1145 = vmatpush1.msra.mxu0 0.0
        %1146 = vmatprep.subr.mxu0 0.0
        %1147 = vmatpush1.msra.mxu0 0.0
        %1148 = vmatprep.subr.mxu0 0.0
        %1149 = vmatpush1.msra.mxu0 0.0
        %1150 = vmatprep.subr.mxu0 0.0
        %1151 = vmatpush1.msra.mxu0 0.0
        %1152 = vmatprep.subr.mxu0 0.0
        %1153 = vmatpush1.msra.mxu0 0.0
        %1154 = vmatprep.subr.mxu0 0.0
        %1155 = vmatpush1.msra.mxu0 0.0
        %1156 = vmatprep.mubr.f32.mxu0 0.0
        %1157 = vmatmul.mubr.f32.gmra.mrb[0].mxu0 %v1012
        %v1158 = vpop.f32.mrb[0].mxu0
        %v1159 = vadd.f32 0.0, %v1158
        %v1160 = vpop.f32.mrb[0].mxu0
        %1161 = vmatprep.mubr.f32.mxu0 0.0
        %1162 = vmatmul.mubr.f32.gmra.mrb[0].mxu0 %v1015
        %v1163 = vpop.f32.mrb[0].mxu0
        %v1164 = vadd.f32 0.0, %v1163
        %v1165 = vpop.f32.mrb[0].mxu0
        %1166 = vdwg.mxu0
        %v1168 = vsel %vm811, %v757, 0
        %v1171 = vsel %vm811, %v758, 0
        %v1174 = vsel %vm811, %v759, 0
        %v1177 = vsel %vm811, %v760, 0
        %v1180 = vsel %vm811, %v761, 0
        %v1183 = vsel %vm811, %v762, 0
        %1185 = vmatprep.subr.mxu0 0.0
        %1186 = vmatpush1.msra.mxu0 %v1159
        %1187 = vmatprep.subr.mxu0 0.0
        %1188 = vmatpush1.msra.mxu0 %v1164
        %1189 = vmatprep.subr.mxu0 0.0
        %1190 = vmatpush1.msra.mxu0 0.0
        %1191 = vmatprep.subr.mxu0 0.0
        %1192 = vmatpush1.msra.mxu0 0.0
        %1193 = vmatprep.subr.mxu0 0.0
        %1194 = vmatpush1.msra.mxu0 0.0
        %1195 = vmatprep.subr.mxu0 0.0
        %1196 = vmatpush1.msra.mxu0 0.0
        %1197 = vmatprep.subr.mxu0 0.0
        %1198 = vmatpush1.msra.mxu0 0.0
        %1199 = vmatprep.subr.mxu0 0.0
        %1200 = vmatpush1.msra.mxu0 0.0
        %1201 = vmatprep.subr.mxu0 0.0
        %1202 = vmatpush1.msra.mxu0 0.0
        %1203 = vmatprep.subr.mxu0 0.0
        %1204 = vmatpush1.msra.mxu0 0.0
        %1205 = vmatprep.subr.mxu0 0.0
        %1206 = vmatpush1.msra.mxu0 0.0
        %1207 = vmatprep.subr.mxu0 0.0
        %1208 = vmatpush1.msra.mxu0 0.0
        %1209 = vmatprep.subr.mxu0 0.0
        %1210 = vmatpush1.msra.mxu0 0.0
        %1211 = vmatprep.subr.mxu0 0.0
        %1212 = vmatpush1.msra.mxu0 0.0
        %1213 = vmatprep.subr.mxu0 0.0
        %1214 = vmatpush1.msra.mxu0 0.0
        %1215 = vmatprep.subr.mxu0 0.0
        %1216 = vmatpush1.msra.mxu0 0.0
        %1217 = vmatprep.subr.mxu0 0.0
        %1218 = vmatpush1.msra.mxu0 0.0
        %1219 = vmatprep.subr.mxu0 0.0
        %1220 = vmatpush1.msra.mxu0 0.0
        %1221 = vmatprep.subr.mxu0 0.0
        %1222 = vmatpush1.msra.mxu0 0.0
        %1223 = vmatprep.subr.mxu0 0.0
        %1224 = vmatpush1.msra.mxu0 0.0
        %1225 = vmatprep.subr.mxu0 0.0
        %1226 = vmatpush1.msra.mxu0 0.0
        %1227 = vmatprep.subr.mxu0 0.0
        %1228 = vmatpush1.msra.mxu0 0.0
        %1229 = vmatprep.subr.mxu0 0.0
        %1230 = vmatpush1.msra.mxu0 0.0
        %1231 = vmatprep.subr.mxu0 0.0
        %1232 = vmatpush1.msra.mxu0 0.0
        %1233 = vmatprep.subr.mxu0 0.0
        %1234 = vmatpush1.msra.mxu0 0.0
        %1235 = vmatprep.subr.mxu0 0.0
        %1236 = vmatpush1.msra.mxu0 0.0
        %1237 = vmatprep.subr.mxu0 0.0
        %1238 = vmatpush1.msra.mxu0 0.0
        %1239 = vmatprep.subr.mxu0 0.0
        %1240 = vmatpush1.msra.mxu0 0.0
        %1241 = vmatprep.subr.mxu0 0.0
        %1242 = vmatpush1.msra.mxu0 0.0
        %1243 = vmatprep.subr.mxu0 0.0
        %1244 = vmatpush1.msra.mxu0 0.0
        %1245 = vmatprep.subr.mxu0 0.0
        %1246 = vmatpush1.msra.mxu0 0.0
        %1247 = vmatprep.subr.mxu0 0.0
        %1248 = vmatpush1.msra.mxu0 0.0
        %1249 = vmatprep.mubr.f32.mxu0 0.0
        %1250 = vmatmul.mubr.f32.gmra.mrb[0].mxu0 %v1168
        %v1251 = vpop.f32.mrb[0].mxu0
        %v1252 = vadd.f32 0.0, %v1251
        %v1253 = vpop.f32.mrb[0].mxu0
        %1254 = vmatprep.mubr.f32.mxu0 0.0
        %1255 = vmatmul.mubr.f32.gmra.mrb[0].mxu0 %v1171
        %v1256 = vpop.f32.mrb[0].mxu0
        %v1257 = vadd.f32 0.0, %v1256
        %v1258 = vpop.f32.mrb[0].mxu0
        %1259 = vmatprep.mubr.f32.mxu0 0.0
        %1260 = vmatmul.mubr.f32.gmra.mrb[0].mxu0 %v1174
        %v1261 = vpop.f32.mrb[0].mxu0
        %v1262 = vadd.f32 0.0, %v1261
        %v1263 = vpop.f32.mrb[0].mxu0
        %1264 = vmatprep.mubr.f32.mxu0 0.0
        %1265 = vmatmul.mubr.f32.gmra.mrb[0].mxu0 %v1177
        %v1266 = vpop.f32.mrb[0].mxu0
        %v1267 = vadd.f32 0.0, %v1266
        %v1268 = vpop.f32.mrb[0].mxu0
        %1269 = vmatprep.mubr.f32.mxu0 0.0
        %1270 = vmatmul.mubr.f32.gmra.mrb[0].mxu0 %v1180
        %v1271 = vpop.f32.mrb[0].mxu0
        %v1272 = vadd.f32 0.0, %v1271
        %v1273 = vpop.f32.mrb[0].mxu0
        %1274 = vmatprep.mubr.f32.mxu0 0.0
        %1275 = vmatmul.mubr.f32.gmra.mrb[0].mxu0 %v1183
        %v1276 = vpop.f32.mrb[0].mxu0
        %v1277 = vadd.f32 0.0, %v1276
        %v1278 = vpop.f32.mrb[0].mxu0
        %1279 = vdwg.mxu0
        %v1281 = vsel %vm811, %v751, 0
        %v1284 = vsel %vm811, %v752, 0
        %v1287 = vsel %vm811, %v753, 0
        %v1290 = vsel %vm811, %v754, 0
        %v1293 = vsel %vm811, %v755, 0
        %v1296 = vsel %vm811, %v756, 0
        %1298 = vmatprep.subr.mxu0 0.0
        %1299 = vmatpush1.msra.mxu0 %v1084
        %1300 = vmatprep.subr.mxu0 0.0
        %1301 = vmatpush1.msra.mxu0 %v1089
        %1302 = vmatprep.subr.mxu0 0.0
        %1303 = vmatpush1.msra.mxu0 0.0
        %1304 = vmatprep.subr.mxu0 0.0
        %1305 = vmatpush1.msra.mxu0 0.0
        %1306 = vmatprep.subr.mxu0 0.0
        %1307 = vmatpush1.msra.mxu0 0.0
        %1308 = vmatprep.subr.mxu0 0.0
        %1309 = vmatpush1.msra.mxu0 0.0
        %1310 = vmatprep.subr.mxu0 0.0
        %1311 = vmatpush1.msra.mxu0 0.0
        %1312 = vmatprep.subr.mxu0 0.0
        %1313 = vmatpush1.msra.mxu0 0.0
        %1314 = vmatprep.subr.mxu0 0.0
        %1315 = vmatpush1.msra.mxu0 0.0
        %1316 = vmatprep.subr.mxu0 0.0
        %1317 = vmatpush1.msra.mxu0 0.0
        %1318 = vmatprep.subr.mxu0 0.0
        %1319 = vmatpush1.msra.mxu0 0.0
        %1320 = vmatprep.subr.mxu0 0.0
        %1321 = vmatpush1.msra.mxu0 0.0
        %1322 = vmatprep.subr.mxu0 0.0
        %1323 = vmatpush1.msra.mxu0 0.0
        %1324 = vmatprep.subr.mxu0 0.0
        %1325 = vmatpush1.msra.mxu0 0.0
        %1326 = vmatprep.subr.mxu0 0.0
        %1327 = vmatpush1.msra.mxu0 0.0
        %1328 = vmatprep.subr.mxu0 0.0
        %1329 = vmatpush1.msra.mxu0 0.0
        %1330 = vmatprep.subr.mxu0 0.0
        %1331 = vmatpush1.msra.mxu0 0.0
        %1332 = vmatprep.subr.mxu0 0.0
        %1333 = vmatpush1.msra.mxu0 0.0
        %1334 = vmatprep.subr.mxu0 0.0
        %1335 = vmatpush1.msra.mxu0 0.0
        %1336 = vmatprep.subr.mxu0 0.0
        %1337 = vmatpush1.msra.mxu0 0.0
        %1338 = vmatprep.subr.mxu0 0.0
        %1339 = vmatpush1.msra.mxu0 0.0
        %1340 = vmatprep.subr.mxu0 0.0
        %1341 = vmatpush1.msra.mxu0 0.0
        %1342 = vmatprep.subr.mxu0 0.0
        %1343 = vmatpush1.msra.mxu0 0.0
        %1344 = vmatprep.subr.mxu0 0.0
        %1345 = vmatpush1.msra.mxu0 0.0
        %1346 = vmatprep.subr.mxu0 0.0
        %1347 = vmatpush1.msra.mxu0 0.0
        %1348 = vmatprep.subr.mxu0 0.0
        %1349 = vmatpush1.msra.mxu0 0.0
        %1350 = vmatprep.subr.mxu0 0.0
        %1351 = vmatpush1.msra.mxu0 0.0
        %1352 = vmatprep.subr.mxu0 0.0
        %1353 = vmatpush1.msra.mxu0 0.0
        %1354 = vmatprep.subr.mxu0 0.0
        %1355 = vmatpush1.msra.mxu0 0.0
        %1356 = vmatprep.subr.mxu0 0.0
        %1357 = vmatpush1.msra.mxu0 0.0
        %1358 = vmatprep.subr.mxu0 0.0
        %1359 = vmatpush1.msra.mxu0 0.0
        %1360 = vmatprep.subr.mxu0 0.0
        %1361 = vmatpush1.msra.mxu0 0.0
        %1362 = vmatprep.mubr.f32.mxu0 0.0
        %1363 = vmatmul.mubr.f32.gmra.mrb[0].mxu0 %v1281
        %v1364 = vpop.f32.mrb[0].mxu0
        %v1365 = vadd.f32 %v1252, %v1364
        %v1366 = vpop.f32.mrb[0].mxu0
        %1367 = vmatprep.mubr.f32.mxu0 0.0
        %1368 = vmatmul.mubr.f32.gmra.mrb[0].mxu0 %v1284
        %v1369 = vpop.f32.mrb[0].mxu0
        %v1370 = vadd.f32 %v1257, %v1369
        %v1371 = vpop.f32.mrb[0].mxu0
        %1372 = vmatprep.mubr.f32.mxu0 0.0
        %1373 = vmatmul.mubr.f32.gmra.mrb[0].mxu0 %v1287
        %v1374 = vpop.f32.mrb[0].mxu0
        %v1375 = vadd.f32 %v1262, %v1374
        %v1376 = vpop.f32.mrb[0].mxu0
        %1377 = vmatprep.mubr.f32.mxu0 0.0
        %1378 = vmatmul.mubr.f32.gmra.mrb[0].mxu0 %v1290
        %v1379 = vpop.f32.mrb[0].mxu0
        %v1380 = vadd.f32 %v1267, %v1379
        %v1381 = vpop.f32.mrb[0].mxu0
        %1382 = vmatprep.mubr.f32.mxu0 0.0
        %1383 = vmatmul.mubr.f32.gmra.mrb[0].mxu0 %v1293
        %v1384 = vpop.f32.mrb[0].mxu0
        %v1385 = vadd.f32 %v1272, %v1384
        %v1386 = vpop.f32.mrb[0].mxu0
        %1387 = vmatprep.mubr.f32.mxu0 0.0
        %1388 = vmatmul.mubr.f32.gmra.mrb[0].mxu0 %v1296
        %v1389 = vpop.f32.mrb[0].mxu0
        %v1390 = vadd.f32 %v1277, %v1389
        %v1391 = vpop.f32.mrb[0].mxu0
        %1392 = vdwg.mxu0
        %v1393 = vlaneseq
        %v1394 = vshrl.u32 %v1393, 7
        %v1395 = vsub.s32 0, %v1394
        %v1396 = vrot.slane %v784, %v1395
        %v1397 = vmul.f32 %v934, %v1396
        %v1398 = vmul.f32 %v937, %v1396
        %v1399 = vmul.f32 %v940, %v1396
        %v1400 = vmul.f32 %v943, %v1396
        %v1401 = vmul.f32 %v946, %v1396
        %v1402 = vmul.f32 %v949, %v1396
        %v1403 = vadd.f32 %v1365, %v1397
        %v1404 = vadd.f32 %v1370, %v1398
        %v1405 = vadd.f32 %v1375, %v1399
        %v1406 = vadd.f32 %v1380, %v1400
        %v1407 = vadd.f32 %v1385, %v1401
        %v1408 = vadd.f32 %v1390, %v1402
        %vm1409 = vcmask 64512
        %v1411 = vsel %vm1409, %v767, 0
        %v1414 = vsel %vm1409, %v768, 0
        %v1417 = vsel %vm1409, %v769, 0
        %v1420 = vsel %vm1409, %v770, 0
        %v1423 = vsel %vm1409, %v771, 0
        %v1426 = vsel %vm1409, %v772, 0
        %1428 = vmatprep.subr.mxu0 0.0
        %1429 = vmatpush1.msra.mxu0 %v783
        %1430 = vmatprep.subr.mxu0 0.0
        %1431 = vmatpush1.msra.mxu0 0.0
        %1432 = vmatprep.subr.mxu0 0.0
        %1433 = vmatpush1.msra.mxu0 0.0
        %1434 = vmatprep.subr.mxu0 0.0
        %1435 = vmatpush1.msra.mxu0 0.0
        %1436 = vmatprep.subr.mxu0 0.0
        %1437 = vmatpush1.msra.mxu0 0.0
        %1438 = vmatprep.subr.mxu0 0.0
        %1439 = vmatpush1.msra.mxu0 0.0
        %1440 = vmatprep.subr.mxu0 0.0
        %1441 = vmatpush1.msra.mxu0 0.0
        %1442 = vmatprep.subr.mxu0 0.0
        %1443 = vmatpush1.msra.mxu0 0.0
        %1444 = vmatprep.subr.mxu0 0.0
        %1445 = vmatpush1.msra.mxu0 0.0
        %1446 = vmatprep.subr.mxu0 0.0
        %1447 = vmatpush1.msra.mxu0 0.0
        %1448 = vmatprep.subr.mxu0 0.0
        %1449 = vmatpush1.msra.mxu0 0.0
        %1450 = vmatprep.subr.mxu0 0.0
        %1451 = vmatpush1.msra.mxu0 0.0
        %1452 = vmatprep.subr.mxu0 0.0
        %1453 = vmatpush1.msra.mxu0 0.0
        %1454 = vmatprep.subr.mxu0 0.0
        %1455 = vmatpush1.msra.mxu0 0.0
        %1456 = vmatprep.subr.mxu0 0.0
        %1457 = vmatpush1.msra.mxu0 0.0
        %1458 = vmatprep.subr.mxu0 0.0
        %1459 = vmatpush1.msra.mxu0 0.0
        %1460 = vmatprep.subr.mxu0 0.0
        %1461 = vmatpush1.msra.mxu0 0.0
        %1462 = vmatprep.subr.mxu0 0.0
        %1463 = vmatpush1.msra.mxu0 0.0
        %1464 = vmatprep.subr.mxu0 0.0
        %1465 = vmatpush1.msra.mxu0 0.0
        %1466 = vmatprep.subr.mxu0 0.0
        %1467 = vmatpush1.msra.mxu0 0.0
        %1468 = vmatprep.subr.mxu0 0.0
        %1469 = vmatpush1.msra.mxu0 0.0
        %1470 = vmatprep.subr.mxu0 0.0
        %1471 = vmatpush1.msra.mxu0 0.0
        %1472 = vmatprep.subr.mxu0 0.0
        %1473 = vmatpush1.msra.mxu0 0.0
        %1474 = vmatprep.subr.mxu0 0.0
        %1475 = vmatpush1.msra.mxu0 0.0
        %1476 = vmatprep.subr.mxu0 0.0
        %1477 = vmatpush1.msra.mxu0 0.0
        %1478 = vmatprep.subr.mxu0 0.0
        %1479 = vmatpush1.msra.mxu0 0.0
        %1480 = vmatprep.subr.mxu0 0.0
        %1481 = vmatpush1.msra.mxu0 0.0
        %1482 = vmatprep.subr.mxu0 0.0
        %1483 = vmatpush1.msra.mxu0 0.0
        %1484 = vmatprep.subr.mxu0 0.0
        %1485 = vmatpush1.msra.mxu0 0.0
        %1486 = vmatprep.subr.mxu0 0.0
        %1487 = vmatpush1.msra.mxu0 0.0
        %1488 = vmatprep.subr.mxu0 0.0
        %1489 = vmatpush1.msra.mxu0 0.0
        %1490 = vmatprep.subr.mxu0 0.0
        %1491 = vmatpush1.msra.mxu0 0.0
        %1492 = vmatprep.mubr.f32.mxu0 0.0
        %1493 = vmatmul.mubr.f32.gmra.mrb[0].mxu0 %v1411
        %v1494 = vpop.f32.mrb[0].mxu0
        %v1495 = vadd.f32 0.0, %v1494
        %v1496 = vpop.f32.mrb[0].mxu0
        %1497 = vmatprep.mubr.f32.mxu0 0.0
        %1498 = vmatmul.mubr.f32.gmra.mrb[0].mxu0 %v1414
        %v1499 = vpop.f32.mrb[0].mxu0
        %v1500 = vadd.f32 0.0, %v1499
        %v1501 = vpop.f32.mrb[0].mxu0
        %1502 = vmatprep.mubr.f32.mxu0 0.0
        %1503 = vmatmul.mubr.f32.gmra.mrb[0].mxu0 %v1417
        %v1504 = vpop.f32.mrb[0].mxu0
        %v1505 = vadd.f32 0.0, %v1504
        %v1506 = vpop.f32.mrb[0].mxu0
        %1507 = vmatprep.mubr.f32.mxu0 0.0
        %1508 = vmatmul.mubr.f32.gmra.mrb[0].mxu0 %v1420
        %v1509 = vpop.f32.mrb[0].mxu0
        %v1510 = vadd.f32 0.0, %v1509
        %v1511 = vpop.f32.mrb[0].mxu0
        %1512 = vmatprep.mubr.f32.mxu0 0.0
        %1513 = vmatmul.mubr.f32.gmra.mrb[0].mxu0 %v1423
        %v1514 = vpop.f32.mrb[0].mxu0
        %v1515 = vadd.f32 0.0, %v1514
        %v1516 = vpop.f32.mrb[0].mxu0
        %1517 = vmatprep.mubr.f32.mxu0 0.0
        %1518 = vmatmul.mubr.f32.gmra.mrb[0].mxu0 %v1426
        %v1519 = vpop.f32.mrb[0].mxu0
        %v1520 = vadd.f32 0.0, %v1519
        %v1521 = vpop.f32.mrb[0].mxu0
        %1522 = vdwg.mxu0
        %v1523 = vadd.f32 %v1403, %v1495
        %v1524 = vadd.f32 %v1404, %v1500
        %v1525 = vadd.f32 %v1405, %v1505
        %v1526 = vadd.f32 %v1406, %v1510
        %v1527 = vadd.f32 %v1407, %v1515
        %v1528 = vadd.f32 %v1408, %v1520
        %v1529 = vlaneseq
        %v1530 = vshrl.u32 %v1529, 7
        %v1531 = vsub.s32 0, %v1530
        %v1532 = vrot.slane %v773, %v1531
        %v1533 = vadd.f32 %v1523, %v1532
        %v1534 = vadd.f32 %v1524, %v1532
        %v1535 = vadd.f32 %v1525, %v1532
        %v1536 = vadd.f32 %v1526, %v1532
        %v1537 = vadd.f32 %v1527, %v1532
        %v1538 = vadd.f32 %v1528, %v1532
        %v1539 = vmax.f32 %v1533, 0.0
        %v1540 = vmax.f32 %v1534, 0.0
        %v1541 = vmax.f32 %v1535, 0.0
        %v1542 = vmax.f32 %v1536, 0.0
        %v1543 = vmax.f32 %v1537, 0.0
        %v1544 = vmax.f32 %v1538, 0.0
        %v1545 = vlaneseq
        %v1546 = vshrl.u32 %v1545, 7
        %v1547 = vsub.s32 1, %v1546
        %v1548 = vrot.slane %v773, %v1547
        %v1550 = vsel %vm1010, %v1539, 0
        %v1553 = vsel %vm1010, %v1540, 0
        %v1556 = vsel %vm1010, %v1541, 0
        %v1559 = vsel %vm1010, %v1542, 0
        %v1562 = vsel %vm1010, %v1543, 0
        %v1565 = vsel %vm1010, %v1544, 0
        %1567 = vmatprep.subr.mxu0 0.0
        %1568 = vmatpush1.msra.mxu0 %v785
        %1569 = vmatprep.subr.mxu0 0.0
        %1570 = vmatpush1.msra.mxu0 %v786
        %1571 = vmatprep.subr.mxu0 0.0
        %1572 = vmatpush1.msra.mxu0 %v787
        %1573 = vmatprep.subr.mxu0 0.0
        %1574 = vmatpush1.msra.mxu0 %v788
        %1575 = vmatprep.subr.mxu0 0.0
        %1576 = vmatpush1.msra.mxu0 0.0
        %1577 = vmatprep.subr.mxu0 0.0
        %1578 = vmatpush1.msra.mxu0 0.0
        %1579 = vmatprep.subr.mxu0 0.0
        %1580 = vmatpush1.msra.mxu0 0.0
        %1581 = vmatprep.subr.mxu0 0.0
        %1582 = vmatpush1.msra.mxu0 0.0
        %1583 = vmatprep.subr.mxu0 0.0
        %1584 = vmatpush1.msra.mxu0 0.0
        %1585 = vmatprep.subr.mxu0 0.0
        %1586 = vmatpush1.msra.mxu0 0.0
        %1587 = vmatprep.subr.mxu0 0.0
        %1588 = vmatpush1.msra.mxu0 0.0
        %1589 = vmatprep.subr.mxu0 0.0
        %1590 = vmatpush1.msra.mxu0 0.0
        %1591 = vmatprep.subr.mxu0 0.0
        %1592 = vmatpush1.msra.mxu0 0.0
        %1593 = vmatprep.subr.mxu0 0.0
        %1594 = vmatpush1.msra.mxu0 0.0
        %1595 = vmatprep.subr.mxu0 0.0
        %1596 = vmatpush1.msra.mxu0 0.0
        %1597 = vmatprep.subr.mxu0 0.0
        %1598 = vmatpush1.msra.mxu0 0.0
        %1599 = vmatprep.subr.mxu0 0.0
        %1600 = vmatpush1.msra.mxu0 0.0
        %1601 = vmatprep.subr.mxu0 0.0
        %1602 = vmatpush1.msra.mxu0 0.0
        %1603 = vmatprep.subr.mxu0 0.0
        %1604 = vmatpush1.msra.mxu0 0.0
        %1605 = vmatprep.subr.mxu0 0.0
        %1606 = vmatpush1.msra.mxu0 0.0
        %1607 = vmatprep.subr.mxu0 0.0
        %1608 = vmatpush1.msra.mxu0 0.0
        %1609 = vmatprep.subr.mxu0 0.0
        %1610 = vmatpush1.msra.mxu0 0.0
        %1611 = vmatprep.subr.mxu0 0.0
        %1612 = vmatpush1.msra.mxu0 0.0
        %1613 = vmatprep.subr.mxu0 0.0
        %1614 = vmatpush1.msra.mxu0 0.0
        %1615 = vmatprep.subr.mxu0 0.0
        %1616 = vmatpush1.msra.mxu0 0.0
        %1617 = vmatprep.subr.mxu0 0.0
        %1618 = vmatpush1.msra.mxu0 0.0
        %1619 = vmatprep.subr.mxu0 0.0
        %1620 = vmatpush1.msra.mxu0 0.0
        %1621 = vmatprep.subr.mxu0 0.0
        %1622 = vmatpush1.msra.mxu0 0.0
        %1623 = vmatprep.subr.mxu0 0.0
        %1624 = vmatpush1.msra.mxu0 0.0
        %1625 = vmatprep.subr.mxu0 0.0
        %1626 = vmatpush1.msra.mxu0 0.0
        %1627 = vmatprep.subr.mxu0 0.0
        %1628 = vmatpush1.msra.mxu0 0.0
        %1629 = vmatprep.subr.mxu0 0.0
        %1630 = vmatpush1.msra.mxu0 0.0
        %1631 = vmatprep.mubr.f32.mxu0 0.0
        %1632 = vmatmul.mubr.f32.gmra.mrb[0].mxu0 %v1550
        %v1633 = vpop.f32.mrb[0].mxu0
        %v1634 = vadd.f32 %v1548, %v1633
        %v1635 = vpop.f32.mrb[0].mxu0
        %1636 = vmatprep.mubr.f32.mxu0 0.0
        %1637 = vmatmul.mubr.f32.gmra.mrb[0].mxu0 %v1553
        %v1638 = vpop.f32.mrb[0].mxu0
        %v1639 = vadd.f32 %v1548, %v1638
        %v1640 = vpop.f32.mrb[0].mxu0
        %1641 = vmatprep.mubr.f32.mxu0 0.0
        %1642 = vmatmul.mubr.f32.gmra.mrb[0].mxu0 %v1556
        %v1643 = vpop.f32.mrb[0].mxu0
        %v1644 = vadd.f32 %v1548, %v1643
        %v1645 = vpop.f32.mrb[0].mxu0
        %1646 = vmatprep.mubr.f32.mxu0 0.0
        %1647 = vmatmul.mubr.f32.gmra.mrb[0].mxu0 %v1559
        %v1648 = vpop.f32.mrb[0].mxu0
        %v1649 = vadd.f32 %v1548, %v1648
        %v1650 = vpop.f32.mrb[0].mxu0
        %1651 = vmatprep.mubr.f32.mxu0 0.0
        %1652 = vmatmul.mubr.f32.gmra.mrb[0].mxu0 %v1562
        %v1653 = vpop.f32.mrb[0].mxu0
        %v1654 = vadd.f32 %v1548, %v1653
        %v1655 = vpop.f32.mrb[0].mxu0
        %1656 = vmatprep.mubr.f32.mxu0 0.0
        %1657 = vmatmul.mubr.f32.gmra.mrb[0].mxu0 %v1565
        %v1658 = vpop.f32.mrb[0].mxu0
        %v1659 = vadd.f32 %v1548, %v1658
        %v1660 = vpop.f32.mrb[0].mxu0
        %1661 = vdwg.mxu0
        %v1662 = vmax.f32 %v1634, 0.0
        %v1663 = vmax.f32 %v1639, 0.0
        %v1664 = vmax.f32 %v1644, 0.0
        %v1665 = vmax.f32 %v1649, 0.0
        %v1666 = vmax.f32 %v1654, 0.0
        %v1667 = vmax.f32 %v1659, 0.0
        %v1668 = vlaneseq
        %v1669 = vshrl.u32 %v1668, 7
        %v1670 = vsub.s32 7, %v1669
        %v1671 = vrot.slane %v773, %v1670
        %v1672 = vmul.f32 %v1662, %v1671
        %v1673 = vmul.f32 %v1663, %v1671
        %v1674 = vmul.f32 %v1664, %v1671
        %v1675 = vmul.f32 %v1665, %v1671
        %v1676 = vmul.f32 %v1666, %v1671
        %v1677 = vmul.f32 %v1667, %v1671
        %v1678 = vsel %vm1010, %v1672, 0.0
        %1679 = vadd.xlane.f32.xlu0 %v1678
        %v1680 = vpop.xlane.xlu0 %1679
        %v1681 = vsel %vm1010, %v1673, 0.0
        %1682 = vadd.xlane.f32.xlu0 %v1681
        %v1683 = vpop.xlane.xlu0 %1682
        %v1684 = vsel %vm1010, %v1674, 0.0
        %1685 = vadd.xlane.f32.xlu0 %v1684
        %v1686 = vpop.xlane.xlu0 %1685
        %v1687 = vsel %vm1010, %v1675, 0.0
        %1688 = vadd.xlane.f32.xlu0 %v1687
        %v1689 = vpop.xlane.xlu0 %1688
        %v1690 = vsel %vm1010, %v1676, 0.0
        %1691 = vadd.xlane.f32.xlu0 %v1690
        %v1692 = vpop.xlane.xlu0 %1691
        %v1693 = vsel %vm1010, %v1677, 0.0
        %1694 = vadd.xlane.f32.xlu0 %v1693
        %v1695 = vpop.xlane.xlu0 %1694
        %v1696 = vlaneseq
        %v1697 = vshrl.u32 %v1696, 7
        %v1698 = vsub.s32 1, %v1697
        %v1699 = vrot.slane %v774, %v1698
        %v1700 = vadd.f32 %v1680, %v1699
        %v1701 = vadd.f32 %v1683, %v1699
        %v1702 = vadd.f32 %v1686, %v1699
        %v1703 = vadd.f32 %v1689, %v1699
        %v1704 = vadd.f32 %v1692, %v1699
        %v1705 = vadd.f32 %v1695, %v1699
        %v1706 = vsub.f32 0.0, %v1700
        %v1707 = vsub.f32 0.0, %v1701
        %v1708 = vsub.f32 0.0, %v1702
        %v1709 = vsub.f32 0.0, %v1703
        %v1710 = vsub.f32 0.0, %v1704
        %v1711 = vsub.f32 0.0, %v1705
        %v1712 = vmul.f32 %v1706, 1.442695
        %v1713 = vpow.pop %v1712
        %v1714 = vmul.f32 %v1707, 1.442695
        %v1715 = vpow.pop %v1714
        %v1716 = vmul.f32 %v1708, 1.442695
        %v1717 = vpow.pop %v1716
        %v1718 = vmul.f32 %v1709, 1.442695
        %v1719 = vpow.pop %v1718
        %v1720 = vmul.f32 %v1710, 1.442695
        %v1721 = vpow.pop %v1720
        %v1722 = vmul.f32 %v1711, 1.442695
        %v1723 = vpow.pop %v1722
        %v1724 = vadd.f32 %v1713, 1.0
        %v1725 = vadd.f32 %v1715, 1.0
        %v1726 = vadd.f32 %v1717, 1.0
        %v1727 = vadd.f32 %v1719, 1.0
        %v1728 = vadd.f32 %v1721, 1.0
        %v1729 = vadd.f32 %v1723, 1.0
        %v1730 = vrcp.pop %v1724
        %v1731 = vrcp.pop %v1725
        %v1732 = vrcp.pop %v1726
        %v1733 = vrcp.pop %v1727
        %v1734 = vrcp.pop %v1728
        %v1735 = vrcp.pop %v1729
        %1737 = vset.pattern.permute.xlu0 0
        %1738 = vperm.xlu0 %1737, %v1730
        %v1739 = vpop.permute.xlu0 %1738
        %1742 = vset.pattern.permute.xlu0 0
        %1743 = vperm.xlu0 %1742, %v1731
        %v1744 = vpop.permute.xlu0 %1743
        %1747 = vset.pattern.permute.xlu0 0
        %1748 = vperm.xlu0 %1747, %v1732
        %v1749 = vpop.permute.xlu0 %1748
        %1752 = vset.pattern.permute.xlu0 0
        %1753 = vperm.xlu0 %1752, %v1733
        %v1754 = vpop.permute.xlu0 %1753
        %1757 = vset.pattern.permute.xlu0 0
        %1758 = vperm.xlu0 %1757, %v1734
        %v1759 = vpop.permute.xlu0 %1758
        %1762 = vset.pattern.permute.xlu0 0
        %1763 = vperm.xlu0 %1762, %v1735
        %v1764 = vpop.permute.xlu0 %1763
        %v1766 = vmul.f32 %v1662, %v1739
        %v1767 = vmul.f32 %v1663, %v1744
        %v1768 = vmul.f32 %v1664, %v1749
        %v1769 = vmul.f32 %v1665, %v1754
        %v1770 = vmul.f32 %v1666, %v1759
        %v1771 = vmul.f32 %v1667, %v1764
        %v1772 = vlaneseq
        %v1773 = vshrl.u32 %v1772, 7
        %v1774 = vsub.s32 2, %v1773
        %v1775 = vrot.slane %v773, %v1774
        %v1777 = vsel %vm1010, %v1766, 0
        %v1780 = vsel %vm1010, %v1767, 0
        %v1783 = vsel %vm1010, %v1768, 0
        %v1786 = vsel %vm1010, %v1769, 0
        %v1789 = vsel %vm1010, %v1770, 0
        %v1792 = vsel %vm1010, %v1771, 0
        %1794 = vmatprep.subr.mxu0 0.0
        %1795 = vmatpush1.msra.mxu0 %v789
        %1796 = vmatprep.subr.mxu0 0.0
        %1797 = vmatpush1.msra.mxu0 %v790
        %1798 = vmatprep.subr.mxu0 0.0
        %1799 = vmatpush1.msra.mxu0 %v791
        %1800 = vmatprep.subr.mxu0 0.0
        %1801 = vmatpush1.msra.mxu0 %v792
        %1802 = vmatprep.subr.mxu0 0.0
        %1803 = vmatpush1.msra.mxu0 0.0
        %1804 = vmatprep.subr.mxu0 0.0
        %1805 = vmatpush1.msra.mxu0 0.0
        %1806 = vmatprep.subr.mxu0 0.0
        %1807 = vmatpush1.msra.mxu0 0.0
        %1808 = vmatprep.subr.mxu0 0.0
        %1809 = vmatpush1.msra.mxu0 0.0
        %1810 = vmatprep.subr.mxu0 0.0
        %1811 = vmatpush1.msra.mxu0 0.0
        %1812 = vmatprep.subr.mxu0 0.0
        %1813 = vmatpush1.msra.mxu0 0.0
        %1814 = vmatprep.subr.mxu0 0.0
        %1815 = vmatpush1.msra.mxu0 0.0
        %1816 = vmatprep.subr.mxu0 0.0
        %1817 = vmatpush1.msra.mxu0 0.0
        %1818 = vmatprep.subr.mxu0 0.0
        %1819 = vmatpush1.msra.mxu0 0.0
        %1820 = vmatprep.subr.mxu0 0.0
        %1821 = vmatpush1.msra.mxu0 0.0
        %1822 = vmatprep.subr.mxu0 0.0
        %1823 = vmatpush1.msra.mxu0 0.0
        %1824 = vmatprep.subr.mxu0 0.0
        %1825 = vmatpush1.msra.mxu0 0.0
        %1826 = vmatprep.subr.mxu0 0.0
        %1827 = vmatpush1.msra.mxu0 0.0
        %1828 = vmatprep.subr.mxu0 0.0
        %1829 = vmatpush1.msra.mxu0 0.0
        %1830 = vmatprep.subr.mxu0 0.0
        %1831 = vmatpush1.msra.mxu0 0.0
        %1832 = vmatprep.subr.mxu0 0.0
        %1833 = vmatpush1.msra.mxu0 0.0
        %1834 = vmatprep.subr.mxu0 0.0
        %1835 = vmatpush1.msra.mxu0 0.0
        %1836 = vmatprep.subr.mxu0 0.0
        %1837 = vmatpush1.msra.mxu0 0.0
        %1838 = vmatprep.subr.mxu0 0.0
        %1839 = vmatpush1.msra.mxu0 0.0
        %1840 = vmatprep.subr.mxu0 0.0
        %1841 = vmatpush1.msra.mxu0 0.0
        %1842 = vmatprep.subr.mxu0 0.0
        %1843 = vmatpush1.msra.mxu0 0.0
        %1844 = vmatprep.subr.mxu0 0.0
        %1845 = vmatpush1.msra.mxu0 0.0
        %1846 = vmatprep.subr.mxu0 0.0
        %1847 = vmatpush1.msra.mxu0 0.0
        %1848 = vmatprep.subr.mxu0 0.0
        %1849 = vmatpush1.msra.mxu0 0.0
        %1850 = vmatprep.subr.mxu0 0.0
        %1851 = vmatpush1.msra.mxu0 0.0
        %1852 = vmatprep.subr.mxu0 0.0
        %1853 = vmatpush1.msra.mxu0 0.0
        %1854 = vmatprep.subr.mxu0 0.0
        %1855 = vmatpush1.msra.mxu0 0.0
        %1856 = vmatprep.subr.mxu0 0.0
        %1857 = vmatpush1.msra.mxu0 0.0
        %1858 = vmatprep.mubr.f32.mxu0 0.0
        %1859 = vmatmul.mubr.f32.gmra.mrb[0].mxu0 %v1777
        %v1860 = vpop.f32.mrb[0].mxu0
        %v1861 = vadd.f32 %v1775, %v1860
        %v1862 = vpop.f32.mrb[0].mxu0
        %1863 = vmatprep.mubr.f32.mxu0 0.0
        %1864 = vmatmul.mubr.f32.gmra.mrb[0].mxu0 %v1780
        %v1865 = vpop.f32.mrb[0].mxu0
        %v1866 = vadd.f32 %v1775, %v1865
        %v1867 = vpop.f32.mrb[0].mxu0
        %1868 = vmatprep.mubr.f32.mxu0 0.0
        %1869 = vmatmul.mubr.f32.gmra.mrb[0].mxu0 %v1783
        %v1870 = vpop.f32.mrb[0].mxu0
        %v1871 = vadd.f32 %v1775, %v1870
        %v1872 = vpop.f32.mrb[0].mxu0
        %1873 = vmatprep.mubr.f32.mxu0 0.0
        %1874 = vmatmul.mubr.f32.gmra.mrb[0].mxu0 %v1786
        %v1875 = vpop.f32.mrb[0].mxu0
        %v1876 = vadd.f32 %v1775, %v1875
        %v1877 = vpop.f32.mrb[0].mxu0
        %1878 = vmatprep.mubr.f32.mxu0 0.0
        %1879 = vmatmul.mubr.f32.gmra.mrb[0].mxu0 %v1789
        %v1880 = vpop.f32.mrb[0].mxu0
        %v1881 = vadd.f32 %v1775, %v1880
        %v1882 = vpop.f32.mrb[0].mxu0
        %1883 = vmatprep.mubr.f32.mxu0 0.0
        %1884 = vmatmul.mubr.f32.gmra.mrb[0].mxu0 %v1792
        %v1885 = vpop.f32.mrb[0].mxu0
        %v1886 = vadd.f32 %v1775, %v1885
        %v1887 = vpop.f32.mrb[0].mxu0
        %1888 = vdwg.mxu0
        %v1889 = vmax.f32 %v1861, 0.0
        %v1890 = vmax.f32 %v1866, 0.0
        %v1891 = vmax.f32 %v1871, 0.0
        %v1892 = vmax.f32 %v1876, 0.0
        %v1893 = vmax.f32 %v1881, 0.0
        %v1894 = vmax.f32 %v1886, 0.0
        %v1895 = vlaneseq
        %v1896 = vshrl.u32 %v1895, 7
        %v1897 = vsub.s32 0, %v1896
        %v1898 = vrot.slane %v774, %v1897
        %v1899 = vmul.f32 %v1889, %v1898
        %v1900 = vmul.f32 %v1890, %v1898
        %v1901 = vmul.f32 %v1891, %v1898
        %v1902 = vmul.f32 %v1892, %v1898
        %v1903 = vmul.f32 %v1893, %v1898
        %v1904 = vmul.f32 %v1894, %v1898
        %v1905 = vsel %vm1010, %v1899, 0.0
        %1906 = vadd.xlane.f32.xlu0 %v1905
        %v1907 = vpop.xlane.xlu0 %1906
        %v1908 = vsel %vm1010, %v1900, 0.0
        %1909 = vadd.xlane.f32.xlu0 %v1908
        %v1910 = vpop.xlane.xlu0 %1909
        %v1911 = vsel %vm1010, %v1901, 0.0
        %1912 = vadd.xlane.f32.xlu0 %v1911
        %v1913 = vpop.xlane.xlu0 %1912
        %v1914 = vsel %vm1010, %v1902, 0.0
        %1915 = vadd.xlane.f32.xlu0 %v1914
        %v1916 = vpop.xlane.xlu0 %1915
        %v1917 = vsel %vm1010, %v1903, 0.0
        %1918 = vadd.xlane.f32.xlu0 %v1917
        %v1919 = vpop.xlane.xlu0 %1918
        %v1920 = vsel %vm1010, %v1904, 0.0
        %1921 = vadd.xlane.f32.xlu0 %v1920
        %v1922 = vpop.xlane.xlu0 %1921
        %v1923 = vmul.f32 %v999, %v1907
        %v1924 = vmul.f32 %v1001, %v1910
        %v1925 = vmul.f32 %v1003, %v1913
        %v1926 = vmul.f32 %v1005, %v1916
        %v1927 = vmul.f32 %v1007, %v1919
        %v1928 = vmul.f32 %v1009, %v1922
        %vm1929 = vcmask 392192
        %v1931 = vsel %vm1929, %v763, 0
        %v1934 = vsel %vm1929, %v764, 0
        %1936 = vmatprep.subr.mxu0 0.0
        %1937 = vmatpush1.msra.mxu0 %v1923
        %1938 = vmatprep.subr.mxu0 0.0
        %1939 = vmatpush1.msra.mxu0 %v1924
        %1940 = vmatprep.subr.mxu0 0.0
        %1941 = vmatpush1.msra.mxu0 %v1925
        %1942 = vmatprep.subr.mxu0 0.0
        %1943 = vmatpush1.msra.mxu0 %v1926
        %1944 = vmatprep.subr.mxu0 0.0
        %1945 = vmatpush1.msra.mxu0 %v1927
        %1946 = vmatprep.subr.mxu0 0.0
        %1947 = vmatpush1.msra.mxu0 %v1928
        %1948 = vmatprep.subr.mxu0 0.0
        %1949 = vmatpush1.msra.mxu0 0.0
        %1950 = vmatprep.subr.mxu0 0.0
        %1951 = vmatpush1.msra.mxu0 0.0
        %1952 = vmatprep.subr.mxu0 0.0
        %1953 = vmatpush1.msra.mxu0 0.0
        %1954 = vmatprep.subr.mxu0 0.0
        %1955 = vmatpush1.msra.mxu0 0.0
        %1956 = vmatprep.subr.mxu0 0.0
        %1957 = vmatpush1.msra.mxu0 0.0
        %1958 = vmatprep.subr.mxu0 0.0
        %1959 = vmatpush1.msra.mxu0 0.0
        %1960 = vmatprep.subr.mxu0 0.0
        %1961 = vmatpush1.msra.mxu0 0.0
        %1962 = vmatprep.subr.mxu0 0.0
        %1963 = vmatpush1.msra.mxu0 0.0
        %1964 = vmatprep.subr.mxu0 0.0
        %1965 = vmatpush1.msra.mxu0 0.0
        %1966 = vmatprep.subr.mxu0 0.0
        %1967 = vmatpush1.msra.mxu0 0.0
        %1968 = vmatprep.subr.mxu0 0.0
        %1969 = vmatpush1.msra.mxu0 0.0
        %1970 = vmatprep.subr.mxu0 0.0
        %1971 = vmatpush1.msra.mxu0 0.0
        %1972 = vmatprep.subr.mxu0 0.0
        %1973 = vmatpush1.msra.mxu0 0.0
        %1974 = vmatprep.subr.mxu0 0.0
        %1975 = vmatpush1.msra.mxu0 0.0
        %1976 = vmatprep.subr.mxu0 0.0
        %1977 = vmatpush1.msra.mxu0 0.0
        %1978 = vmatprep.subr.mxu0 0.0
        %1979 = vmatpush1.msra.mxu0 0.0
        %1980 = vmatprep.subr.mxu0 0.0
        %1981 = vmatpush1.msra.mxu0 0.0
        %1982 = vmatprep.subr.mxu0 0.0
        %1983 = vmatpush1.msra.mxu0 0.0
        %1984 = vmatprep.subr.mxu0 0.0
        %1985 = vmatpush1.msra.mxu0 0.0
        %1986 = vmatprep.subr.mxu0 0.0
        %1987 = vmatpush1.msra.mxu0 0.0
        %1988 = vmatprep.subr.mxu0 0.0
        %1989 = vmatpush1.msra.mxu0 0.0
        %1990 = vmatprep.subr.mxu0 0.0
        %1991 = vmatpush1.msra.mxu0 0.0
        %1992 = vmatprep.subr.mxu0 0.0
        %1993 = vmatpush1.msra.mxu0 0.0
        %1994 = vmatprep.subr.mxu0 0.0
        %1995 = vmatpush1.msra.mxu0 0.0
        %1996 = vmatprep.subr.mxu0 0.0
        %1997 = vmatpush1.msra.mxu0 0.0
        %1998 = vmatprep.subr.mxu0 0.0
        %1999 = vmatpush1.msra.mxu0 0.0
        %2000 = vmatprep.mubr.f32.mxu0 0.0
        %2001 = vmatmul.mubr.f32.gmra.mrb[0].mxu0 %v1931
        %v2002 = vpop.f32.mrb[0].mxu0
        %v2003 = vadd.f32 0.0, %v2002
        %v2004 = vpop.f32.mrb[0].mxu0
        %2005 = vmatprep.mubr.f32.mxu0 0.0
        %2006 = vmatmul.mubr.f32.gmra.mrb[0].mxu0 %v1934
        %v2007 = vpop.f32.mrb[0].mxu0
        %v2008 = vadd.f32 0.0, %v2007
        %v2009 = vpop.f32.mrb[0].mxu0
        %2010 = vdwg.mxu0
        %2012 = vset.pattern.permute.xlu0 0
        %2013 = vperm.xlu0 %2012, %v765
        %v2014 = vpop.permute.xlu0 %2013
        %2017 = vset.pattern.permute.xlu0 0
        %2018 = vperm.xlu0 %2017, %v766
        %v2019 = vpop.permute.xlu0 %2018
        %v2021 = vrcp.pop %v2014
        %v2022 = vmul.f32 %v2003, %v2021
        %v2023 = vrcp.pop %v2019
        %v2024 = vmul.f32 %v2008, %v2023
        %v2025 = vadd.f32 %v749, %v2022
        %v2026 = vadd.f32 %v750, %v2024
        %2027 = vmatprep.subr.mxu0 0.0
        %2028 = vmatpush1.msra.mxu0 %v1766
        %2029 = vmatprep.subr.mxu0 0.0
        %2030 = vmatpush1.msra.mxu0 %v1767
        %2031 = vmatprep.subr.mxu0 0.0
        %2032 = vmatpush1.msra.mxu0 %v1768
        %2033 = vmatprep.subr.mxu0 0.0
        %2034 = vmatpush1.msra.mxu0 %v1769
        %2035 = vmatprep.subr.mxu0 0.0
        %2036 = vmatpush1.msra.mxu0 %v1770
        %2037 = vmatprep.subr.mxu0 0.0
        %2038 = vmatpush1.msra.mxu0 %v1771
        %2039 = vmatprep.subr.mxu0 0.0
        %2040 = vmatpush1.msra.mxu0 0.0
        %2041 = vmatprep.subr.mxu0 0.0
        %2042 = vmatpush1.msra.mxu0 0.0
        %2043 = vmatprep.subr.mxu0 0.0
        %2044 = vmatpush1.msra.mxu0 0.0
        %2045 = vmatprep.subr.mxu0 0.0
        %2046 = vmatpush1.msra.mxu0 0.0
        %2047 = vmatprep.subr.mxu0 0.0
        %2048 = vmatpush1.msra.mxu0 0.0
        %2049 = vmatprep.subr.mxu0 0.0
        %2050 = vmatpush1.msra.mxu0 0.0
        %2051 = vmatprep.subr.mxu0 0.0
        %2052 = vmatpush1.msra.mxu0 0.0
        %2053 = vmatprep.subr.mxu0 0.0
        %2054 = vmatpush1.msra.mxu0 0.0
        %2055 = vmatprep.subr.mxu0 0.0
        %2056 = vmatpush1.msra.mxu0 0.0
        %2057 = vmatprep.subr.mxu0 0.0
        %2058 = vmatpush1.msra.mxu0 0.0
        %2059 = vmatprep.subr.mxu0 0.0
        %2060 = vmatpush1.msra.mxu0 0.0
        %2061 = vmatprep.subr.mxu0 0.0
        %2062 = vmatpush1.msra.mxu0 0.0
        %2063 = vmatprep.subr.mxu0 0.0
        %2064 = vmatpush1.msra.mxu0 0.0
        %2065 = vmatprep.subr.mxu0 0.0
        %2066 = vmatpush1.msra.mxu0 0.0
        %2067 = vmatprep.subr.mxu0 0.0
        %2068 = vmatpush1.msra.mxu0 0.0
        %2069 = vmatprep.subr.mxu0 0.0
        %2070 = vmatpush1.msra.mxu0 0.0
        %2071 = vmatprep.subr.mxu0 0.0
        %2072 = vmatpush1.msra.mxu0 0.0
        %2073 = vmatprep.subr.mxu0 0.0
        %2074 = vmatpush1.msra.mxu0 0.0
        %2075 = vmatprep.subr.mxu0 0.0
        %2076 = vmatpush1.msra.mxu0 0.0
        %2077 = vmatprep.subr.mxu0 0.0
        %2078 = vmatpush1.msra.mxu0 0.0
        %2079 = vmatprep.subr.mxu0 0.0
        %2080 = vmatpush1.msra.mxu0 0.0
        %2081 = vmatprep.subr.mxu0 0.0
        %2082 = vmatpush1.msra.mxu0 0.0
        %2083 = vmatprep.subr.mxu0 0.0
        %2084 = vmatpush1.msra.mxu0 0.0
        %2085 = vmatprep.subr.mxu0 0.0
        %2086 = vmatpush1.msra.mxu0 0.0
        %2087 = vmatprep.subr.mxu0 0.0
        %2088 = vmatpush1.msra.mxu0 0.0
        %2089 = vmatprep.subr.mxu0 0.0
        %2090 = vmatpush1.msra.mxu0 0.0
        %2091 = vmatprep.mubr.f32.mxu0 0.0
        %2092 = vmatmul.mubr.f32.gmra.mrb[0].mxu0 %v1931
        %v2093 = vpop.f32.mrb[0].mxu0
        %v2094 = vadd.f32 0.0, %v2093
        %v2095 = vpop.f32.mrb[0].mxu0
        %2096 = vmatprep.mubr.f32.mxu0 0.0
        %2097 = vmatmul.mubr.f32.gmra.mrb[0].mxu0 %v1934
        %v2098 = vpop.f32.mrb[0].mxu0
        %v2099 = vadd.f32 0.0, %v2098
        %v2100 = vpop.f32.mrb[0].mxu0
        %2101 = vdwg.mxu0
        %v2103 = vsel %vm1010, %v2094, 0
        %v2106 = vsel %vm1010, %v2099, 0
        %2108 = vmatprep.subr.mxu0 0.0
        %2109 = vmatpush1.msra.mxu0 %v797
        %2110 = vmatprep.subr.mxu0 0.0
        %2111 = vmatpush1.msra.mxu0 %v798
        %2112 = vmatprep.subr.mxu0 0.0
        %2113 = vmatpush1.msra.mxu0 %v799
        %2114 = vmatprep.subr.mxu0 0.0
        %2115 = vmatpush1.msra.mxu0 %v800
        %2116 = vmatprep.subr.mxu0 0.0
        %2117 = vmatpush1.msra.mxu0 0.0
        %2118 = vmatprep.subr.mxu0 0.0
        %2119 = vmatpush1.msra.mxu0 0.0
        %2120 = vmatprep.subr.mxu0 0.0
        %2121 = vmatpush1.msra.mxu0 0.0
        %2122 = vmatprep.subr.mxu0 0.0
        %2123 = vmatpush1.msra.mxu0 0.0
        %2124 = vmatprep.subr.mxu0 0.0
        %2125 = vmatpush1.msra.mxu0 0.0
        %2126 = vmatprep.subr.mxu0 0.0
        %2127 = vmatpush1.msra.mxu0 0.0
        %2128 = vmatprep.subr.mxu0 0.0
        %2129 = vmatpush1.msra.mxu0 0.0
        %2130 = vmatprep.subr.mxu0 0.0
        %2131 = vmatpush1.msra.mxu0 0.0
        %2132 = vmatprep.subr.mxu0 0.0
        %2133 = vmatpush1.msra.mxu0 0.0
        %2134 = vmatprep.subr.mxu0 0.0
        %2135 = vmatpush1.msra.mxu0 0.0
        %2136 = vmatprep.subr.mxu0 0.0
        %2137 = vmatpush1.msra.mxu0 0.0
        %2138 = vmatprep.subr.mxu0 0.0
        %2139 = vmatpush1.msra.mxu0 0.0
        %2140 = vmatprep.subr.mxu0 0.0
        %2141 = vmatpush1.msra.mxu0 0.0
        %2142 = vmatprep.subr.mxu0 0.0
        %2143 = vmatpush1.msra.mxu0 0.0
        %2144 = vmatprep.subr.mxu0 0.0
        %2145 = vmatpush1.msra.mxu0 0.0
        %2146 = vmatprep.subr.mxu0 0.0
        %2147 = vmatpush1.msra.mxu0 0.0
        %2148 = vmatprep.subr.mxu0 0.0
        %2149 = vmatpush1.msra.mxu0 0.0
        %2150 = vmatprep.subr.mxu0 0.0
        %2151 = vmatpush1.msra.mxu0 0.0
        %2152 = vmatprep.subr.mxu0 0.0
        %2153 = vmatpush1.msra.mxu0 0.0
        %2154 = vmatprep.subr.mxu0 0.0
        %2155 = vmatpush1.msra.mxu0 0.0
        %2156 = vmatprep.subr.mxu0 0.0
        %2157 = vmatpush1.msra.mxu0 0.0
        %2158 = vmatprep.subr.mxu0 0.0
        %2159 = vmatpush1.msra.mxu0 0.0
        %2160 = vmatprep.subr.mxu0 0.0
        %2161 = vmatpush1.msra.mxu0 0.0
        %2162 = vmatprep.subr.mxu0 0.0
        %2163 = vmatpush1.msra.mxu0 0.0
        %2164 = vmatprep.subr.mxu0 0.0
        %2165 = vmatpush1.msra.mxu0 0.0
        %2166 = vmatprep.subr.mxu0 0.0
        %2167 = vmatpush1.msra.mxu0 0.0
        %2168 = vmatprep.subr.mxu0 0.0
        %2169 = vmatpush1.msra.mxu0 0.0
        %2170 = vmatprep.subr.mxu0 0.0
        %2171 = vmatpush1.msra.mxu0 0.0
        %2172 = vmatprep.mubr.f32.mxu0 0.0
        %2173 = vmatmul.mubr.f32.gmra.mrb[0].mxu0 %v2103
        %v2174 = vpop.f32.mrb[0].mxu0
        %v2175 = vadd.f32 0.0, %v2174
        %v2176 = vpop.f32.mrb[0].mxu0
        %2177 = vmatprep.mubr.f32.mxu0 0.0
        %2178 = vmatmul.mubr.f32.gmra.mrb[0].mxu0 %v2106
        %v2179 = vpop.f32.mrb[0].mxu0
        %v2180 = vadd.f32 0.0, %v2179
        %v2181 = vpop.f32.mrb[0].mxu0
        %2182 = vdwg.mxu0
        %2183 = vmatprep.subr.mxu0 0.0
        %2184 = vmatpush1.msra.mxu0 %v793
        %2185 = vmatprep.subr.mxu0 0.0
        %2186 = vmatpush1.msra.mxu0 %v794
        %2187 = vmatprep.subr.mxu0 0.0
        %2188 = vmatpush1.msra.mxu0 %v795
        %2189 = vmatprep.subr.mxu0 0.0
        %2190 = vmatpush1.msra.mxu0 %v796
        %2191 = vmatprep.subr.mxu0 0.0
        %2192 = vmatpush1.msra.mxu0 0.0
        %2193 = vmatprep.subr.mxu0 0.0
        %2194 = vmatpush1.msra.mxu0 0.0
        %2195 = vmatprep.subr.mxu0 0.0
        %2196 = vmatpush1.msra.mxu0 0.0
        %2197 = vmatprep.subr.mxu0 0.0
        %2198 = vmatpush1.msra.mxu0 0.0
        %2199 = vmatprep.subr.mxu0 0.0
        %2200 = vmatpush1.msra.mxu0 0.0
        %2201 = vmatprep.subr.mxu0 0.0
        %2202 = vmatpush1.msra.mxu0 0.0
        %2203 = vmatprep.subr.mxu0 0.0
        %2204 = vmatpush1.msra.mxu0 0.0
        %2205 = vmatprep.subr.mxu0 0.0
        %2206 = vmatpush1.msra.mxu0 0.0
        %2207 = vmatprep.subr.mxu0 0.0
        %2208 = vmatpush1.msra.mxu0 0.0
        %2209 = vmatprep.subr.mxu0 0.0
        %2210 = vmatpush1.msra.mxu0 0.0
        %2211 = vmatprep.subr.mxu0 0.0
        %2212 = vmatpush1.msra.mxu0 0.0
        %2213 = vmatprep.subr.mxu0 0.0
        %2214 = vmatpush1.msra.mxu0 0.0
        %2215 = vmatprep.subr.mxu0 0.0
        %2216 = vmatpush1.msra.mxu0 0.0
        %2217 = vmatprep.subr.mxu0 0.0
        %2218 = vmatpush1.msra.mxu0 0.0
        %2219 = vmatprep.subr.mxu0 0.0
        %2220 = vmatpush1.msra.mxu0 0.0
        %2221 = vmatprep.subr.mxu0 0.0
        %2222 = vmatpush1.msra.mxu0 0.0
        %2223 = vmatprep.subr.mxu0 0.0
        %2224 = vmatpush1.msra.mxu0 0.0
        %2225 = vmatprep.subr.mxu0 0.0
        %2226 = vmatpush1.msra.mxu0 0.0
        %2227 = vmatprep.subr.mxu0 0.0
        %2228 = vmatpush1.msra.mxu0 0.0
        %2229 = vmatprep.subr.mxu0 0.0
        %2230 = vmatpush1.msra.mxu0 0.0
        %2231 = vmatprep.subr.mxu0 0.0
        %2232 = vmatpush1.msra.mxu0 0.0
        %2233 = vmatprep.subr.mxu0 0.0
        %2234 = vmatpush1.msra.mxu0 0.0
        %2235 = vmatprep.subr.mxu0 0.0
        %2236 = vmatpush1.msra.mxu0 0.0
        %2237 = vmatprep.subr.mxu0 0.0
        %2238 = vmatpush1.msra.mxu0 0.0
        %2239 = vmatprep.subr.mxu0 0.0
        %2240 = vmatpush1.msra.mxu0 0.0
        %2241 = vmatprep.subr.mxu0 0.0
        %2242 = vmatpush1.msra.mxu0 0.0
        %2243 = vmatprep.subr.mxu0 0.0
        %2244 = vmatpush1.msra.mxu0 0.0
        %2245 = vmatprep.subr.mxu0 0.0
        %2246 = vmatpush1.msra.mxu0 0.0
        %2247 = vmatprep.mubr.f32.mxu0 0.0
        %2248 = vmatmul.mubr.f32.gmra.mrb[0].mxu0 %v1012
        %v2249 = vpop.f32.mrb[0].mxu0
        %v2250 = vadd.f32 %v2175, %v2249
        %v2251 = vpop.f32.mrb[0].mxu0
        %2252 = vmatprep.mubr.f32.mxu0 0.0
        %2253 = vmatmul.mubr.f32.gmra.mrb[0].mxu0 %v1015
        %v2254 = vpop.f32.mrb[0].mxu0
        %v2255 = vadd.f32 %v2180, %v2254
        %v2256 = vpop.f32.mrb[0].mxu0
        %2257 = vdwg.mxu0
        %v2258 = vlaneseq
        %v2259 = vshrl.u32 %v2258, 7
        %v2260 = vsub.s32 3, %v2259
        %v2261 = vrot.slane %v773, %v2260
        %v2262 = vadd.f32 %v2250, %v2261
        %v2263 = vadd.f32 %v2255, %v2261
        %v2264 = vmax.f32 %v2262, 0.0
        %v2265 = vmax.f32 %v2263, 0.0
        %v2266 = vlaneseq
        %v2267 = vshrl.u32 %v2266, 7
        %v2268 = vsub.s32 4, %v2267
        %v2269 = vrot.slane %v773, %v2268
        %v2271 = vsel %vm1010, %v2264, 0
        %v2274 = vsel %vm1010, %v2265, 0
        %2276 = vmatprep.subr.mxu0 0.0
        %2277 = vmatpush1.msra.mxu0 %v801
        %2278 = vmatprep.subr.mxu0 0.0
        %2279 = vmatpush1.msra.mxu0 %v802
        %2280 = vmatprep.subr.mxu0 0.0
        %2281 = vmatpush1.msra.mxu0 %v803
        %2282 = vmatprep.subr.mxu0 0.0
        %2283 = vmatpush1.msra.mxu0 %v804
        %2284 = vmatprep.subr.mxu0 0.0
        %2285 = vmatpush1.msra.mxu0 0.0
        %2286 = vmatprep.subr.mxu0 0.0
        %2287 = vmatpush1.msra.mxu0 0.0
        %2288 = vmatprep.subr.mxu0 0.0
        %2289 = vmatpush1.msra.mxu0 0.0
        %2290 = vmatprep.subr.mxu0 0.0
        %2291 = vmatpush1.msra.mxu0 0.0
        %2292 = vmatprep.subr.mxu0 0.0
        %2293 = vmatpush1.msra.mxu0 0.0
        %2294 = vmatprep.subr.mxu0 0.0
        %2295 = vmatpush1.msra.mxu0 0.0
        %2296 = vmatprep.subr.mxu0 0.0
        %2297 = vmatpush1.msra.mxu0 0.0
        %2298 = vmatprep.subr.mxu0 0.0
        %2299 = vmatpush1.msra.mxu0 0.0
        %2300 = vmatprep.subr.mxu0 0.0
        %2301 = vmatpush1.msra.mxu0 0.0
        %2302 = vmatprep.subr.mxu0 0.0
        %2303 = vmatpush1.msra.mxu0 0.0
        %2304 = vmatprep.subr.mxu0 0.0
        %2305 = vmatpush1.msra.mxu0 0.0
        %2306 = vmatprep.subr.mxu0 0.0
        %2307 = vmatpush1.msra.mxu0 0.0
        %2308 = vmatprep.subr.mxu0 0.0
        %2309 = vmatpush1.msra.mxu0 0.0
        %2310 = vmatprep.subr.mxu0 0.0
        %2311 = vmatpush1.msra.mxu0 0.0
        %2312 = vmatprep.subr.mxu0 0.0
        %2313 = vmatpush1.msra.mxu0 0.0
        %2314 = vmatprep.subr.mxu0 0.0
        %2315 = vmatpush1.msra.mxu0 0.0
        %2316 = vmatprep.subr.mxu0 0.0
        %2317 = vmatpush1.msra.mxu0 0.0
        %2318 = vmatprep.subr.mxu0 0.0
        %2319 = vmatpush1.msra.mxu0 0.0
        %2320 = vmatprep.subr.mxu0 0.0
        %2321 = vmatpush1.msra.mxu0 0.0
        %2322 = vmatprep.subr.mxu0 0.0
        %2323 = vmatpush1.msra.mxu0 0.0
        %2324 = vmatprep.subr.mxu0 0.0
        %2325 = vmatpush1.msra.mxu0 0.0
        %2326 = vmatprep.subr.mxu0 0.0
        %2327 = vmatpush1.msra.mxu0 0.0
        %2328 = vmatprep.subr.mxu0 0.0
        %2329 = vmatpush1.msra.mxu0 0.0
        %2330 = vmatprep.subr.mxu0 0.0
        %2331 = vmatpush1.msra.mxu0 0.0
        %2332 = vmatprep.subr.mxu0 0.0
        %2333 = vmatpush1.msra.mxu0 0.0
        %2334 = vmatprep.subr.mxu0 0.0
        %2335 = vmatpush1.msra.mxu0 0.0
        %2336 = vmatprep.subr.mxu0 0.0
        %2337 = vmatpush1.msra.mxu0 0.0
        %2338 = vmatprep.subr.mxu0 0.0
        %2339 = vmatpush1.msra.mxu0 0.0
        %2340 = vmatprep.mubr.f32.mxu0 0.0
        %2341 = vmatmul.mubr.f32.gmra.mrb[0].mxu0 %v2271
        %v2342 = vpop.f32.mrb[0].mxu0
        %v2343 = vadd.f32 %v2269, %v2342
        %v2344 = vpop.f32.mrb[0].mxu0
        %2345 = vmatprep.mubr.f32.mxu0 0.0
        %2346 = vmatmul.mubr.f32.gmra.mrb[0].mxu0 %v2274
        %v2347 = vpop.f32.mrb[0].mxu0
        %v2348 = vadd.f32 %v2269, %v2347
        %v2349 = vpop.f32.mrb[0].mxu0
        %2350 = vdwg.mxu0
        %v2351 = vadd.f32 %v747, %v2343
        %v2352 = vadd.f32 %v748, %v2348
        %v2353 = vsel %vm1010, %v2351, 0.0
        %2354 = vadd.xlane.f32.xlu0 %v2353
        %v2355 = vpop.xlane.xlu0 %2354
        %v2356 = vsel %vm1010, %v2352, 0.0
        %2357 = vadd.xlane.f32.xlu0 %v2356
        %v2358 = vpop.xlane.xlu0 %2357
        %v2359 = vrcp.pop 32.0
        %v2360 = vmul.f32 %v2355, %v2359
        %v2361 = vmul.f32 %v2358, %v2359
        %v2362 = vsub.f32 %v2351, %v2360
        %v2363 = vsub.f32 %v2352, %v2361
        %v2364 = vmul.f32 %v2362, %v2362
        %v2365 = vmul.f32 %v2363, %v2363
        %v2366 = vsel %vm1010, %v2364, 0.0
        %2367 = vadd.xlane.f32.xlu0 %v2366
        %v2368 = vpop.xlane.xlu0 %2367
        %v2369 = vsel %vm1010, %v2365, 0.0
        %2370 = vadd.xlane.f32.xlu0 %v2369
        %v2371 = vpop.xlane.xlu0 %2370
        %v2372 = vmul.f32 %v2368, %v2359
        %v2373 = vmul.f32 %v2371, %v2359
        %v2374 = vadd.f32 %v2372, 1e-05
        %v2375 = vadd.f32 %v2373, 1e-05
        %v2376 = vrsqrt.pop %v2374
        %v2377 = vrsqrt.pop %v2375
        %v2378 = vmul.f32 %v2362, %v2376
        %v2379 = vmul.f32 %v2363, %v2377
        %v2380 = vlaneseq
        %v2381 = vshrl.u32 %v2380, 7
        %v2382 = vsub.s32 5, %v2381
        %v2383 = vrot.slane %v773, %v2382
        %v2384 = vmul.f32 %v2378, %v2383
        %v2385 = vmul.f32 %v2379, %v2383
        %v2386 = vlaneseq
        %v2387 = vshrl.u32 %v2386, 7
        %v2388 = vsub.s32 6, %v2387
        %v2389 = vrot.slane %v773, %v2388
        %v2390 = vadd.f32 %v2384, %v2389
        %v2391 = vadd.f32 %v2385, %v2389
        %vm2392 = vcmp.ne.f32.partialorder %v2390, %v2390
        %vm2393 = vcmp.ne.f32.partialorder %v2391, %v2391
        %v2394 = vsel %vm2392, 0.0, %v2390
        %v2395 = vsel %vm2393, 0.0, %v2391
        %vm2396 = vcmp.eq.f32.partialorder %v2394, inf
        %vm2397 = vcmp.eq.f32.partialorder %v2395, inf
        %v2398 = vsel %vm2396, 3.4028235e+38, %v2394
        %v2399 = vsel %vm2397, 3.4028235e+38, %v2395
        %vm2400 = vcmp.eq.f32.partialorder %v2398, -inf
        %vm2401 = vcmp.eq.f32.partialorder %v2399, -inf
        %v2402 = vsel %vm2400, -3.4028235e+38, %v2398
        %v2403 = vsel %vm2401, -3.4028235e+38, %v2399
        %2404 = vst.msk [vmem:[#allocation2] sm:$0xff] %vm1010, %v2402
        %2405 = vst.msk [vmem:[#allocation2 + $0x8] sm:$0xff] %vm1010, %v2403
        %2406 = vst.msk [vmem:[#allocation4] sm:$0xff] %vm931, %v2025
        %2407 = vst.msk [vmem:[#allocation4 + $0x8] sm:$0xff] %vm931, %v2026
        %p2408 = scmp.eq.s32.totalorder %s32, 1
        // Predicated region
        $region77: #{tpu_custom_call.1} parent=71 // pred_check
          %p2409 = pneg %p2408
        $region78: #{tpu_custom_call.1} parent=71 // pred_check_branch
          %2411 = sbr.rel (%p2409) target = $region80
        $region79: #{tpu_custom_call.1} parent=71 // pred_region
          %v2412 = vld [vmem:[#allocation3] sm:$0xff]
          %v2413 = vld [vmem:[#allocation3 + $0x8] sm:$0xff]
          %v2414 = vadd.f32 %v2412, %v2402
          %v2415 = vadd.f32 %v2413, %v2403
          %2416 = vst.msk [vmem:[#allocation7] sm:$0xff] %vm1010, %v2414
          %2417 = vst.msk [vmem:[#allocation7 + $0x8] sm:$0xff] %vm1010, %v2415
        $region80: #{tpu_custom_call.1} parent=71 // pred_fallthru
          _
        // Predicated region
        $region81: #{tpu_custom_call.1} parent=71 // pred_check
          %p2418 = pneg %p363
        $region82: #{tpu_custom_call.1} parent=71 // pred_check_branch
          %2420 = sbr.rel (%p2418) target = $region84
        $region83: #{tpu_custom_call.1} parent=71 // pred_region
          %s2422 = ssub.s32 256, 256
          %2423 = vsyncadd [#allocation8], %s2422
          %s2424 = sshll.u32 [#allocation7], 4
          %s2425 = int_to_ptr.vmem [resolvable:$true] %s2424
          %2430 = dma.vmem_to_hbm [thread:$0]  %s2425, 256, %s14, [#allocation8], 128, 128, 8
        $region84: #{tpu_custom_call.1} parent=71 // pred_fallthru
          _
        // Predicated region
        $region85: #{tpu_custom_call.1} parent=71 // pred_check
          %p2431 = pneg %p363
        $region86: #{tpu_custom_call.1} parent=71 // pred_check_branch
          %2433 = sbr.rel (%p2431) target = $region88
        $region87: #{tpu_custom_call.1} parent=71 // pred_region
          %2434 = dma.done [#allocation8], 256
        $region88: #{tpu_custom_call.1} parent=71 // pred_fallthru
          _
      $region72: #{tpu_custom_call.1} parent=5 // pred_fallthru
        _
      %p2435 = scmp.le.s32.totalorder 2, %s27
      // Predicated region
      $region89: #{tpu_custom_call.1} parent=5 // pred_check
        %p2436 = pneg %p2435
      $region90: #{tpu_custom_call.1} parent=5 // pred_check_branch
        %2438 = sbr.rel (%p2436) target = $region92
      $region91: #{tpu_custom_call.1} parent=5 // pred_region
        %s2439 = ssub.s32 %s27, 2
      $region92: #{tpu_custom_call.1} parent=5 // pred_fallthru
        _
    $region6: #{tpu_custom_call.1} parent=1 // loop_footer
      %s31 = sadd.s32 1, %s27
    $region7: #{tpu_custom_call.1} parent=1 // loop_footer_branch
      %26 = sbr.rel target = $region3
    $region8: #{tpu_custom_call.1} parent=1 // loop_exit
      _
    %2440 = vsyncpa [#allocation8], 1
    %s2441 = scalar_lea.sflag [#allocation8], 1
    %2442 = vsyncpa %s2441, 1

</llo_original>
